<compile_context>
chip_gen: v7x
topology: tpu7x:2x2x1
jax: 0.10.0
libtpu: 0.0.40
codegen_flags: <defaults>
</compile_context>

<pallas_src>
import functools

import jax
import jax.numpy as jnp
from jax.experimental import pallas as pl
from jax.experimental.pallas import tpu as pltpu


def _round_up(n, m):
    return ((n + m - 1) // m) * m


def _pad_gate_cols(w, h, hp):
    """w has 4 gate chunks of size h along the last axis; pad each chunk to hp."""
    if h == hp:
        return w
    chunks = jnp.split(w, 4, axis=-1)
    pad = [(0, 0)] * (w.ndim - 1) + [(0, hp - h)]
    return jnp.concatenate([jnp.pad(c, pad) for c in chunks], axis=-1)


def _mlstm_block_kernel(
    x_ref,      # (Bt, Tt, Dp)   input block (last real column is the ones-column)
    mask_ref,   # (Bt, Tt, 1)    sequence mask
    h0_ref,     # (Bt, Hp)       initial hidden state
    c0_ref,     # (Bt, Hp)       initial cell state
    w5_ref,     # (Dp, 5*Hp)     fused [Wmx | Wx ; 0 | b] input projection
    wmh_hbm,    # (Hp, Hp)       recurrent weight, left in HBM (pl.ANY)
    wh_hbm,     # (Hp, 4*Hp)     recurrent weight, left in HBM (pl.ANY)
    y_ref,      # (Bt, Tt, Hp)   per-step hidden outputs
    hN_ref,     # (Bt, Hp)       final hidden state
    cN_ref,     # (Bt, Hp)       final cell state
    wmh_scr,    # VMEM (Hp, Hp)      single resident copy of Wmh
    wh_scr,     # VMEM (Hp, 4*Hp)    single resident copy of Wh
    dma_sem,    # DMA semaphores (2,)
    h_scr,      # VMEM (Bt, Hp) f32  persistent hidden state across time blocks
    c_scr,      # VMEM (Bt, Hp) f32  persistent cell state across time blocks
    *,
    hp,
    tt,
    act_dtype,
):
    f32 = jnp.float32
    ti = pl.program_id(1)

    # First time block of each batch block: copy the large recurrent weights
    # from HBM into a SINGLE VMEM copy (no double-buffering waste) and seed the
    # recurrent state scratch.
    @pl.when(ti == 0)
    def _():
        cp_mh = pltpu.make_async_copy(wmh_hbm, wmh_scr, dma_sem.at[0])
        cp_h = pltpu.make_async_copy(wh_hbm, wh_scr, dma_sem.at[1])
        cp_mh.start()
        cp_h.start()
        cp_mh.wait()
        cp_h.wait()
        h_scr[...] = h0_ref[...]
        c_scr[...] = c0_ref[...]

    # Load state once per time block; carry in registers inside the block.
    h = h_scr[...]
    c = c_scr[...]
    w_dtype = wmh_scr.dtype
    wmh = wmh_scr[...]
    wh = wh_scr[...]
    w5 = w5_ref[...]

    for i in range(tt):                     # statically unrolled recurrence
        # Fused input projection: [x@Wmx | x@Wx + b] (bias via the ones-column).
        xw = jnp.dot(x_ref[:, i, :], w5, preferred_element_type=f32)
        xm = xw[:, :hp]
        xg = xw[:, hp:]

        # multiplicative path: m = (x @ Wmx) * (h @ Wmh)
        m = xm * jnp.dot(h.astype(w_dtype), wmh, preferred_element_type=f32)
        # gates = (x @ Wx + b) + m @ Wh
        gates = xg + jnp.dot(m.astype(w_dtype), wh, preferred_element_type=f32)

        # transcendentals in act_dtype (bf16 on v6e/v7x ~doubles EUP throughput);
        # state math stays f32.
        g = gates.astype(act_dtype)
        ingate = jax.nn.sigmoid(g[:, 0 * hp:1 * hp]).astype(f32)
        forgetgate = jax.nn.sigmoid(g[:, 1 * hp:2 * hp]).astype(f32)
        outgate = jax.nn.sigmoid(g[:, 2 * hp:3 * hp]).astype(f32)
        cellgate = jnp.tanh(g[:, 3 * hp:4 * hp]).astype(f32)

        cy = forgetgate * c + ingate * cellgate
        hy = outgate * jnp.tanh(cy.astype(act_dtype)).astype(f32)

        # sequence mask: keep previous state where mask == 0
        sm = mask_ref[:, i]                 # (Bt, 1)
        h = h + sm * (hy - h)
        c = c + sm * (cy - c)

        y_ref[:, i, :] = h.astype(y_ref.dtype)

    # Write the carried state back to VMEM scratch once per block.
    h_scr[...] = h
    c_scr[...] = c

    # Final-state accumulator pattern: the hN/cN out index_map is constant over
    # ti, so the output block stays resident across the time sweep and only the
    # last time block stores it.  (Do not change the grid order or the hN/cN
    # index_map over ti without revisiting this.)
    @pl.when(ti == pl.num_programs(1) - 1)
    def _():
        hN_ref[...] = h.astype(hN_ref.dtype)
        cN_ref[...] = c.astype(cN_ref.dtype)


def mlstm_layer_pallas(x, params, state=None, mask=None, *,
                       compute_dtype=jnp.float32, act_dtype=jnp.float32,
                       time_block=16, batch_block=None,
                       vmem_limit_bytes=None):
    """x: (B, T, D).  Returns (outputs (B, T, H) f32, (h_N, c_N) f32)."""
    B, T, D = x.shape
    wmx, wmh, wx, wh, b = params
    H = wmx.shape[1]
    f32 = jnp.float32

    if mask is None:
        mask = jnp.ones((B, T, 1), f32)
    elif mask.ndim == 2:
        mask = mask[:, :, None]
    if state is None:
        state = (jnp.zeros((B, H), f32), jnp.zeros((B, H), f32))
    h0, c0 = state

    # ---- TPU-friendly padded sizes -----------------------------------------
    Hp = _round_up(H, 128)                  # lane-dense hidden size
    Dp = _round_up(D + 1, 8)                # input + ones-column (bias)

    Tt = max(1, min(time_block, T))
    if Tt < T:                              # block 2nd-to-last dims must be 8-aligned
        Tt = max(8, (Tt // 8) * 8)
    Tp = _round_up(T, Tt)
    nt = Tp // Tt

    Bp8 = _round_up(B, 8)
    if batch_block is None:
        if Bp8 >= 128:
            # Big MXU fill (up to 256 LHS rows), but keep >= 2 batch blocks so
            # the "parallel" batch axis can shard across TensorCores on v7x.
            nbt = max(2, pl.cdiv(Bp8, 256))
            Bt = _round_up(pl.cdiv(Bp8, nbt), 8)
        else:
            Bt = Bp8                        # tiny batch: one block, all rows
    else:
        Bt = _round_up(min(batch_block, Bp8), 8)
    Bp = _round_up(Bp8, Bt)
    nb = Bp // Bt

    # ---- padded inputs (padded batch rows / time steps carry mask == 0) -----
    x_p = jnp.zeros((Bp, Tp, Dp), f32)
    x_p = x_p.at[:, :, D].set(1.0)                         # ones-column -> bias
    x_p = x_p.at[:B, :T, :D].set(x.astype(f32))
    x_p = x_p.astype(compute_dtype)

    mask_p = jnp.zeros((Bp, Tp, 1), f32).at[:B, :T].set(mask.astype(f32))
    h0_p = jnp.zeros((Bp, Hp), f32).at[:B, :H].set(h0.astype(f32))
    c0_p = jnp.zeros((Bp, Hp), f32).at[:B, :H].set(c0.astype(f32))

    # ---- padded / fused weights ---------------------------------------------
    wmx_p = jnp.zeros((D, Hp), f32).at[:, :H].set(wmx.astype(f32))
    wx_p = _pad_gate_cols(wx.astype(f32), H, Hp)                   # (D, 4Hp)
    b_p = _pad_gate_cols(b.astype(f32).reshape(1, 4 * H), H, Hp)   # (1, 4Hp)
    # Fused input projection [Wmx | Wx] with the bias folded in as the row that
    # x's ones-column multiplies.
    w5 = jnp.zeros((Dp, 5 * Hp), f32)
    w5 = w5.at[:D, :Hp].set(wmx_p)
    w5 = w5.at[:D, Hp:].set(wx_p)
    w5 = w5.at[D, Hp:].set(b_p[0])
    w5_c = w5.astype(compute_dtype)

    wmh_c = (jnp.zeros((Hp, Hp), f32).at[:H, :H]
             .set(wmh.astype(f32)).astype(compute_dtype))
    wh_c = _pad_gate_cols(jnp.pad(wh.astype(f32), ((0, Hp - H), (0, 0))),
                          H, Hp).astype(compute_dtype)             # (Hp, 4Hp)

    # ---- explicit VMEM budget (scoped defaults are only 16/32 MiB) ----------
    cb = jnp.dtype(compute_dtype).itemsize
    need = 0
    need += 2 * Bt * Tt * Dp * cb            # x blocks (double-buffered)
    need += 2 * Bt * Tt * 1 * 4              # mask blocks
    need += 2 * 2 * Bt * Hp * 4              # h0 / c0 blocks
    need += 2 * Dp * 5 * Hp * cb             # fused input-projection blocks
    need += 2 * Bt * Tt * Hp * 4             # y blocks
    need += 2 * 2 * Bt * Hp * 4              # hN / cN blocks
    need += Hp * Hp * cb + Hp * 4 * Hp * cb  # resident recurrent weights (1 copy)
    need += 2 * Bt * Hp * 4                  # state scratch
    if vmem_limit_bytes is None:
        vmem_limit_bytes = max(32 << 20, min(int(need * 1.3) + (2 << 20), 128 << 20))

    kernel = functools.partial(_mlstm_block_kernel, hp=Hp, tt=Tt,
                               act_dtype=act_dtype)

    y, hN, cN = pl.pallas_call(
        kernel,
        out_shape=(
            jax.ShapeDtypeStruct((Bp, Tp, Hp), f32),
            jax.ShapeDtypeStruct((Bp, Hp), f32),
            jax.ShapeDtypeStruct((Bp, Hp), f32),
        ),
        grid_spec=pltpu.PrefetchScalarGridSpec(
            num_scalar_prefetch=0,
            grid=(nb, nt),
            in_specs=[
                pl.BlockSpec((Bt, Tt, Dp), lambda bi, ti: (bi, ti, 0)),   # x
                pl.BlockSpec((Bt, Tt, 1), lambda bi, ti: (bi, ti, 0)),    # mask
                pl.BlockSpec((Bt, Hp), lambda bi, ti: (bi, 0)),           # h0
                pl.BlockSpec((Bt, Hp), lambda bi, ti: (bi, 0)),           # c0
                pl.BlockSpec((Dp, 5 * Hp), lambda bi, ti: (0, 0)),        # w5 (fused)
                pl.BlockSpec(memory_space=pl.ANY),                        # wmh (HBM)
                pl.BlockSpec(memory_space=pl.ANY),                        # wh  (HBM)
            ],
            out_specs=[
                pl.BlockSpec((Bt, Tt, Hp), lambda bi, ti: (bi, ti, 0)),   # y
                pl.BlockSpec((Bt, Hp), lambda bi, ti: (bi, 0)),           # h_N
                pl.BlockSpec((Bt, Hp), lambda bi, ti: (bi, 0)),           # c_N
            ],
            scratch_shapes=[
                pltpu.VMEM((Hp, Hp), compute_dtype),       # resident Wmh
                pltpu.VMEM((Hp, 4 * Hp), compute_dtype),   # resident Wh
                pltpu.SemaphoreType.DMA((2,)),
                pltpu.VMEM((Bt, Hp), f32),                 # recurrent hidden state
                pltpu.VMEM((Bt, Hp), f32),                 # recurrent cell state
            ],
        ),
        compiler_params=pltpu.CompilerParams(
            # batch blocks are independent recurrences -> megacore parallel;
            # the time axis is the sequential recurrence.
            dimension_semantics=("parallel", "arbitrary"),
            vmem_limit_bytes=vmem_limit_bytes,
        ),
    )(x_p, mask_p, h0_p, c0_p, w5_c, wmh_c, wh_c)

    return y[:B, :T, :H], (hN[:B, :H], cN[:B, :H])


def mlstm_layer_ref(x, params, state=None, mask=None):
    """Pure-JAX reference matching the PyTorch forward semantics."""
    B, T, D = x.shape
    wmx, wmh, wx, wh, b = params
    H = wmx.shape[1]
    if mask is None:
        mask = jnp.ones((B, T, 1), jnp.float32)
    if state is None:
        state = (jnp.zeros((B, H), jnp.float32), jnp.zeros((B, H), jnp.float32))

    def step(carry, inp):
        h, c = carry
        x_t, m_t = inp
        m = (x_t @ wmx) * (h @ wmh)
        gates = x_t @ wx + m @ wh + b
        i, f, o, g = jnp.split(gates, 4, axis=1)
        cy = jax.nn.sigmoid(f) * c + jax.nn.sigmoid(i) * jnp.tanh(g)
        hy = jax.nn.sigmoid(o) * jnp.tanh(cy)
        hy = m_t * hy + (1.0 - m_t) * h
        cy = m_t * cy + (1.0 - m_t) * c
        return (hy, cy), hy

    xs = (jnp.transpose(x, (1, 0, 2)), jnp.transpose(mask, (1, 0, 2)))
    (hN, cN), ys = jax.lax.scan(step, state, xs)
    return jnp.transpose(ys, (1, 0, 2)), (hN, cN)


def init_params(key, input_size, hidden_size):
    """Deterministic init; weights pre-transposed to (in, out) vs torch's (out, in)."""
    kmx, kmh, kx, kh, kb = jax.random.split(key, 5)
    scale = 0.1
    wmx = scale * jax.random.normal(kmx, (input_size, hidden_size), jnp.float32)
    wmh = scale * jax.random.normal(kmh, (hidden_size, hidden_size), jnp.float32)
    wx = scale * jax.random.normal(kx, (input_size, 4 * hidden_size), jnp.float32)
    wh = scale * jax.random.normal(kh, (hidden_size, 4 * hidden_size), jnp.float32)
    b = scale * jax.random.normal(kb, (4 * hidden_size,), jnp.float32)
    return (wmx, wmh, wx, wh, b)


if __name__ == "__main__":
    root = jax.random.PRNGKey(0)

    def check(idx, B, T, D, H, *, time_block=16, batch_block=None,
              compute_dtype=jnp.float32, act_dtype=jnp.float32, tol=1e-4):
        kx, kp, km, kh, kc = jax.random.split(jax.random.fold_in(root, idx), 5)
        x = jax.random.normal(kx, (B, T, D), jnp.float32)
        params = init_params(kp, D, H)
        mask = (jax.random.uniform(km, (B, T)) > 0.25).astype(jnp.float32)[:, :, None]
        state = (0.1 * jax.random.normal(kh, (B, H), jnp.float32),
                 0.1 * jax.random.normal(kc, (B, H), jnp.float32))

        out_r, (hN_r, cN_r) = mlstm_layer_ref(x, params, state=state, mask=mask)
        out, (hN, cN) = mlstm_layer_pallas(
            x, params, state=state, mask=mask,
            compute_dtype=compute_dtype, act_dtype=act_dtype,
            time_block=time_block, batch_block=batch_block)
        out = jax.block_until_ready(out)
        hN = jax.block_until_ready(hN)
        cN = jax.block_until_ready(cN)
        assert jnp.allclose(out, out_r, atol=tol, rtol=tol), f"outputs mismatch ({idx})"
        assert jnp.allclose(hN, hN_r, atol=tol, rtol=tol), f"h_N mismatch ({idx})"
        assert jnp.allclose(cN, cN_r, atol=tol, rtol=tol), f"c_N mismatch ({idx})"

    # canonical small shape, exact f32 path
    check(0, B=2, T=8, D=16, H=32, tol=1e-4)
    # multiple time blocks + multiple batch blocks + non-multiple T (padding paths)
    check(1, B=12, T=20, D=10, H=48, time_block=8, batch_block=8, tol=1e-4)
    # bf16 matmul operands + bf16 transcendentals (v6e/v7x fast path), f32 state math
    check(2, B=2, T=8, D=16, H=32,
          compute_dtype=jnp.bfloat16, act_dtype=jnp.bfloat16, tol=5e-2)

    print("KERNEL_OK")
</pallas_src>

<mosaic_0001>
module attributes {stable_mosaic.version = 11 : i64} {
  func.func @_mlstm_block_kernel(%arg0: i32, %arg1: i32, %arg2: memref<8x8x24xf32, #tpu.memory_space<vmem>>, %arg3: memref<8x8x1xf32, #tpu.memory_space<vmem>>, %arg4: memref<8x128xf32, #tpu.memory_space<vmem>>, %arg5: memref<8x128xf32, #tpu.memory_space<vmem>>, %arg6: memref<24x640xf32, #tpu.memory_space<vmem>>, %arg7: memref<128x128xf32, #tpu.memory_space<any>>, %arg8: memref<128x512xf32, #tpu.memory_space<any>>, %arg9: memref<8x8x128xf32, #tpu.memory_space<vmem>>, %arg10: memref<8x128xf32, #tpu.memory_space<vmem>>, %arg11: memref<8x128xf32, #tpu.memory_space<vmem>>, %arg12: memref<128x128xf32, #tpu.memory_space<vmem>>, %arg13: memref<128x512xf32, #tpu.memory_space<vmem>>, %arg14: memref<2x!tpu.dma_semaphore, #tpu.memory_space<semaphore_mem>>, %arg15: memref<8x128xf32, #tpu.memory_space<vmem>>, %arg16: memref<8x128xf32, #tpu.memory_space<vmem>>) attributes {dimension_semantics = [#tpu.dimension_semantics<parallel>, #tpu.dimension_semantics<arbitrary>], iteration_bounds = array<i64: 1, 1>, scalar_prefetch = 0 : i64, scratch_operands = 5 : i64, tpu.core_type = #tpu.core_type<tc>, window_params = [{transform_indices = @transform_0, window_bounds = array<i64: 8, 8, 24>}, {transform_indices = @transform_1, window_bounds = array<i64: 8, 8, 1>}, {transform_indices = @transform_2, window_bounds = array<i64: 8, 128>}, {transform_indices = @transform_3, window_bounds = array<i64: 8, 128>}, {pipeline_mode = #tpu.pipeline_mode<synchronous>, transform_indices = @transform_4, window_bounds = array<i64: 24, 640>}, {}, {}, {transform_indices = @transform_7, window_bounds = array<i64: 8, 8, 128>}, {transform_indices = @transform_8, window_bounds = array<i64: 8, 128>}, {transform_indices = @transform_9, window_bounds = array<i64: 8, 128>}]} {
    %c0_i32 = arith.constant 0 : i32
    %0 = arith.cmpi eq, %arg1, %c0_i32 : i32
    %1 = arith.extui %0 : i1 to i32
    %c0_i32_0 = arith.constant 0 : i32
    %2 = arith.cmpi ne, %1, %c0_i32_0 : i32
    scf.if %2 {
      %c0_i32_128 = arith.constant 0 : i32
      %389 = tpu.memref_slice %arg14[%c0_i32_128] : memref<2x!tpu.dma_semaphore, #tpu.memory_space<semaphore_mem>> -> memref<1x!tpu.dma_semaphore, #tpu.memory_space<semaphore_mem>>
      %390 = tpu.memref_squeeze %389 : memref<1x!tpu.dma_semaphore, #tpu.memory_space<semaphore_mem>> -> memref<!tpu.dma_semaphore, #tpu.memory_space<semaphore_mem>>
      tpu.enqueue_dma source(%arg7 : memref<128x128xf32, #tpu.memory_space<any>>) target(%arg12 : memref<128x128xf32, #tpu.memory_space<vmem>>) target_semaphore(%390 : memref<!tpu.dma_semaphore, #tpu.memory_space<semaphore_mem>>)
      %c1_i32 = arith.constant 1 : i32
      %391 = tpu.memref_slice %arg14[%c1_i32] : memref<2x!tpu.dma_semaphore, #tpu.memory_space<semaphore_mem>> -> memref<1x!tpu.dma_semaphore, #tpu.memory_space<semaphore_mem>>
      %392 = tpu.memref_squeeze %391 : memref<1x!tpu.dma_semaphore, #tpu.memory_space<semaphore_mem>> -> memref<!tpu.dma_semaphore, #tpu.memory_space<semaphore_mem>>
      tpu.enqueue_dma source(%arg8 : memref<128x512xf32, #tpu.memory_space<any>>) target(%arg13 : memref<128x512xf32, #tpu.memory_space<vmem>>) target_semaphore(%392 : memref<!tpu.dma_semaphore, #tpu.memory_space<semaphore_mem>>)
      %c0_i32_129 = arith.constant 0 : i32
      %393 = tpu.memref_slice %arg14[%c0_i32_129] : memref<2x!tpu.dma_semaphore, #tpu.memory_space<semaphore_mem>> -> memref<1x!tpu.dma_semaphore, #tpu.memory_space<semaphore_mem>>
      %394 = tpu.memref_squeeze %393 : memref<1x!tpu.dma_semaphore, #tpu.memory_space<semaphore_mem>> -> memref<!tpu.dma_semaphore, #tpu.memory_space<semaphore_mem>>
      tpu.wait_dma2 semaphore(%394 : memref<!tpu.dma_semaphore, #tpu.memory_space<semaphore_mem>>) src(%arg7 : memref<128x128xf32, #tpu.memory_space<any>>) dst(%arg12 : memref<128x128xf32, #tpu.memory_space<vmem>>)
      %c1_i32_130 = arith.constant 1 : i32
      %395 = tpu.memref_slice %arg14[%c1_i32_130] : memref<2x!tpu.dma_semaphore, #tpu.memory_space<semaphore_mem>> -> memref<1x!tpu.dma_semaphore, #tpu.memory_space<semaphore_mem>>
      %396 = tpu.memref_squeeze %395 : memref<1x!tpu.dma_semaphore, #tpu.memory_space<semaphore_mem>> -> memref<!tpu.dma_semaphore, #tpu.memory_space<semaphore_mem>>
      tpu.wait_dma2 semaphore(%396 : memref<!tpu.dma_semaphore, #tpu.memory_space<semaphore_mem>>) src(%arg8 : memref<128x512xf32, #tpu.memory_space<any>>) dst(%arg13 : memref<128x512xf32, #tpu.memory_space<vmem>>)
      %c0_131 = arith.constant 0 : index
      %c0_132 = arith.constant 0 : index
      %397 = vector.load %arg4[%c0_131, %c0_132] : memref<8x128xf32, #tpu.memory_space<vmem>>, vector<8x128xf32>
      %c0_133 = arith.constant 0 : index
      %c0_134 = arith.constant 0 : index
      %398 = vector.load %arg15[%c0_133, %c0_134] : memref<8x128xf32, #tpu.memory_space<vmem>>, vector<8x128xf32>
      tpu.vector_store %arg15[%c0_133, %c0_134], %397 {strides = array<i32>} : memref<8x128xf32, #tpu.memory_space<vmem>>, vector<8x128xf32>,
      %c0_135 = arith.constant 0 : index
      %c0_136 = arith.constant 0 : index
      %399 = vector.load %arg5[%c0_135, %c0_136] : memref<8x128xf32, #tpu.memory_space<vmem>>, vector<8x128xf32>
      %c0_137 = arith.constant 0 : index
      %c0_138 = arith.constant 0 : index
      %400 = vector.load %arg16[%c0_137, %c0_138] : memref<8x128xf32, #tpu.memory_space<vmem>>, vector<8x128xf32>
      tpu.vector_store %arg16[%c0_137, %c0_138], %399 {strides = array<i32>} : memref<8x128xf32, #tpu.memory_space<vmem>>, vector<8x128xf32>,
    } else {
    }
    %c0 = arith.constant 0 : index
    %c0_1 = arith.constant 0 : index
    %3 = vector.load %arg15[%c0, %c0_1] : memref<8x128xf32, #tpu.memory_space<vmem>>, vector<8x128xf32>
    %c0_2 = arith.constant 0 : index
    %c0_3 = arith.constant 0 : index
    %4 = vector.load %arg16[%c0_2, %c0_3] : memref<8x128xf32, #tpu.memory_space<vmem>>, vector<8x128xf32>
    %c0_4 = arith.constant 0 : index
    %c0_5 = arith.constant 0 : index
    %5 = vector.load %arg12[%c0_4, %c0_5] : memref<128x128xf32, #tpu.memory_space<vmem>>, vector<128x128xf32>
    %c0_6 = arith.constant 0 : index
    %c0_7 = arith.constant 0 : index
    %6 = vector.load %arg13[%c0_6, %c0_7] : memref<128x512xf32, #tpu.memory_space<vmem>>, vector<128x512xf32>
    %c0_8 = arith.constant 0 : index
    %c0_9 = arith.constant 0 : index
    %7 = vector.load %arg6[%c0_8, %c0_9] : memref<24x640xf32, #tpu.memory_space<vmem>>, vector<24x640xf32>
    %c0_10 = arith.constant 0 : index
    %c0_11 = arith.constant 0 : index
    %c0_12 = arith.constant 0 : index
    %8 = vector.load %arg2[%c0_10, %c0_11, %c0_12] : memref<8x8x24xf32, #tpu.memory_space<vmem>>, vector<8x1x24xf32>
    %9 = vector.shape_cast %8 : vector<8x1x24xf32> to vector<8x24xf32>
    %cst = arith.constant dense<0.000000e+00> : vector<8x640xf32>
    %10 = tpu.matmul %9, %7, %cst {dimension_numbers = #tpu.dot_dimension_numbers<[1], [0], [0], [1], [0, 0, 1, 1], [], []>} : vector<8x24xf32>, vector<24x640xf32>, vector<8x640xf32> -> vector<8x640xf32>
    %11 = vector.extract_strided_slice %10 {offsets = [0, 0], sizes = [8, 128], strides = [1, 1]} : vector<8x640xf32> to vector<8x128xf32>
    %12 = vector.extract_strided_slice %10 {offsets = [0, 128], sizes = [8, 512], strides = [1, 1]} : vector<8x640xf32> to vector<8x512xf32>
    %cst_13 = arith.constant dense<0.000000e+00> : vector<8x128xf32>
    %13 = tpu.matmul %3, %5, %cst_13 {dimension_numbers = #tpu.dot_dimension_numbers<[1], [0], [0], [1], [0, 0, 1, 1], [], []>} : vector<8x128xf32>, vector<128x128xf32>, vector<8x128xf32> -> vector<8x128xf32>
    %14 = arith.mulf %11, %13 : vector<8x128xf32>
    %cst_14 = arith.constant dense<0.000000e+00> : vector<8x512xf32>
    %15 = tpu.matmul %14, %6, %cst_14 {dimension_numbers = #tpu.dot_dimension_numbers<[1], [0], [0], [1], [0, 0, 1, 1], [], []>} : vector<8x128xf32>, vector<128x512xf32>, vector<8x512xf32> -> vector<8x512xf32>
    %16 = arith.addf %12, %15 : vector<8x512xf32>
    %17 = vector.extract_strided_slice %16 {offsets = [0, 0], sizes = [8, 128], strides = [1, 1]} : vector<8x512xf32> to vector<8x128xf32>
    %18 = arith.negf %17 : vector<8x128xf32>
    %19 = math.exp %18 : vector<8x128xf32>
    %cst_15 = arith.constant 1.000000e+00 : f32
    %20 = vector.broadcast %cst_15 : f32 to vector<8x128xf32>
    %21 = arith.addf %20, %19 : vector<8x128xf32>
    %22 = arith.divf %20, %21 : vector<8x128xf32>
    %23 = vector.extract_strided_slice %16 {offsets = [0, 128], sizes = [8, 128], strides = [1, 1]} : vector<8x512xf32> to vector<8x128xf32>
    %24 = arith.negf %23 : vector<8x128xf32>
    %25 = math.exp %24 : vector<8x128xf32>
    %cst_16 = arith.constant 1.000000e+00 : f32
    %26 = vector.broadcast %cst_16 : f32 to vector<8x128xf32>
    %27 = arith.addf %26, %25 : vector<8x128xf32>
    %28 = arith.divf %26, %27 : vector<8x128xf32>
    %29 = vector.extract_strided_slice %16 {offsets = [0, 256], sizes = [8, 128], strides = [1, 1]} : vector<8x512xf32> to vector<8x128xf32>
    %30 = arith.negf %29 : vector<8x128xf32>
    %31 = math.exp %30 : vector<8x128xf32>
    %cst_17 = arith.constant 1.000000e+00 : f32
    %32 = vector.broadcast %cst_17 : f32 to vector<8x128xf32>
    %33 = arith.addf %32, %31 : vector<8x128xf32>
    %34 = arith.divf %32, %33 : vector<8x128xf32>
    %35 = vector.extract_strided_slice %16 {offsets = [0, 384], sizes = [8, 128], strides = [1, 1]} : vector<8x512xf32> to vector<8x128xf32>
    %36 = math.tanh %35 : vector<8x128xf32>
    %37 = arith.mulf %28, %4 : vector<8x128xf32>
    %38 = arith.mulf %22, %36 : vector<8x128xf32>
    %39 = arith.addf %37, %38 : vector<8x128xf32>
    %40 = math.tanh %39 : vector<8x128xf32>
    %41 = arith.mulf %34, %40 : vector<8x128xf32>
    %c0_18 = arith.constant 0 : index
    %c0_19 = arith.constant 0 : index
    %c0_20 = arith.constant 0 : index
    %42 = vector.load %arg3[%c0_18, %c0_19, %c0_20] : memref<8x8x1xf32, #tpu.memory_space<vmem>>, vector<8x1x1xf32>
    %43 = vector.shape_cast %42 : vector<8x1x1xf32> to vector<8x1xf32>
    %44 = arith.subf %41, %3 : vector<8x128xf32>
    %45 = vector.broadcast %43 : vector<8x1xf32> to vector<8x128xf32>
    %46 = arith.mulf %45, %44 : vector<8x128xf32>
    %47 = arith.addf %3, %46 : vector<8x128xf32>
    %48 = arith.subf %39, %4 : vector<8x128xf32>
    %49 = vector.broadcast %43 : vector<8x1xf32> to vector<8x128xf32>
    %50 = arith.mulf %49, %48 : vector<8x128xf32>
    %51 = arith.addf %4, %50 : vector<8x128xf32>
    %c0_21 = arith.constant 0 : index
    %c0_22 = arith.constant 0 : index
    %c0_23 = arith.constant 0 : index
    %52 = vector.load %arg9[%c0_21, %c0_22, %c0_23] : memref<8x8x128xf32, #tpu.memory_space<vmem>>, vector<8x1x128xf32>
    %53 = vector.shape_cast %52 : vector<8x1x128xf32> to vector<8x128xf32>
    %54 = vector.shape_cast %47 : vector<8x128xf32> to vector<8x1x128xf32>
    tpu.vector_store %arg9[%c0_21, %c0_22, %c0_23], %54 {strides = array<i32>} : memref<8x8x128xf32, #tpu.memory_space<vmem>>, vector<8x1x128xf32>,
    %c0_24 = arith.constant 0 : index
    %c1 = arith.constant 1 : index
    %c0_25 = arith.constant 0 : index
    %55 = vector.load %arg2[%c0_24, %c1, %c0_25] : memref<8x8x24xf32, #tpu.memory_space<vmem>>, vector<8x1x24xf32>
    %56 = vector.shape_cast %55 : vector<8x1x24xf32> to vector<8x24xf32>
    %cst_26 = arith.constant dense<0.000000e+00> : vector<8x640xf32>
    %57 = tpu.matmul %56, %7, %cst_26 {dimension_numbers = #tpu.dot_dimension_numbers<[1], [0], [0], [1], [0, 0, 1, 1], [], []>} : vector<8x24xf32>, vector<24x640xf32>, vector<8x640xf32> -> vector<8x640xf32>
    %58 = vector.extract_strided_slice %57 {offsets = [0, 0], sizes = [8, 128], strides = [1, 1]} : vector<8x640xf32> to vector<8x128xf32>
    %59 = vector.extract_strided_slice %57 {offsets = [0, 128], sizes = [8, 512], strides = [1, 1]} : vector<8x640xf32> to vector<8x512xf32>
    %cst_27 = arith.constant dense<0.000000e+00> : vector<8x128xf32>
    %60 = tpu.matmul %47, %5, %cst_27 {dimension_numbers = #tpu.dot_dimension_numbers<[1], [0], [0], [1], [0, 0, 1, 1], [], []>} : vector<8x128xf32>, vector<128x128xf32>, vector<8x128xf32> -> vector<8x128xf32>
    %61 = arith.mulf %58, %60 : vector<8x128xf32>
    %cst_28 = arith.constant dense<0.000000e+00> : vector<8x512xf32>
    %62 = tpu.matmul %61, %6, %cst_28 {dimension_numbers = #tpu.dot_dimension_numbers<[1], [0], [0], [1], [0, 0, 1, 1], [], []>} : vector<8x128xf32>, vector<128x512xf32>, vector<8x512xf32> -> vector<8x512xf32>
    %63 = arith.addf %59, %62 : vector<8x512xf32>
    %64 = vector.extract_strided_slice %63 {offsets = [0, 0], sizes = [8, 128], strides = [1, 1]} : vector<8x512xf32> to vector<8x128xf32>
    %65 = arith.negf %64 : vector<8x128xf32>
    %66 = math.exp %65 : vector<8x128xf32>
    %cst_29 = arith.constant 1.000000e+00 : f32
    %67 = vector.broadcast %cst_29 : f32 to vector<8x128xf32>
    %68 = arith.addf %67, %66 : vector<8x128xf32>
    %69 = arith.divf %67, %68 : vector<8x128xf32>
    %70 = vector.extract_strided_slice %63 {offsets = [0, 128], sizes = [8, 128], strides = [1, 1]} : vector<8x512xf32> to vector<8x128xf32>
    %71 = arith.negf %70 : vector<8x128xf32>
    %72 = math.exp %71 : vector<8x128xf32>
    %cst_30 = arith.constant 1.000000e+00 : f32
    %73 = vector.broadcast %cst_30 : f32 to vector<8x128xf32>
    %74 = arith.addf %73, %72 : vector<8x128xf32>
    %75 = arith.divf %73, %74 : vector<8x128xf32>
    %76 = vector.extract_strided_slice %63 {offsets = [0, 256], sizes = [8, 128], strides = [1, 1]} : vector<8x512xf32> to vector<8x128xf32>
    %77 = arith.negf %76 : vector<8x128xf32>
    %78 = math.exp %77 : vector<8x128xf32>
    %cst_31 = arith.constant 1.000000e+00 : f32
    %79 = vector.broadcast %cst_31 : f32 to vector<8x128xf32>
    %80 = arith.addf %79, %78 : vector<8x128xf32>
    %81 = arith.divf %79, %80 : vector<8x128xf32>
    %82 = vector.extract_strided_slice %63 {offsets = [0, 384], sizes = [8, 128], strides = [1, 1]} : vector<8x512xf32> to vector<8x128xf32>
    %83 = math.tanh %82 : vector<8x128xf32>
    %84 = arith.mulf %75, %51 : vector<8x128xf32>
    %85 = arith.mulf %69, %83 : vector<8x128xf32>
    %86 = arith.addf %84, %85 : vector<8x128xf32>
    %87 = math.tanh %86 : vector<8x128xf32>
    %88 = arith.mulf %81, %87 : vector<8x128xf32>
    %c0_32 = arith.constant 0 : index
    %c1_33 = arith.constant 1 : index
    %c0_34 = arith.constant 0 : index
    %89 = vector.load %arg3[%c0_32, %c1_33, %c0_34] : memref<8x8x1xf32, #tpu.memory_space<vmem>>, vector<8x1x1xf32>
    %90 = vector.shape_cast %89 : vector<8x1x1xf32> to vector<8x1xf32>
    %91 = arith.subf %88, %47 : vector<8x128xf32>
    %92 = vector.broadcast %90 : vector<8x1xf32> to vector<8x128xf32>
    %93 = arith.mulf %92, %91 : vector<8x128xf32>
    %94 = arith.addf %47, %93 : vector<8x128xf32>
    %95 = arith.subf %86, %51 : vector<8x128xf32>
    %96 = vector.broadcast %90 : vector<8x1xf32> to vector<8x128xf32>
    %97 = arith.mulf %96, %95 : vector<8x128xf32>
    %98 = arith.addf %51, %97 : vector<8x128xf32>
    %c0_35 = arith.constant 0 : index
    %c1_36 = arith.constant 1 : index
    %c0_37 = arith.constant 0 : index
    %99 = vector.load %arg9[%c0_35, %c1_36, %c0_37] : memref<8x8x128xf32, #tpu.memory_space<vmem>>, vector<8x1x128xf32>
    %100 = vector.shape_cast %99 : vector<8x1x128xf32> to vector<8x128xf32>
    %101 = vector.shape_cast %94 : vector<8x128xf32> to vector<8x1x128xf32>
    tpu.vector_store %arg9[%c0_35, %c1_36, %c0_37], %101 {strides = array<i32>} : memref<8x8x128xf32, #tpu.memory_space<vmem>>, vector<8x1x128xf32>,
    %c0_38 = arith.constant 0 : index
    %c2 = arith.constant 2 : index
    %c0_39 = arith.constant 0 : index
    %102 = vector.load %arg2[%c0_38, %c2, %c0_39] : memref<8x8x24xf32, #tpu.memory_space<vmem>>, vector<8x1x24xf32>
    %103 = vector.shape_cast %102 : vector<8x1x24xf32> to vector<8x24xf32>
    %cst_40 = arith.constant dense<0.000000e+00> : vector<8x640xf32>
    %104 = tpu.matmul %103, %7, %cst_40 {dimension_numbers = #tpu.dot_dimension_numbers<[1], [0], [0], [1], [0, 0, 1, 1], [], []>} : vector<8x24xf32>, vector<24x640xf32>, vector<8x640xf32> -> vector<8x640xf32>
    %105 = vector.extract_strided_slice %104 {offsets = [0, 0], sizes = [8, 128], strides = [1, 1]} : vector<8x640xf32> to vector<8x128xf32>
    %106 = vector.extract_strided_slice %104 {offsets = [0, 128], sizes = [8, 512], strides = [1, 1]} : vector<8x640xf32> to vector<8x512xf32>
    %cst_41 = arith.constant dense<0.000000e+00> : vector<8x128xf32>
    %107 = tpu.matmul %94, %5, %cst_41 {dimension_numbers = #tpu.dot_dimension_numbers<[1], [0], [0], [1], [0, 0, 1, 1], [], []>} : vector<8x128xf32>, vector<128x128xf32>, vector<8x128xf32> -> vector<8x128xf32>
    %108 = arith.mulf %105, %107 : vector<8x128xf32>
    %cst_42 = arith.constant dense<0.000000e+00> : vector<8x512xf32>
    %109 = tpu.matmul %108, %6, %cst_42 {dimension_numbers = #tpu.dot_dimension_numbers<[1], [0], [0], [1], [0, 0, 1, 1], [], []>} : vector<8x128xf32>, vector<128x512xf32>, vector<8x512xf32> -> vector<8x512xf32>
    %110 = arith.addf %106, %109 : vector<8x512xf32>
    %111 = vector.extract_strided_slice %110 {offsets = [0, 0], sizes = [8, 128], strides = [1, 1]} : vector<8x512xf32> to vector<8x128xf32>
    %112 = arith.negf %111 : vector<8x128xf32>
    %113 = math.exp %112 : vector<8x128xf32>
    %cst_43 = arith.constant 1.000000e+00 : f32
    %114 = vector.broadcast %cst_43 : f32 to vector<8x128xf32>
    %115 = arith.addf %114, %113 : vector<8x128xf32>
    %116 = arith.divf %114, %115 : vector<8x128xf32>
    %117 = vector.extract_strided_slice %110 {offsets = [0, 128], sizes = [8, 128], strides = [1, 1]} : vector<8x512xf32> to vector<8x128xf32>
    %118 = arith.negf %117 : vector<8x128xf32>
    %119 = math.exp %118 : vector<8x128xf32>
    %cst_44 = arith.constant 1.000000e+00 : f32
    %120 = vector.broadcast %cst_44 : f32 to vector<8x128xf32>
    %121 = arith.addf %120, %119 : vector<8x128xf32>
    %122 = arith.divf %120, %121 : vector<8x128xf32>
    %123 = vector.extract_strided_slice %110 {offsets = [0, 256], sizes = [8, 128], strides = [1, 1]} : vector<8x512xf32> to vector<8x128xf32>
    %124 = arith.negf %123 : vector<8x128xf32>
    %125 = math.exp %124 : vector<8x128xf32>
    %cst_45 = arith.constant 1.000000e+00 : f32
    %126 = vector.broadcast %cst_45 : f32 to vector<8x128xf32>
    %127 = arith.addf %126, %125 : vector<8x128xf32>
    %128 = arith.divf %126, %127 : vector<8x128xf32>
    %129 = vector.extract_strided_slice %110 {offsets = [0, 384], sizes = [8, 128], strides = [1, 1]} : vector<8x512xf32> to vector<8x128xf32>
    %130 = math.tanh %129 : vector<8x128xf32>
    %131 = arith.mulf %122, %98 : vector<8x128xf32>
    %132 = arith.mulf %116, %130 : vector<8x128xf32>
    %133 = arith.addf %131, %132 : vector<8x128xf32>
    %134 = math.tanh %133 : vector<8x128xf32>
    %135 = arith.mulf %128, %134 : vector<8x128xf32>
    %c0_46 = arith.constant 0 : index
    %c2_47 = arith.constant 2 : index
    %c0_48 = arith.constant 0 : index
    %136 = vector.load %arg3[%c0_46, %c2_47, %c0_48] : memref<8x8x1xf32, #tpu.memory_space<vmem>>, vector<8x1x1xf32>
    %137 = vector.shape_cast %136 : vector<8x1x1xf32> to vector<8x1xf32>
    %138 = arith.subf %135, %94 : vector<8x128xf32>
    %139 = vector.broadcast %137 : vector<8x1xf32> to vector<8x128xf32>
    %140 = arith.mulf %139, %138 : vector<8x128xf32>
    %141 = arith.addf %94, %140 : vector<8x128xf32>
    %142 = arith.subf %133, %98 : vector<8x128xf32>
    %143 = vector.broadcast %137 : vector<8x1xf32> to vector<8x128xf32>
    %144 = arith.mulf %143, %142 : vector<8x128xf32>
    %145 = arith.addf %98, %144 : vector<8x128xf32>
    %c0_49 = arith.constant 0 : index
    %c2_50 = arith.constant 2 : index
    %c0_51 = arith.constant 0 : index
    %146 = vector.load %arg9[%c0_49, %c2_50, %c0_51] : memref<8x8x128xf32, #tpu.memory_space<vmem>>, vector<8x1x128xf32>
    %147 = vector.shape_cast %146 : vector<8x1x128xf32> to vector<8x128xf32>
    %148 = vector.shape_cast %141 : vector<8x128xf32> to vector<8x1x128xf32>
    tpu.vector_store %arg9[%c0_49, %c2_50, %c0_51], %148 {strides = array<i32>} : memref<8x8x128xf32, #tpu.memory_space<vmem>>, vector<8x1x128xf32>,
    %c0_52 = arith.constant 0 : index
    %c3 = arith.constant 3 : index
    %c0_53 = arith.constant 0 : index
    %149 = vector.load %arg2[%c0_52, %c3, %c0_53] : memref<8x8x24xf32, #tpu.memory_space<vmem>>, vector<8x1x24xf32>
    %150 = vector.shape_cast %149 : vector<8x1x24xf32> to vector<8x24xf32>
    %cst_54 = arith.constant dense<0.000000e+00> : vector<8x640xf32>
    %151 = tpu.matmul %150, %7, %cst_54 {dimension_numbers = #tpu.dot_dimension_numbers<[1], [0], [0], [1], [0, 0, 1, 1], [], []>} : vector<8x24xf32>, vector<24x640xf32>, vector<8x640xf32> -> vector<8x640xf32>
    %152 = vector.extract_strided_slice %151 {offsets = [0, 0], sizes = [8, 128], strides = [1, 1]} : vector<8x640xf32> to vector<8x128xf32>
    %153 = vector.extract_strided_slice %151 {offsets = [0, 128], sizes = [8, 512], strides = [1, 1]} : vector<8x640xf32> to vector<8x512xf32>
    %cst_55 = arith.constant dense<0.000000e+00> : vector<8x128xf32>
    %154 = tpu.matmul %141, %5, %cst_55 {dimension_numbers = #tpu.dot_dimension_numbers<[1], [0], [0], [1], [0, 0, 1, 1], [], []>} : vector<8x128xf32>, vector<128x128xf32>, vector<8x128xf32> -> vector<8x128xf32>
    %155 = arith.mulf %152, %154 : vector<8x128xf32>
    %cst_56 = arith.constant dense<0.000000e+00> : vector<8x512xf32>
    %156 = tpu.matmul %155, %6, %cst_56 {dimension_numbers = #tpu.dot_dimension_numbers<[1], [0], [0], [1], [0, 0, 1, 1], [], []>} : vector<8x128xf32>, vector<128x512xf32>, vector<8x512xf32> -> vector<8x512xf32>
    %157 = arith.addf %153, %156 : vector<8x512xf32>
    %158 = vector.extract_strided_slice %157 {offsets = [0, 0], sizes = [8, 128], strides = [1, 1]} : vector<8x512xf32> to vector<8x128xf32>
    %159 = arith.negf %158 : vector<8x128xf32>
    %160 = math.exp %159 : vector<8x128xf32>
    %cst_57 = arith.constant 1.000000e+00 : f32
    %161 = vector.broadcast %cst_57 : f32 to vector<8x128xf32>
    %162 = arith.addf %161, %160 : vector<8x128xf32>
    %163 = arith.divf %161, %162 : vector<8x128xf32>
    %164 = vector.extract_strided_slice %157 {offsets = [0, 128], sizes = [8, 128], strides = [1, 1]} : vector<8x512xf32> to vector<8x128xf32>
    %165 = arith.negf %164 : vector<8x128xf32>
    %166 = math.exp %165 : vector<8x128xf32>
    %cst_58 = arith.constant 1.000000e+00 : f32
    %167 = vector.broadcast %cst_58 : f32 to vector<8x128xf32>
    %168 = arith.addf %167, %166 : vector<8x128xf32>
    %169 = arith.divf %167, %168 : vector<8x128xf32>
    %170 = vector.extract_strided_slice %157 {offsets = [0, 256], sizes = [8, 128], strides = [1, 1]} : vector<8x512xf32> to vector<8x128xf32>
    %171 = arith.negf %170 : vector<8x128xf32>
    %172 = math.exp %171 : vector<8x128xf32>
    %cst_59 = arith.constant 1.000000e+00 : f32
    %173 = vector.broadcast %cst_59 : f32 to vector<8x128xf32>
    %174 = arith.addf %173, %172 : vector<8x128xf32>
    %175 = arith.divf %173, %174 : vector<8x128xf32>
    %176 = vector.extract_strided_slice %157 {offsets = [0, 384], sizes = [8, 128], strides = [1, 1]} : vector<8x512xf32> to vector<8x128xf32>
    %177 = math.tanh %176 : vector<8x128xf32>
    %178 = arith.mulf %169, %145 : vector<8x128xf32>
    %179 = arith.mulf %163, %177 : vector<8x128xf32>
    %180 = arith.addf %178, %179 : vector<8x128xf32>
    %181 = math.tanh %180 : vector<8x128xf32>
    %182 = arith.mulf %175, %181 : vector<8x128xf32>
    %c0_60 = arith.constant 0 : index
    %c3_61 = arith.constant 3 : index
    %c0_62 = arith.constant 0 : index
    %183 = vector.load %arg3[%c0_60, %c3_61, %c0_62] : memref<8x8x1xf32, #tpu.memory_space<vmem>>, vector<8x1x1xf32>
    %184 = vector.shape_cast %183 : vector<8x1x1xf32> to vector<8x1xf32>
    %185 = arith.subf %182, %141 : vector<8x128xf32>
    %186 = vector.broadcast %184 : vector<8x1xf32> to vector<8x128xf32>
    %187 = arith.mulf %186, %185 : vector<8x128xf32>
    %188 = arith.addf %141, %187 : vector<8x128xf32>
    %189 = arith.subf %180, %145 : vector<8x128xf32>
    %190 = vector.broadcast %184 : vector<8x1xf32> to vector<8x128xf32>
    %191 = arith.mulf %190, %189 : vector<8x128xf32>
    %192 = arith.addf %145, %191 : vector<8x128xf32>
    %c0_63 = arith.constant 0 : index
    %c3_64 = arith.constant 3 : index
    %c0_65 = arith.constant 0 : index
    %193 = vector.load %arg9[%c0_63, %c3_64, %c0_65] : memref<8x8x128xf32, #tpu.memory_space<vmem>>, vector<8x1x128xf32>
    %194 = vector.shape_cast %193 : vector<8x1x128xf32> to vector<8x128xf32>
    %195 = vector.shape_cast %188 : vector<8x128xf32> to vector<8x1x128xf32>
    tpu.vector_store %arg9[%c0_63, %c3_64, %c0_65], %195 {strides = array<i32>} : memref<8x8x128xf32, #tpu.memory_space<vmem>>, vector<8x1x128xf32>,
    %c0_66 = arith.constant 0 : index
    %c4 = arith.constant 4 : index
    %c0_67 = arith.constant 0 : index
    %196 = vector.load %arg2[%c0_66, %c4, %c0_67] : memref<8x8x24xf32, #tpu.memory_space<vmem>>, vector<8x1x24xf32>
    %197 = vector.shape_cast %196 : vector<8x1x24xf32> to vector<8x24xf32>
    %cst_68 = arith.constant dense<0.000000e+00> : vector<8x640xf32>
    %198 = tpu.matmul %197, %7, %cst_68 {dimension_numbers = #tpu.dot_dimension_numbers<[1], [0], [0], [1], [0, 0, 1, 1], [], []>} : vector<8x24xf32>, vector<24x640xf32>, vector<8x640xf32> -> vector<8x640xf32>
    %199 = vector.extract_strided_slice %198 {offsets = [0, 0], sizes = [8, 128], strides = [1, 1]} : vector<8x640xf32> to vector<8x128xf32>
    %200 = vector.extract_strided_slice %198 {offsets = [0, 128], sizes = [8, 512], strides = [1, 1]} : vector<8x640xf32> to vector<8x512xf32>
    %cst_69 = arith.constant dense<0.000000e+00> : vector<8x128xf32>
    %201 = tpu.matmul %188, %5, %cst_69 {dimension_numbers = #tpu.dot_dimension_numbers<[1], [0], [0], [1], [0, 0, 1, 1], [], []>} : vector<8x128xf32>, vector<128x128xf32>, vector<8x128xf32> -> vector<8x128xf32>
    %202 = arith.mulf %199, %201 : vector<8x128xf32>
    %cst_70 = arith.constant dense<0.000000e+00> : vector<8x512xf32>
    %203 = tpu.matmul %202, %6, %cst_70 {dimension_numbers = #tpu.dot_dimension_numbers<[1], [0], [0], [1], [0, 0, 1, 1], [], []>} : vector<8x128xf32>, vector<128x512xf32>, vector<8x512xf32> -> vector<8x512xf32>
    %204 = arith.addf %200, %203 : vector<8x512xf32>
    %205 = vector.extract_strided_slice %204 {offsets = [0, 0], sizes = [8, 128], strides = [1, 1]} : vector<8x512xf32> to vector<8x128xf32>
    %206 = arith.negf %205 : vector<8x128xf32>
    %207 = math.exp %206 : vector<8x128xf32>
    %cst_71 = arith.constant 1.000000e+00 : f32
    %208 = vector.broadcast %cst_71 : f32 to vector<8x128xf32>
    %209 = arith.addf %208, %207 : vector<8x128xf32>
    %210 = arith.divf %208, %209 : vector<8x128xf32>
    %211 = vector.extract_strided_slice %204 {offsets = [0, 128], sizes = [8, 128], strides = [1, 1]} : vector<8x512xf32> to vector<8x128xf32>
    %212 = arith.negf %211 : vector<8x128xf32>
    %213 = math.exp %212 : vector<8x128xf32>
    %cst_72 = arith.constant 1.000000e+00 : f32
    %214 = vector.broadcast %cst_72 : f32 to vector<8x128xf32>
    %215 = arith.addf %214, %213 : vector<8x128xf32>
    %216 = arith.divf %214, %215 : vector<8x128xf32>
    %217 = vector.extract_strided_slice %204 {offsets = [0, 256], sizes = [8, 128], strides = [1, 1]} : vector<8x512xf32> to vector<8x128xf32>
    %218 = arith.negf %217 : vector<8x128xf32>
    %219 = math.exp %218 : vector<8x128xf32>
    %cst_73 = arith.constant 1.000000e+00 : f32
    %220 = vector.broadcast %cst_73 : f32 to vector<8x128xf32>
    %221 = arith.addf %220, %219 : vector<8x128xf32>
    %222 = arith.divf %220, %221 : vector<8x128xf32>
    %223 = vector.extract_strided_slice %204 {offsets = [0, 384], sizes = [8, 128], strides = [1, 1]} : vector<8x512xf32> to vector<8x128xf32>
    %224 = math.tanh %223 : vector<8x128xf32>
    %225 = arith.mulf %216, %192 : vector<8x128xf32>
    %226 = arith.mulf %210, %224 : vector<8x128xf32>
    %227 = arith.addf %225, %226 : vector<8x128xf32>
    %228 = math.tanh %227 : vector<8x128xf32>
    %229 = arith.mulf %222, %228 : vector<8x128xf32>
    %c0_74 = arith.constant 0 : index
    %c4_75 = arith.constant 4 : index
    %c0_76 = arith.constant 0 : index
    %230 = vector.load %arg3[%c0_74, %c4_75, %c0_76] : memref<8x8x1xf32, #tpu.memory_space<vmem>>, vector<8x1x1xf32>
    %231 = vector.shape_cast %230 : vector<8x1x1xf32> to vector<8x1xf32>
    %232 = arith.subf %229, %188 : vector<8x128xf32>
    %233 = vector.broadcast %231 : vector<8x1xf32> to vector<8x128xf32>
    %234 = arith.mulf %233, %232 : vector<8x128xf32>
    %235 = arith.addf %188, %234 : vector<8x128xf32>
    %236 = arith.subf %227, %192 : vector<8x128xf32>
    %237 = vector.broadcast %231 : vector<8x1xf32> to vector<8x128xf32>
    %238 = arith.mulf %237, %236 : vector<8x128xf32>
    %239 = arith.addf %192, %238 : vector<8x128xf32>
    %c0_77 = arith.constant 0 : index
    %c4_78 = arith.constant 4 : index
    %c0_79 = arith.constant 0 : index
    %240 = vector.load %arg9[%c0_77, %c4_78, %c0_79] : memref<8x8x128xf32, #tpu.memory_space<vmem>>, vector<8x1x128xf32>
    %241 = vector.shape_cast %240 : vector<8x1x128xf32> to vector<8x128xf32>
    %242 = vector.shape_cast %235 : vector<8x128xf32> to vector<8x1x128xf32>
    tpu.vector_store %arg9[%c0_77, %c4_78, %c0_79], %242 {strides = array<i32>} : memref<8x8x128xf32, #tpu.memory_space<vmem>>, vector<8x1x128xf32>,
    %c0_80 = arith.constant 0 : index
    %c5 = arith.constant 5 : index
    %c0_81 = arith.constant 0 : index
    %243 = vector.load %arg2[%c0_80, %c5, %c0_81] : memref<8x8x24xf32, #tpu.memory_space<vmem>>, vector<8x1x24xf32>
    %244 = vector.shape_cast %243 : vector<8x1x24xf32> to vector<8x24xf32>
    %cst_82 = arith.constant dense<0.000000e+00> : vector<8x640xf32>
    %245 = tpu.matmul %244, %7, %cst_82 {dimension_numbers = #tpu.dot_dimension_numbers<[1], [0], [0], [1], [0, 0, 1, 1], [], []>} : vector<8x24xf32>, vector<24x640xf32>, vector<8x640xf32> -> vector<8x640xf32>
    %246 = vector.extract_strided_slice %245 {offsets = [0, 0], sizes = [8, 128], strides = [1, 1]} : vector<8x640xf32> to vector<8x128xf32>
    %247 = vector.extract_strided_slice %245 {offsets = [0, 128], sizes = [8, 512], strides = [1, 1]} : vector<8x640xf32> to vector<8x512xf32>
    %cst_83 = arith.constant dense<0.000000e+00> : vector<8x128xf32>
    %248 = tpu.matmul %235, %5, %cst_83 {dimension_numbers = #tpu.dot_dimension_numbers<[1], [0], [0], [1], [0, 0, 1, 1], [], []>} : vector<8x128xf32>, vector<128x128xf32>, vector<8x128xf32> -> vector<8x128xf32>
    %249 = arith.mulf %246, %248 : vector<8x128xf32>
    %cst_84 = arith.constant dense<0.000000e+00> : vector<8x512xf32>
    %250 = tpu.matmul %249, %6, %cst_84 {dimension_numbers = #tpu.dot_dimension_numbers<[1], [0], [0], [1], [0, 0, 1, 1], [], []>} : vector<8x128xf32>, vector<128x512xf32>, vector<8x512xf32> -> vector<8x512xf32>
    %251 = arith.addf %247, %250 : vector<8x512xf32>
    %252 = vector.extract_strided_slice %251 {offsets = [0, 0], sizes = [8, 128], strides = [1, 1]} : vector<8x512xf32> to vector<8x128xf32>
    %253 = arith.negf %252 : vector<8x128xf32>
    %254 = math.exp %253 : vector<8x128xf32>
    %cst_85 = arith.constant 1.000000e+00 : f32
    %255 = vector.broadcast %cst_85 : f32 to vector<8x128xf32>
    %256 = arith.addf %255, %254 : vector<8x128xf32>
    %257 = arith.divf %255, %256 : vector<8x128xf32>
    %258 = vector.extract_strided_slice %251 {offsets = [0, 128], sizes = [8, 128], strides = [1, 1]} : vector<8x512xf32> to vector<8x128xf32>
    %259 = arith.negf %258 : vector<8x128xf32>
    %260 = math.exp %259 : vector<8x128xf32>
    %cst_86 = arith.constant 1.000000e+00 : f32
    %261 = vector.broadcast %cst_86 : f32 to vector<8x128xf32>
    %262 = arith.addf %261, %260 : vector<8x128xf32>
    %263 = arith.divf %261, %262 : vector<8x128xf32>
    %264 = vector.extract_strided_slice %251 {offsets = [0, 256], sizes = [8, 128], strides = [1, 1]} : vector<8x512xf32> to vector<8x128xf32>
    %265 = arith.negf %264 : vector<8x128xf32>
    %266 = math.exp %265 : vector<8x128xf32>
    %cst_87 = arith.constant 1.000000e+00 : f32
    %267 = vector.broadcast %cst_87 : f32 to vector<8x128xf32>
    %268 = arith.addf %267, %266 : vector<8x128xf32>
    %269 = arith.divf %267, %268 : vector<8x128xf32>
    %270 = vector.extract_strided_slice %251 {offsets = [0, 384], sizes = [8, 128], strides = [1, 1]} : vector<8x512xf32> to vector<8x128xf32>
    %271 = math.tanh %270 : vector<8x128xf32>
    %272 = arith.mulf %263, %239 : vector<8x128xf32>
    %273 = arith.mulf %257, %271 : vector<8x128xf32>
    %274 = arith.addf %272, %273 : vector<8x128xf32>
    %275 = math.tanh %274 : vector<8x128xf32>
    %276 = arith.mulf %269, %275 : vector<8x128xf32>
    %c0_88 = arith.constant 0 : index
    %c5_89 = arith.constant 5 : index
    %c0_90 = arith.constant 0 : index
    %277 = vector.load %arg3[%c0_88, %c5_89, %c0_90] : memref<8x8x1xf32, #tpu.memory_space<vmem>>, vector<8x1x1xf32>
    %278 = vector.shape_cast %277 : vector<8x1x1xf32> to vector<8x1xf32>
    %279 = arith.subf %276, %235 : vector<8x128xf32>
    %280 = vector.broadcast %278 : vector<8x1xf32> to vector<8x128xf32>
    %281 = arith.mulf %280, %279 : vector<8x128xf32>
    %282 = arith.addf %235, %281 : vector<8x128xf32>
    %283 = arith.subf %274, %239 : vector<8x128xf32>
    %284 = vector.broadcast %278 : vector<8x1xf32> to vector<8x128xf32>
    %285 = arith.mulf %284, %283 : vector<8x128xf32>
    %286 = arith.addf %239, %285 : vector<8x128xf32>
    %c0_91 = arith.constant 0 : index
    %c5_92 = arith.constant 5 : index
    %c0_93 = arith.constant 0 : index
    %287 = vector.load %arg9[%c0_91, %c5_92, %c0_93] : memref<8x8x128xf32, #tpu.memory_space<vmem>>, vector<8x1x128xf32>
    %288 = vector.shape_cast %287 : vector<8x1x128xf32> to vector<8x128xf32>
    %289 = vector.shape_cast %282 : vector<8x128xf32> to vector<8x1x128xf32>
    tpu.vector_store %arg9[%c0_91, %c5_92, %c0_93], %289 {strides = array<i32>} : memref<8x8x128xf32, #tpu.memory_space<vmem>>, vector<8x1x128xf32>,
    %c0_94 = arith.constant 0 : index
    %c6 = arith.constant 6 : index
    %c0_95 = arith.constant 0 : index
    %290 = vector.load %arg2[%c0_94, %c6, %c0_95] : memref<8x8x24xf32, #tpu.memory_space<vmem>>, vector<8x1x24xf32>
    %291 = vector.shape_cast %290 : vector<8x1x24xf32> to vector<8x24xf32>
    %cst_96 = arith.constant dense<0.000000e+00> : vector<8x640xf32>
    %292 = tpu.matmul %291, %7, %cst_96 {dimension_numbers = #tpu.dot_dimension_numbers<[1], [0], [0], [1], [0, 0, 1, 1], [], []>} : vector<8x24xf32>, vector<24x640xf32>, vector<8x640xf32> -> vector<8x640xf32>
    %293 = vector.extract_strided_slice %292 {offsets = [0, 0], sizes = [8, 128], strides = [1, 1]} : vector<8x640xf32> to vector<8x128xf32>
    %294 = vector.extract_strided_slice %292 {offsets = [0, 128], sizes = [8, 512], strides = [1, 1]} : vector<8x640xf32> to vector<8x512xf32>
    %cst_97 = arith.constant dense<0.000000e+00> : vector<8x128xf32>
    %295 = tpu.matmul %282, %5, %cst_97 {dimension_numbers = #tpu.dot_dimension_numbers<[1], [0], [0], [1], [0, 0, 1, 1], [], []>} : vector<8x128xf32>, vector<128x128xf32>, vector<8x128xf32> -> vector<8x128xf32>
    %296 = arith.mulf %293, %295 : vector<8x128xf32>
    %cst_98 = arith.constant dense<0.000000e+00> : vector<8x512xf32>
    %297 = tpu.matmul %296, %6, %cst_98 {dimension_numbers = #tpu.dot_dimension_numbers<[1], [0], [0], [1], [0, 0, 1, 1], [], []>} : vector<8x128xf32>, vector<128x512xf32>, vector<8x512xf32> -> vector<8x512xf32>
    %298 = arith.addf %294, %297 : vector<8x512xf32>
    %299 = vector.extract_strided_slice %298 {offsets = [0, 0], sizes = [8, 128], strides = [1, 1]} : vector<8x512xf32> to vector<8x128xf32>
    %300 = arith.negf %299 : vector<8x128xf32>
    %301 = math.exp %300 : vector<8x128xf32>
    %cst_99 = arith.constant 1.000000e+00 : f32
    %302 = vector.broadcast %cst_99 : f32 to vector<8x128xf32>
    %303 = arith.addf %302, %301 : vector<8x128xf32>
    %304 = arith.divf %302, %303 : vector<8x128xf32>
    %305 = vector.extract_strided_slice %298 {offsets = [0, 128], sizes = [8, 128], strides = [1, 1]} : vector<8x512xf32> to vector<8x128xf32>
    %306 = arith.negf %305 : vector<8x128xf32>
    %307 = math.exp %306 : vector<8x128xf32>
    %cst_100 = arith.constant 1.000000e+00 : f32
    %308 = vector.broadcast %cst_100 : f32 to vector<8x128xf32>
    %309 = arith.addf %308, %307 : vector<8x128xf32>
    %310 = arith.divf %308, %309 : vector<8x128xf32>
    %311 = vector.extract_strided_slice %298 {offsets = [0, 256], sizes = [8, 128], strides = [1, 1]} : vector<8x512xf32> to vector<8x128xf32>
    %312 = arith.negf %311 : vector<8x128xf32>
    %313 = math.exp %312 : vector<8x128xf32>
    %cst_101 = arith.constant 1.000000e+00 : f32
    %314 = vector.broadcast %cst_101 : f32 to vector<8x128xf32>
    %315 = arith.addf %314, %313 : vector<8x128xf32>
    %316 = arith.divf %314, %315 : vector<8x128xf32>
    %317 = vector.extract_strided_slice %298 {offsets = [0, 384], sizes = [8, 128], strides = [1, 1]} : vector<8x512xf32> to vector<8x128xf32>
    %318 = math.tanh %317 : vector<8x128xf32>
    %319 = arith.mulf %310, %286 : vector<8x128xf32>
    %320 = arith.mulf %304, %318 : vector<8x128xf32>
    %321 = arith.addf %319, %320 : vector<8x128xf32>
    %322 = math.tanh %321 : vector<8x128xf32>
    %323 = arith.mulf %316, %322 : vector<8x128xf32>
    %c0_102 = arith.constant 0 : index
    %c6_103 = arith.constant 6 : index
    %c0_104 = arith.constant 0 : index
    %324 = vector.load %arg3[%c0_102, %c6_103, %c0_104] : memref<8x8x1xf32, #tpu.memory_space<vmem>>, vector<8x1x1xf32>
    %325 = vector.shape_cast %324 : vector<8x1x1xf32> to vector<8x1xf32>
    %326 = arith.subf %323, %282 : vector<8x128xf32>
    %327 = vector.broadcast %325 : vector<8x1xf32> to vector<8x128xf32>
    %328 = arith.mulf %327, %326 : vector<8x128xf32>
    %329 = arith.addf %282, %328 : vector<8x128xf32>
    %330 = arith.subf %321, %286 : vector<8x128xf32>
    %331 = vector.broadcast %325 : vector<8x1xf32> to vector<8x128xf32>
    %332 = arith.mulf %331, %330 : vector<8x128xf32>
    %333 = arith.addf %286, %332 : vector<8x128xf32>
    %c0_105 = arith.constant 0 : index
    %c6_106 = arith.constant 6 : index
    %c0_107 = arith.constant 0 : index
    %334 = vector.load %arg9[%c0_105, %c6_106, %c0_107] : memref<8x8x128xf32, #tpu.memory_space<vmem>>, vector<8x1x128xf32>
    %335 = vector.shape_cast %334 : vector<8x1x128xf32> to vector<8x128xf32>
    %336 = vector.shape_cast %329 : vector<8x128xf32> to vector<8x1x128xf32>
    tpu.vector_store %arg9[%c0_105, %c6_106, %c0_107], %336 {strides = array<i32>} : memref<8x8x128xf32, #tpu.memory_space<vmem>>, vector<8x1x128xf32>,
    %c0_108 = arith.constant 0 : index
    %c7 = arith.constant 7 : index
    %c0_109 = arith.constant 0 : index
    %337 = vector.load %arg2[%c0_108, %c7, %c0_109] : memref<8x8x24xf32, #tpu.memory_space<vmem>>, vector<8x1x24xf32>
    %338 = vector.shape_cast %337 : vector<8x1x24xf32> to vector<8x24xf32>
    %cst_110 = arith.constant dense<0.000000e+00> : vector<8x640xf32>
    %339 = tpu.matmul %338, %7, %cst_110 {dimension_numbers = #tpu.dot_dimension_numbers<[1], [0], [0], [1], [0, 0, 1, 1], [], []>} : vector<8x24xf32>, vector<24x640xf32>, vector<8x640xf32> -> vector<8x640xf32>
    %340 = vector.extract_strided_slice %339 {offsets = [0, 0], sizes = [8, 128], strides = [1, 1]} : vector<8x640xf32> to vector<8x128xf32>
    %341 = vector.extract_strided_slice %339 {offsets = [0, 128], sizes = [8, 512], strides = [1, 1]} : vector<8x640xf32> to vector<8x512xf32>
    %cst_111 = arith.constant dense<0.000000e+00> : vector<8x128xf32>
    %342 = tpu.matmul %329, %5, %cst_111 {dimension_numbers = #tpu.dot_dimension_numbers<[1], [0], [0], [1], [0, 0, 1, 1], [], []>} : vector<8x128xf32>, vector<128x128xf32>, vector<8x128xf32> -> vector<8x128xf32>
    %343 = arith.mulf %340, %342 : vector<8x128xf32>
    %cst_112 = arith.constant dense<0.000000e+00> : vector<8x512xf32>
    %344 = tpu.matmul %343, %6, %cst_112 {dimension_numbers = #tpu.dot_dimension_numbers<[1], [0], [0], [1], [0, 0, 1, 1], [], []>} : vector<8x128xf32>, vector<128x512xf32>, vector<8x512xf32> -> vector<8x512xf32>
    %345 = arith.addf %341, %344 : vector<8x512xf32>
    %346 = vector.extract_strided_slice %345 {offsets = [0, 0], sizes = [8, 128], strides = [1, 1]} : vector<8x512xf32> to vector<8x128xf32>
    %347 = arith.negf %346 : vector<8x128xf32>
    %348 = math.exp %347 : vector<8x128xf32>
    %cst_113 = arith.constant 1.000000e+00 : f32
    %349 = vector.broadcast %cst_113 : f32 to vector<8x128xf32>
    %350 = arith.addf %349, %348 : vector<8x128xf32>
    %351 = arith.divf %349, %350 : vector<8x128xf32>
    %352 = vector.extract_strided_slice %345 {offsets = [0, 128], sizes = [8, 128], strides = [1, 1]} : vector<8x512xf32> to vector<8x128xf32>
    %353 = arith.negf %352 : vector<8x128xf32>
    %354 = math.exp %353 : vector<8x128xf32>
    %cst_114 = arith.constant 1.000000e+00 : f32
    %355 = vector.broadcast %cst_114 : f32 to vector<8x128xf32>
    %356 = arith.addf %355, %354 : vector<8x128xf32>
    %357 = arith.divf %355, %356 : vector<8x128xf32>
    %358 = vector.extract_strided_slice %345 {offsets = [0, 256], sizes = [8, 128], strides = [1, 1]} : vector<8x512xf32> to vector<8x128xf32>
    %359 = arith.negf %358 : vector<8x128xf32>
    %360 = math.exp %359 : vector<8x128xf32>
    %cst_115 = arith.constant 1.000000e+00 : f32
    %361 = vector.broadcast %cst_115 : f32 to vector<8x128xf32>
    %362 = arith.addf %361, %360 : vector<8x128xf32>
    %363 = arith.divf %361, %362 : vector<8x128xf32>
    %364 = vector.extract_strided_slice %345 {offsets = [0, 384], sizes = [8, 128], strides = [1, 1]} : vector<8x512xf32> to vector<8x128xf32>
    %365 = math.tanh %364 : vector<8x128xf32>
    %366 = arith.mulf %357, %333 : vector<8x128xf32>
    %367 = arith.mulf %351, %365 : vector<8x128xf32>
    %368 = arith.addf %366, %367 : vector<8x128xf32>
    %369 = math.tanh %368 : vector<8x128xf32>
    %370 = arith.mulf %363, %369 : vector<8x128xf32>
    %c0_116 = arith.constant 0 : index
    %c7_117 = arith.constant 7 : index
    %c0_118 = arith.constant 0 : index
    %371 = vector.load %arg3[%c0_116, %c7_117, %c0_118] : memref<8x8x1xf32, #tpu.memory_space<vmem>>, vector<8x1x1xf32>
    %372 = vector.shape_cast %371 : vector<8x1x1xf32> to vector<8x1xf32>
    %373 = arith.subf %370, %329 : vector<8x128xf32>
    %374 = vector.broadcast %372 : vector<8x1xf32> to vector<8x128xf32>
    %375 = arith.mulf %374, %373 : vector<8x128xf32>
    %376 = arith.addf %329, %375 : vector<8x128xf32>
    %377 = arith.subf %368, %333 : vector<8x128xf32>
    %378 = vector.broadcast %372 : vector<8x1xf32> to vector<8x128xf32>
    %379 = arith.mulf %378, %377 : vector<8x128xf32>
    %380 = arith.addf %333, %379 : vector<8x128xf32>
    %c0_119 = arith.constant 0 : index
    %c7_120 = arith.constant 7 : index
    %c0_121 = arith.constant 0 : index
    %381 = vector.load %arg9[%c0_119, %c7_120, %c0_121] : memref<8x8x128xf32, #tpu.memory_space<vmem>>, vector<8x1x128xf32>
    %382 = vector.shape_cast %381 : vector<8x1x128xf32> to vector<8x128xf32>
    %383 = vector.shape_cast %376 : vector<8x128xf32> to vector<8x1x128xf32>
    tpu.vector_store %arg9[%c0_119, %c7_120, %c0_121], %383 {strides = array<i32>} : memref<8x8x128xf32, #tpu.memory_space<vmem>>, vector<8x1x128xf32>,
    %c0_122 = arith.constant 0 : index
    %c0_123 = arith.constant 0 : index
    %384 = vector.load %arg15[%c0_122, %c0_123] : memref<8x128xf32, #tpu.memory_space<vmem>>, vector<8x128xf32>
    tpu.vector_store %arg15[%c0_122, %c0_123], %376 {strides = array<i32>} : memref<8x128xf32, #tpu.memory_space<vmem>>, vector<8x128xf32>,
    %c0_124 = arith.constant 0 : index
    %c0_125 = arith.constant 0 : index
    %385 = vector.load %arg16[%c0_124, %c0_125] : memref<8x128xf32, #tpu.memory_space<vmem>>, vector<8x128xf32>
    tpu.vector_store %arg16[%c0_124, %c0_125], %380 {strides = array<i32>} : memref<8x128xf32, #tpu.memory_space<vmem>>, vector<8x128xf32>,
    %c0_i32_126 = arith.constant 0 : i32
    %386 = arith.cmpi eq, %arg1, %c0_i32_126 : i32
    %387 = arith.extui %386 : i1 to i32
    %c0_i32_127 = arith.constant 0 : i32
    %388 = arith.cmpi ne, %387, %c0_i32_127 : i32
    scf.if %388 {
      %c0_128 = arith.constant 0 : index
      %c0_129 = arith.constant 0 : index
      %389 = vector.load %arg10[%c0_128, %c0_129] : memref<8x128xf32, #tpu.memory_space<vmem>>, vector<8x128xf32>
      tpu.vector_store %arg10[%c0_128, %c0_129], %376 {strides = array<i32>} : memref<8x128xf32, #tpu.memory_space<vmem>>, vector<8x128xf32>,
      %c0_130 = arith.constant 0 : index
      %c0_131 = arith.constant 0 : index
      %390 = vector.load %arg11[%c0_130, %c0_131] : memref<8x128xf32, #tpu.memory_space<vmem>>, vector<8x128xf32>
      tpu.vector_store %arg11[%c0_130, %c0_131], %380 {strides = array<i32>} : memref<8x128xf32, #tpu.memory_space<vmem>>, vector<8x128xf32>,
    } else {
    }
    return
  }
  func.func @transform_0(%arg0: i32, %arg1: i32) -> (i32, i32, i32) {
    %c0_i32 = arith.constant 0 : i32
    %c0_i32_0 = arith.constant 0 : i32
    return %arg0, %arg1, %c0_i32 : i32, i32, i32
  }
  func.func @transform_1(%arg0: i32, %arg1: i32) -> (i32, i32, i32) {
    %c0_i32 = arith.constant 0 : i32
    %c0_i32_0 = arith.constant 0 : i32
    return %arg0, %arg1, %c0_i32 : i32, i32, i32
  }
  func.func @transform_2(%arg0: i32, %arg1: i32) -> (i32, i32) {
    %c0_i32 = arith.constant 0 : i32
    %c0_i32_0 = arith.constant 0 : i32
    return %arg0, %c0_i32 : i32, i32
  }
  func.func @transform_3(%arg0: i32, %arg1: i32) -> (i32, i32) {
    %c0_i32 = arith.constant 0 : i32
    %c0_i32_0 = arith.constant 0 : i32
    return %arg0, %c0_i32 : i32, i32
  }
  func.func @transform_4(%arg0: i32, %arg1: i32) -> (i32, i32) {
    %c0_i32 = arith.constant 0 : i32
    %c0_i32_0 = arith.constant 0 : i32
    %c0_i32_1 = arith.constant 0 : i32
    return %c0_i32, %c0_i32_0 : i32, i32
  }
  func.func @transform_7(%arg0: i32, %arg1: i32) -> (i32, i32, i32) {
    %c0_i32 = arith.constant 0 : i32
    %c0_i32_0 = arith.constant 0 : i32
    return %arg0, %arg1, %c0_i32 : i32, i32, i32
  }
  func.func @transform_8(%arg0: i32, %arg1: i32) -> (i32, i32) {
    %c0_i32 = arith.constant 0 : i32
    %c0_i32_0 = arith.constant 0 : i32
    return %arg0, %c0_i32 : i32, i32
  }
  func.func @transform_9(%arg0: i32, %arg1: i32) -> (i32, i32) {
    %c0_i32 = arith.constant 0 : i32
    %c0_i32_0 = arith.constant 0 : i32
    return %arg0, %c0_i32 : i32, i32
  }
}

</mosaic_0001>

<llo_original>
// kernel: tpu_custom_call.1
$region0: #{tpu_custom_call.1}
  #allocation0 [shape = 'u32[]', space=smem, size = 0x4, offset = 0x4, fixed_abs, tag = 'smem constant byte address 0x4 - core index']
  #allocation1 [shape = 'u32[144,128]{1,0:T(1,128)}', space=vmem, size = 0x12000, scoped, tag = 'internal scratch']
  #allocation2 [shape = 'f32[128,128]{1,0:T(8,128)}', space=vmem, size = 0x10000, scoped, tag = 'scratch operand']
  #allocation3 [shape = 'f32[128,512]{1,0:T(8,128)}', space=vmem, size = 0x40000, scoped, tag = 'scratch operand']
  #allocation4 [shape = 's32[2]{0}', space=sflag, size = 0x8, scoped, tag = 'scratch operand']
  #allocation5 [shape = 'f32[8,128]{1,0:T(8,128)}', space=vmem, size = 0x1000, scoped, tag = 'scratch operand']
  #allocation6 [shape = 'f32[8,128]{1,0:T(8,128)}', space=vmem, size = 0x1000, scoped, tag = 'scratch operand']
  #allocation14 [shape = 's32[]', space=sflag, size = 0x4, offset = 0, fixed_abs, tag = 'sflag constant byte address 0x0 - dummy sync flag']
  #allocation15 [shape = 's32[]', space=sflag, size = 0x4, offset = 0, fixed_abs, tag = 'sflag constant byte address 0x0 - dummy sync flag']
  #allocation16 [shape = 'u32[]', space=smem, size = 0x4, offset = 0x44, fixed_abs, tag = 'smem constant byte address 0x44 - assertion arg 0']
  #allocation17 [shape = 'u32[]', space=smem, size = 0x4, offset = 0x48, fixed_abs, tag = 'smem constant byte address 0x48 - assertion arg 1']
  #allocation18 [shape = 's32[]', space=sflag, size = 0x4, offset = 0, fixed_abs, tag = 'sflag constant byte address 0x0 - dummy sync flag']
  #allocation19 [shape = 's32[]', space=sflag, size = 0x4, offset = 0, fixed_abs, tag = 'sflag constant byte address 0x0 - dummy sync flag']
  %s0 = inlined_call_operand.vmem [shape: f32[8,8,24], index: 0, kind: input, shape index: {}]
  %s1 = inlined_call_operand.vmem [shape: f32[8,8,1], index: 1, kind: input, shape index: {}]
  %s2 = inlined_call_operand.vmem [shape: f32[8,128], index: 2, kind: input, shape index: {}]
  %s3 = inlined_call_operand.vmem [shape: f32[8,128], index: 3, kind: input, shape index: {}]
  %s4 = inlined_call_operand.hbm [shape: f32[24,640], index: 4, kind: input, shape index: {}]
  %s5 = inlined_call_operand.hbm [shape: f32[128,128], index: 5, kind: input, shape index: {}]
  %s6 = inlined_call_operand.hbm [shape: f32[128,512], index: 6, kind: input, shape index: {}]
  %s7 = inlined_call_operand.hbm [shape: f32[8,8,128], index: 7, kind: output, shape index: {0}]
  %s8 = inlined_call_operand.hbm [shape: f32[8,128], index: 8, kind: output, shape index: {1}]
  %s9 = inlined_call_operand.hbm [shape: f32[8,128], index: 9, kind: output, shape index: {2}]
  %10 = xla_tuple %s7, %s8, %s9
  %s11 = sld [smem:[#allocation0]]
  $region66: #{tpu_custom_call.1} parent=0
    _
  %s13 = ssub.s32 1, %s11
  %s14 = scalar_select 0, %s13, %s11
  $region1: #{tpu_custom_call.1} parent=0
    #allocation7 [shape = 'u8[61440]{0}', space=vmem, size = 0xf000, scoped, tag = 'input window, operand 4, single buffered']
    #allocation8 [shape = 's32[1]{0}', space=sflag, size = 0x4, scoped, tag = 'scoped memory for tpu_custom_call.1']
    #allocation9 [shape = 's32[1]{0}', space=sflag, size = 0x4, scoped, tag = 'scoped memory for tpu_custom_call.1']
    #allocation10 [shape = 'u8[32768]{0}', space=vmem, size = 0x8000, scoped, tag = 'output window, operand 0, single buffered']
    #allocation11 [shape = 'u8[4096]{0}', space=vmem, size = 0x1000, scoped, tag = 'output window, operand 1, single buffered']
    #allocation12 [shape = 's32[1]{0}', space=sflag, size = 0x4, scoped, tag = 'scoped memory for tpu_custom_call.1']
    #allocation13 [shape = 'u8[4096]{0}', space=vmem, size = 0x1000, scoped, tag = 'output window, operand 2, single buffered']
    %15 = vsyncpa [#allocation8], 0
    %16 = vsyncpa [#allocation9], 0
    %17 = vsyncpa [#allocation12], 0
    // Predicated region
    $region2: #{tpu_custom_call.1} parent=1 // pred_check
      _
    $region3: #{tpu_custom_call.1} parent=1 // pred_check_branch
      %19 = sbr.rel (0) target = $region5
    $region4: #{tpu_custom_call.1} parent=1 // pred_region
      _
    $region5: #{tpu_custom_call.1} parent=1 // pred_fallthru
      _
    // Predicated region
    $region6: #{tpu_custom_call.1} parent=1 // pred_check
      _
    $region7: #{tpu_custom_call.1} parent=1 // pred_check_branch
      %21 = sbr.rel (0) target = $region9
    $region8: #{tpu_custom_call.1} parent=1 // pred_region
      _
    $region9: #{tpu_custom_call.1} parent=1 // pred_fallthru
      _
    // Predicated region
    $region10: #{tpu_custom_call.1} parent=1 // pred_check
      _
    $region11: #{tpu_custom_call.1} parent=1 // pred_check_branch
      %23 = sbr.rel (0) target = $region13
    $region12: #{tpu_custom_call.1} parent=1 // pred_region
      _
    $region13: #{tpu_custom_call.1} parent=1 // pred_fallthru
      _
    // Predicated region
    $region14: #{tpu_custom_call.1} parent=1 // pred_check
      _
    $region15: #{tpu_custom_call.1} parent=1 // pred_check_branch
      %25 = sbr.rel (0) target = $region17
    $region16: #{tpu_custom_call.1} parent=1 // pred_region
      _
    $region17: #{tpu_custom_call.1} parent=1 // pred_fallthru
      _
    // Predicated region
    $region18: #{tpu_custom_call.1} parent=1 // pred_check
      _
    $region19: #{tpu_custom_call.1} parent=1 // pred_check_branch
      %27 = sbr.rel (0) target = $region21
    $region20: #{tpu_custom_call.1} parent=1 // pred_region
      %s29 = ssub.s32 1920, 1920
      %30 = vsyncadd [#allocation8], %s29
      %s31 = sshll.u32 [#allocation7], 4
      %s32 = int_to_ptr.vmem [resolvable:$true] %s31
      %37 = dma.hbm_to_vmem [thread:$0]  %s4, 1920, %s32, [#allocation8], 640, 640, 40
    $region21: #{tpu_custom_call.1} parent=1 // pred_fallthru
      _
    // Predicated region
    $region22: #{tpu_custom_call.1} parent=1 // pred_check
      _
    $region23: #{tpu_custom_call.1} parent=1 // pred_check_branch
      %39 = sbr.rel (0) target = $region25
    $region24: #{tpu_custom_call.1} parent=1 // pred_region
      %40 = dma.done [#allocation8], 1920
    $region25: #{tpu_custom_call.1} parent=1 // pred_fallthru
      _
    %p41 = scmp.eq.s32.totalorder 0, 0
    // Predicated region
    $region26: #{tpu_custom_call.1} parent=1 // pred_check
      %p42 = pneg %p41
    $region27: #{tpu_custom_call.1} parent=1 // pred_check_branch
      %44 = sbr.rel (%p42) target = $region29
    $region28: #{tpu_custom_call.1} parent=1 // pred_region
      // Predicated region
      $region30: #{tpu_custom_call.1} parent=28 // pred_check
        _
      $region31: #{tpu_custom_call.1} parent=28 // pred_check_branch
        %46 = sbr.rel target = $region33
      $region32: #{tpu_custom_call.1} parent=28 // pred_region
        %47 = sst [smem:[#allocation16]] [#allocation15]
        %48 = sst [smem:[#allocation17]] [#allocation14]
      $region33: #{tpu_custom_call.1} parent=28 // pred_fallthru
        _
      %50 = shalt.err (0)
      %s52 = sshll.u32 [#allocation2], 4
      %s53 = int_to_ptr.vmem [resolvable:$true] %s52
      %55 = dma.hbm_to_vmem [thread:$0]  %s5, 2048, %s53, [#allocation4]
      %s56 = scalar_lea.sflag [#allocation4], 1
      // Predicated region
      $region34: #{tpu_custom_call.1} parent=28 // pred_check
        _
      $region35: #{tpu_custom_call.1} parent=28 // pred_check_branch
        %58 = sbr.rel target = $region37
      $region36: #{tpu_custom_call.1} parent=28 // pred_region
        %59 = sst [smem:[#allocation16]] [#allocation19]
        %60 = sst [smem:[#allocation17]] [#allocation18]
      $region37: #{tpu_custom_call.1} parent=28 // pred_fallthru
        _
      %62 = shalt.err (0)
      %s64 = sshll.u32 [#allocation3], 4
      %s65 = int_to_ptr.vmem [resolvable:$true] %s64
      %67 = dma.hbm_to_vmem [thread:$0]  %s6, 8192, %s65, %s56
      %s68 = smul.u32 128, 1
      %s69 = sshll.u32 %s68, 4
      %70 = dma.done [#allocation4], %s69
      %s71 = smul.u32 8, 16
      %s72 = smul.u32 %s71, 4
      %s73 = sshll.u32 %s72, 4
      %74 = dma.done %s56, %s73
      %v75 = vld [vmem:[%s2] sm:$0xff]
      %76 = vst [vmem:[#allocation5] sm:$0xff] %v75
      %v77 = vld [vmem:[%s3] sm:$0xff]
      %78 = vst [vmem:[#allocation6] sm:$0xff] %v77
    $region29: #{tpu_custom_call.1} parent=1 // pred_fallthru
      _
    %v79 = vld [vmem:[#allocation5] sm:$0xff]
    %v80 = vld [vmem:[#allocation6] sm:$0xff]
    %v81 = vld [vmem:[#allocation2] sm:$0xff]
    %v82 = vld [vmem:[#allocation2 + $0x8] sm:$0xff]
    %v83 = vld [vmem:[#allocation2 + $0x10] sm:$0xff]
    %v84 = vld [vmem:[#allocation2 + $0x18] sm:$0xff]
    %v85 = vld [vmem:[#allocation2 + $0x20] sm:$0xff]
    %v86 = vld [vmem:[#allocation2 + $0x28] sm:$0xff]
    %v87 = vld [vmem:[#allocation2 + $0x30] sm:$0xff]
    %v88 = vld [vmem:[#allocation2 + $0x38] sm:$0xff]
    %v89 = vld [vmem:[#allocation2 + $0x40] sm:$0xff]
    %v90 = vld [vmem:[#allocation2 + $0x48] sm:$0xff]
    %v91 = vld [vmem:[#allocation2 + $0x50] sm:$0xff]
    %v92 = vld [vmem:[#allocation2 + $0x58] sm:$0xff]
    %v93 = vld [vmem:[#allocation2 + $0x60] sm:$0xff]
    %v94 = vld [vmem:[#allocation2 + $0x68] sm:$0xff]
    %v95 = vld [vmem:[#allocation2 + $0x70] sm:$0xff]
    %v96 = vld [vmem:[#allocation2 + $0x78] sm:$0xff]
    %v97 = vld [vmem:[#allocation3] sm:$0xff]
    %v98 = vld [vmem:[#allocation3 + $0x8] sm:$0xff]
    %v99 = vld [vmem:[#allocation3 + $0x10] sm:$0xff]
    %v100 = vld [vmem:[#allocation3 + $0x18] sm:$0xff]
    %v101 = vld [vmem:[#allocation3 + $0x20] sm:$0xff]
    %v102 = vld [vmem:[#allocation3 + $0x28] sm:$0xff]
    %v103 = vld [vmem:[#allocation3 + $0x30] sm:$0xff]
    %v104 = vld [vmem:[#allocation3 + $0x38] sm:$0xff]
    %v105 = vld [vmem:[#allocation3 + $0x40] sm:$0xff]
    %v106 = vld [vmem:[#allocation3 + $0x48] sm:$0xff]
    %v107 = vld [vmem:[#allocation3 + $0x50] sm:$0xff]
    %v108 = vld [vmem:[#allocation3 + $0x58] sm:$0xff]
    %v109 = vld [vmem:[#allocation3 + $0x60] sm:$0xff]
    %v110 = vld [vmem:[#allocation3 + $0x68] sm:$0xff]
    %v111 = vld [vmem:[#allocation3 + $0x70] sm:$0xff]
    %v112 = vld [vmem:[#allocation3 + $0x78] sm:$0xff]
    %v113 = vld [vmem:[#allocation3 + $0x80] sm:$0xff]
    %v114 = vld [vmem:[#allocation3 + $0x88] sm:$0xff]
    %v115 = vld [vmem:[#allocation3 + $0x90] sm:$0xff]
    %v116 = vld [vmem:[#allocation3 + $0x98] sm:$0xff]
    %v117 = vld [vmem:[#allocation3 + $0xa0] sm:$0xff]
    %v118 = vld [vmem:[#allocation3 + $0xa8] sm:$0xff]
    %v119 = vld [vmem:[#allocation3 + $0xb0] sm:$0xff]
    %v120 = vld [vmem:[#allocation3 + $0xb8] sm:$0xff]
    %v121 = vld [vmem:[#allocation3 + $0xc0] sm:$0xff]
    %v122 = vld [vmem:[#allocation3 + $0xc8] sm:$0xff]
    %v123 = vld [vmem:[#allocation3 + $0xd0] sm:$0xff]
    %v124 = vld [vmem:[#allocation3 + $0xd8] sm:$0xff]
    %v125 = vld [vmem:[#allocation3 + $0xe0] sm:$0xff]
    %v126 = vld [vmem:[#allocation3 + $0xe8] sm:$0xff]
    %v127 = vld [vmem:[#allocation3 + $0xf0] sm:$0xff]
    %v128 = vld [vmem:[#allocation3 + $0xf8] sm:$0xff]
    %v129 = vld [vmem:[#allocation3 + $0x100] sm:$0xff]
    %v130 = vld [vmem:[#allocation3 + $0x108] sm:$0xff]
    %v131 = vld [vmem:[#allocation3 + $0x110] sm:$0xff]
    %v132 = vld [vmem:[#allocation3 + $0x118] sm:$0xff]
    %v133 = vld [vmem:[#allocation3 + $0x120] sm:$0xff]
    %v134 = vld [vmem:[#allocation3 + $0x128] sm:$0xff]
    %v135 = vld [vmem:[#allocation3 + $0x130] sm:$0xff]
    %v136 = vld [vmem:[#allocation3 + $0x138] sm:$0xff]
    %v137 = vld [vmem:[#allocation3 + $0x140] sm:$0xff]
    %v138 = vld [vmem:[#allocation3 + $0x148] sm:$0xff]
    %v139 = vld [vmem:[#allocation3 + $0x150] sm:$0xff]
    %v140 = vld [vmem:[#allocation3 + $0x158] sm:$0xff]
    %v141 = vld [vmem:[#allocation3 + $0x160] sm:$0xff]
    %v142 = vld [vmem:[#allocation3 + $0x168] sm:$0xff]
    %v143 = vld [vmem:[#allocation3 + $0x170] sm:$0xff]
    %v144 = vld [vmem:[#allocation3 + $0x178] sm:$0xff]
    %v145 = vld [vmem:[#allocation3 + $0x180] sm:$0xff]
    %v146 = vld [vmem:[#allocation3 + $0x188] sm:$0xff]
    %v147 = vld [vmem:[#allocation3 + $0x190] sm:$0xff]
    %v148 = vld [vmem:[#allocation3 + $0x198] sm:$0xff]
    %v149 = vld [vmem:[#allocation3 + $0x1a0] sm:$0xff]
    %v150 = vld [vmem:[#allocation3 + $0x1a8] sm:$0xff]
    %v151 = vld [vmem:[#allocation3 + $0x1b0] sm:$0xff]
    %v152 = vld [vmem:[#allocation3 + $0x1b8] sm:$0xff]
    %v153 = vld [vmem:[#allocation3 + $0x1c0] sm:$0xff]
    %v154 = vld [vmem:[#allocation3 + $0x1c8] sm:$0xff]
    %v155 = vld [vmem:[#allocation3 + $0x1d0] sm:$0xff]
    %v156 = vld [vmem:[#allocation3 + $0x1d8] sm:$0xff]
    %v157 = vld [vmem:[#allocation3 + $0x1e0] sm:$0xff]
    %v158 = vld [vmem:[#allocation3 + $0x1e8] sm:$0xff]
    %v159 = vld [vmem:[#allocation3 + $0x1f0] sm:$0xff]
    %v160 = vld [vmem:[#allocation3 + $0x1f8] sm:$0xff]
    %v161 = vld [vmem:[#allocation7] sm:$0xff]
    %v162 = vld [vmem:[#allocation7 + $0x8] sm:$0xff]
    %v163 = vld [vmem:[#allocation7 + $0x10] sm:$0xff]
    %v164 = vld [vmem:[#allocation7 + $0x18] sm:$0xff]
    %v165 = vld [vmem:[#allocation7 + $0x20] sm:$0xff]
    %v166 = vld [vmem:[#allocation7 + $0x28] sm:$0xff]
    %v167 = vld [vmem:[#allocation7 + $0x30] sm:$0xff]
    %v168 = vld [vmem:[#allocation7 + $0x38] sm:$0xff]
    %v169 = vld [vmem:[#allocation7 + $0x40] sm:$0xff]
    %v170 = vld [vmem:[#allocation7 + $0x48] sm:$0xff]
    %v171 = vld [vmem:[#allocation7 + $0x50] sm:$0xff]
    %v172 = vld [vmem:[#allocation7 + $0x58] sm:$0xff]
    %v173 = vld [vmem:[#allocation7 + $0x60] sm:$0xff]
    %v174 = vld [vmem:[#allocation7 + $0x68] sm:$0xff]
    %v175 = vld [vmem:[#allocation7 + $0x70] sm:$0xff]
    %v176 = vld [vmem:[%s0] sm:$0x1]
    %v177 = vld [vmem:[%s0 + $0x8] sm:$0x1]
    %v178 = vld [vmem:[%s0 + $0x10] sm:$0x1]
    %v179 = vld [vmem:[%s0 + $0x18] sm:$0x1]
    %v180 = vld [vmem:[%s0 + $0x20] sm:$0x1]
    %v181 = vld [vmem:[%s0 + $0x28] sm:$0x1]
    %v182 = vld [vmem:[%s0 + $0x30] sm:$0x1]
    %v183 = vld [vmem:[%s0 + $0x38] sm:$0x1]
    %v192 = vrot.slane %v177, 7
    %vm193 = vcmask 1041409
    %v194 = vsel %vm193, %v192, %v176
    %v195 = vrot.slane %v178, 6
    %vm196 = vcmask 1042434
    %v197 = vsel %vm196, %v195, %v194
    %v198 = vrot.slane %v179, 5
    %vm199 = vcmask 1043459
    %v200 = vsel %vm199, %v198, %v197
    %v201 = vrot.slane %v180, 4
    %vm202 = vcmask 1044484
    %v203 = vsel %vm202, %v201, %v200
    %v204 = vrot.slane %v181, 3
    %vm205 = vcmask 1045509
    %v206 = vsel %vm205, %v204, %v203
    %v207 = vrot.slane %v182, 2
    %vm208 = vcmask 1046534
    %v209 = vsel %vm208, %v207, %v206
    %v210 = vrot.slane %v183, 1
    %vm211 = vcmask 1047559
    %v212 = vsel %vm211, %v210, %v209
    %vm213 = vcmask 195584
    %v214 = vsel %vm213, %v212, 0
    %216 = vmatprep.subr.mxu0 %v162
    %217 = vmatpush1.msra.mxu0 %v161
    %218 = vmatprep.subr.mxu0 %v167
    %219 = vmatpush1.msra.mxu0 %v166
    %220 = vmatprep.subr.mxu0 %v172
    %221 = vmatpush1.msra.mxu0 %v171
    %222 = vmatprep.subr.mxu0 0.0
    %223 = vmatpush1.msra.mxu0 0.0
    %224 = vmatprep.subr.mxu0 0.0
    %225 = vmatpush1.msra.mxu0 0.0
    %226 = vmatprep.subr.mxu0 0.0
    %227 = vmatpush1.msra.mxu0 0.0
    %228 = vmatprep.subr.mxu0 0.0
    %229 = vmatpush1.msra.mxu0 0.0
    %230 = vmatprep.subr.mxu0 0.0
    %231 = vmatpush1.msra.mxu0 0.0
    %232 = vmatprep.subr.mxu0 0.0
    %233 = vmatpush1.msra.mxu0 0.0
    %234 = vmatprep.subr.mxu0 0.0
    %235 = vmatpush1.msra.mxu0 0.0
    %236 = vmatprep.subr.mxu0 0.0
    %237 = vmatpush1.msra.mxu0 0.0
    %238 = vmatprep.subr.mxu0 0.0
    %239 = vmatpush1.msra.mxu0 0.0
    %240 = vmatprep.subr.mxu0 0.0
    %241 = vmatpush1.msra.mxu0 0.0
    %242 = vmatprep.subr.mxu0 0.0
    %243 = vmatpush1.msra.mxu0 0.0
    %244 = vmatprep.subr.mxu0 0.0
    %245 = vmatpush1.msra.mxu0 0.0
    %246 = vmatprep.subr.mxu0 0.0
    %247 = vmatpush1.msra.mxu0 0.0
    %248 = vmatprep.subr.mxu0 0.0
    %249 = vmatpush1.msra.mxu0 0.0
    %250 = vmatprep.subr.mxu0 0.0
    %251 = vmatpush1.msra.mxu0 0.0
    %252 = vmatprep.subr.mxu0 0.0
    %253 = vmatpush1.msra.mxu0 0.0
    %254 = vmatprep.subr.mxu0 0.0
    %255 = vmatpush1.msra.mxu0 0.0
    %256 = vmatprep.subr.mxu0 0.0
    %257 = vmatpush1.msra.mxu0 0.0
    %258 = vmatprep.subr.mxu0 0.0
    %259 = vmatpush1.msra.mxu0 0.0
    %260 = vmatprep.subr.mxu0 0.0
    %261 = vmatpush1.msra.mxu0 0.0
    %262 = vmatprep.subr.mxu0 0.0
    %263 = vmatpush1.msra.mxu0 0.0
    %264 = vmatprep.subr.mxu0 0.0
    %265 = vmatpush1.msra.mxu0 0.0
    %266 = vmatprep.subr.mxu0 0.0
    %267 = vmatpush1.msra.mxu0 0.0
    %268 = vmatprep.subr.mxu0 0.0
    %269 = vmatpush1.msra.mxu0 0.0
    %270 = vmatprep.subr.mxu0 0.0
    %271 = vmatpush1.msra.mxu0 0.0
    %272 = vmatprep.subr.mxu0 0.0
    %273 = vmatpush1.msra.mxu0 0.0
    %274 = vmatprep.subr.mxu0 0.0
    %275 = vmatpush1.msra.mxu0 0.0
    %276 = vmatprep.subr.mxu0 0.0
    %277 = vmatpush1.msra.mxu0 0.0
    %278 = vmatprep.subr.mxu0 0.0
    %279 = vmatpush1.msra.mxu0 0.0
    %280 = vmatprep.mubr.f32.mxu0 0.0
    %281 = vmatmul.mubr.f32.gmra.mrb[0].mxu0 %v214
    %v282 = vpop.f32.mrb[0].mxu0
    %v283 = vadd.f32 0.0, %v282
    %v284 = vpop.f32.mrb[0].mxu0
    %v285 = vadd.f32 0.0, %v284
    %286 = vdwg.mxu0
    %287 = vmatprep.subr.mxu0 %v164
    %288 = vmatpush1.msra.mxu0 %v163
    %289 = vmatprep.subr.mxu0 %v169
    %290 = vmatpush1.msra.mxu0 %v168
    %291 = vmatprep.subr.mxu0 %v174
    %292 = vmatpush1.msra.mxu0 %v173
    %293 = vmatprep.subr.mxu0 0.0
    %294 = vmatpush1.msra.mxu0 0.0
    %295 = vmatprep.subr.mxu0 0.0
    %296 = vmatpush1.msra.mxu0 0.0
    %297 = vmatprep.subr.mxu0 0.0
    %298 = vmatpush1.msra.mxu0 0.0
    %299 = vmatprep.subr.mxu0 0.0
    %300 = vmatpush1.msra.mxu0 0.0
    %301 = vmatprep.subr.mxu0 0.0
    %302 = vmatpush1.msra.mxu0 0.0
    %303 = vmatprep.subr.mxu0 0.0
    %304 = vmatpush1.msra.mxu0 0.0
    %305 = vmatprep.subr.mxu0 0.0
    %306 = vmatpush1.msra.mxu0 0.0
    %307 = vmatprep.subr.mxu0 0.0
    %308 = vmatpush1.msra.mxu0 0.0
    %309 = vmatprep.subr.mxu0 0.0
    %310 = vmatpush1.msra.mxu0 0.0
    %311 = vmatprep.subr.mxu0 0.0
    %312 = vmatpush1.msra.mxu0 0.0
    %313 = vmatprep.subr.mxu0 0.0
    %314 = vmatpush1.msra.mxu0 0.0
    %315 = vmatprep.subr.mxu0 0.0
    %316 = vmatpush1.msra.mxu0 0.0
    %317 = vmatprep.subr.mxu0 0.0
    %318 = vmatpush1.msra.mxu0 0.0
    %319 = vmatprep.subr.mxu0 0.0
    %320 = vmatpush1.msra.mxu0 0.0
    %321 = vmatprep.subr.mxu0 0.0
    %322 = vmatpush1.msra.mxu0 0.0
    %323 = vmatprep.subr.mxu0 0.0
    %324 = vmatpush1.msra.mxu0 0.0
    %325 = vmatprep.subr.mxu0 0.0
    %326 = vmatpush1.msra.mxu0 0.0
    %327 = vmatprep.subr.mxu0 0.0
    %328 = vmatpush1.msra.mxu0 0.0
    %329 = vmatprep.subr.mxu0 0.0
    %330 = vmatpush1.msra.mxu0 0.0
    %331 = vmatprep.subr.mxu0 0.0
    %332 = vmatpush1.msra.mxu0 0.0
    %333 = vmatprep.subr.mxu0 0.0
    %334 = vmatpush1.msra.mxu0 0.0
    %335 = vmatprep.subr.mxu0 0.0
    %336 = vmatpush1.msra.mxu0 0.0
    %337 = vmatprep.subr.mxu0 0.0
    %338 = vmatpush1.msra.mxu0 0.0
    %339 = vmatprep.subr.mxu0 0.0
    %340 = vmatpush1.msra.mxu0 0.0
    %341 = vmatprep.subr.mxu0 0.0
    %342 = vmatpush1.msra.mxu0 0.0
    %343 = vmatprep.subr.mxu0 0.0
    %344 = vmatpush1.msra.mxu0 0.0
    %345 = vmatprep.subr.mxu0 0.0
    %346 = vmatpush1.msra.mxu0 0.0
    %347 = vmatprep.subr.mxu0 0.0
    %348 = vmatpush1.msra.mxu0 0.0
    %349 = vmatprep.subr.mxu0 0.0
    %350 = vmatpush1.msra.mxu0 0.0
    %351 = vmatprep.mubr.f32.mxu0 0.0
    %352 = vmatmul.mubr.f32.gmra.mrb[0].mxu0 %v214
    %v353 = vpop.f32.mrb[0].mxu0
    %v354 = vadd.f32 0.0, %v353
    %v355 = vpop.f32.mrb[0].mxu0
    %v356 = vadd.f32 0.0, %v355
    %357 = vdwg.mxu0
    %358 = vmatprep.subr.mxu0 0.0
    %359 = vmatpush1.msra.mxu0 %v165
    %360 = vmatprep.subr.mxu0 0.0
    %361 = vmatpush1.msra.mxu0 %v170
    %362 = vmatprep.subr.mxu0 0.0
    %363 = vmatpush1.msra.mxu0 %v175
    %364 = vmatprep.subr.mxu0 0.0
    %365 = vmatpush1.msra.mxu0 0.0
    %366 = vmatprep.subr.mxu0 0.0
    %367 = vmatpush1.msra.mxu0 0.0
    %368 = vmatprep.subr.mxu0 0.0
    %369 = vmatpush1.msra.mxu0 0.0
    %370 = vmatprep.subr.mxu0 0.0
    %371 = vmatpush1.msra.mxu0 0.0
    %372 = vmatprep.subr.mxu0 0.0
    %373 = vmatpush1.msra.mxu0 0.0
    %374 = vmatprep.subr.mxu0 0.0
    %375 = vmatpush1.msra.mxu0 0.0
    %376 = vmatprep.subr.mxu0 0.0
    %377 = vmatpush1.msra.mxu0 0.0
    %378 = vmatprep.subr.mxu0 0.0
    %379 = vmatpush1.msra.mxu0 0.0
    %380 = vmatprep.subr.mxu0 0.0
    %381 = vmatpush1.msra.mxu0 0.0
    %382 = vmatprep.subr.mxu0 0.0
    %383 = vmatpush1.msra.mxu0 0.0
    %384 = vmatprep.subr.mxu0 0.0
    %385 = vmatpush1.msra.mxu0 0.0
    %386 = vmatprep.subr.mxu0 0.0
    %387 = vmatpush1.msra.mxu0 0.0
    %388 = vmatprep.subr.mxu0 0.0
    %389 = vmatpush1.msra.mxu0 0.0
    %390 = vmatprep.subr.mxu0 0.0
    %391 = vmatpush1.msra.mxu0 0.0
    %392 = vmatprep.subr.mxu0 0.0
    %393 = vmatpush1.msra.mxu0 0.0
    %394 = vmatprep.subr.mxu0 0.0
    %395 = vmatpush1.msra.mxu0 0.0
    %396 = vmatprep.subr.mxu0 0.0
    %397 = vmatpush1.msra.mxu0 0.0
    %398 = vmatprep.subr.mxu0 0.0
    %399 = vmatpush1.msra.mxu0 0.0
    %400 = vmatprep.subr.mxu0 0.0
    %401 = vmatpush1.msra.mxu0 0.0
    %402 = vmatprep.subr.mxu0 0.0
    %403 = vmatpush1.msra.mxu0 0.0
    %404 = vmatprep.subr.mxu0 0.0
    %405 = vmatpush1.msra.mxu0 0.0
    %406 = vmatprep.subr.mxu0 0.0
    %407 = vmatpush1.msra.mxu0 0.0
    %408 = vmatprep.subr.mxu0 0.0
    %409 = vmatpush1.msra.mxu0 0.0
    %410 = vmatprep.subr.mxu0 0.0
    %411 = vmatpush1.msra.mxu0 0.0
    %412 = vmatprep.subr.mxu0 0.0
    %413 = vmatpush1.msra.mxu0 0.0
    %414 = vmatprep.subr.mxu0 0.0
    %415 = vmatpush1.msra.mxu0 0.0
    %416 = vmatprep.subr.mxu0 0.0
    %417 = vmatpush1.msra.mxu0 0.0
    %418 = vmatprep.subr.mxu0 0.0
    %419 = vmatpush1.msra.mxu0 0.0
    %420 = vmatprep.subr.mxu0 0.0
    %421 = vmatpush1.msra.mxu0 0.0
    %422 = vmatprep.mubr.f32.mxu0 0.0
    %423 = vmatmul.mubr.f32.gmra.mrb[0].mxu0 %v214
    %v424 = vpop.f32.mrb[0].mxu0
    %v425 = vadd.f32 0.0, %v424
    %v426 = vpop.f32.mrb[0].mxu0
    %427 = vdwg.mxu0
    %428 = vmatprep.subr.mxu0 0.0
    %429 = vmatpush1.msra.mxu0 %v81
    %430 = vmatprep.subr.mxu0 0.0
    %431 = vmatpush1.msra.mxu0 %v82
    %432 = vmatprep.subr.mxu0 0.0
    %433 = vmatpush1.msra.mxu0 %v83
    %434 = vmatprep.subr.mxu0 0.0
    %435 = vmatpush1.msra.mxu0 %v84
    %436 = vmatprep.subr.mxu0 0.0
    %437 = vmatpush1.msra.mxu0 %v85
    %438 = vmatprep.subr.mxu0 0.0
    %439 = vmatpush1.msra.mxu0 %v86
    %440 = vmatprep.subr.mxu0 0.0
    %441 = vmatpush1.msra.mxu0 %v87
    %442 = vmatprep.subr.mxu0 0.0
    %443 = vmatpush1.msra.mxu0 %v88
    %444 = vmatprep.subr.mxu0 0.0
    %445 = vmatpush1.msra.mxu0 %v89
    %446 = vmatprep.subr.mxu0 0.0
    %447 = vmatpush1.msra.mxu0 %v90
    %448 = vmatprep.subr.mxu0 0.0
    %449 = vmatpush1.msra.mxu0 %v91
    %450 = vmatprep.subr.mxu0 0.0
    %451 = vmatpush1.msra.mxu0 %v92
    %452 = vmatprep.subr.mxu0 0.0
    %453 = vmatpush1.msra.mxu0 %v93
    %454 = vmatprep.subr.mxu0 0.0
    %455 = vmatpush1.msra.mxu0 %v94
    %456 = vmatprep.subr.mxu0 0.0
    %457 = vmatpush1.msra.mxu0 %v95
    %458 = vmatprep.subr.mxu0 0.0
    %459 = vmatpush1.msra.mxu0 %v96
    %460 = vmatprep.subr.mxu0 0.0
    %461 = vmatpush1.msra.mxu0 0.0
    %462 = vmatprep.subr.mxu0 0.0
    %463 = vmatpush1.msra.mxu0 0.0
    %464 = vmatprep.subr.mxu0 0.0
    %465 = vmatpush1.msra.mxu0 0.0
    %466 = vmatprep.subr.mxu0 0.0
    %467 = vmatpush1.msra.mxu0 0.0
    %468 = vmatprep.subr.mxu0 0.0
    %469 = vmatpush1.msra.mxu0 0.0
    %470 = vmatprep.subr.mxu0 0.0
    %471 = vmatpush1.msra.mxu0 0.0
    %472 = vmatprep.subr.mxu0 0.0
    %473 = vmatpush1.msra.mxu0 0.0
    %474 = vmatprep.subr.mxu0 0.0
    %475 = vmatpush1.msra.mxu0 0.0
    %476 = vmatprep.subr.mxu0 0.0
    %477 = vmatpush1.msra.mxu0 0.0
    %478 = vmatprep.subr.mxu0 0.0
    %479 = vmatpush1.msra.mxu0 0.0
    %480 = vmatprep.subr.mxu0 0.0
    %481 = vmatpush1.msra.mxu0 0.0
    %482 = vmatprep.subr.mxu0 0.0
    %483 = vmatpush1.msra.mxu0 0.0
    %484 = vmatprep.subr.mxu0 0.0
    %485 = vmatpush1.msra.mxu0 0.0
    %486 = vmatprep.subr.mxu0 0.0
    %487 = vmatpush1.msra.mxu0 0.0
    %488 = vmatprep.subr.mxu0 0.0
    %489 = vmatpush1.msra.mxu0 0.0
    %490 = vmatprep.subr.mxu0 0.0
    %491 = vmatpush1.msra.mxu0 0.0
    %492 = vmatprep.mubr.f32.mxu0 0.0
    %493 = vmatmul.mubr.f32.gmra.mrb[0].mxu0 %v79
    %v494 = vpop.f32.mrb[0].mxu0
    %v495 = vadd.f32 0.0, %v494
    %v496 = vpop.f32.mrb[0].mxu0
    %497 = vdwg.mxu0
    %v498 = vmul.f32 %v283, %v495
    %499 = vmatprep.subr.mxu0 %v98
    %500 = vmatpush1.msra.mxu0 %v97
    %501 = vmatprep.subr.mxu0 %v102
    %502 = vmatpush1.msra.mxu0 %v101
    %503 = vmatprep.subr.mxu0 %v106
    %504 = vmatpush1.msra.mxu0 %v105
    %505 = vmatprep.subr.mxu0 %v110
    %506 = vmatpush1.msra.mxu0 %v109
    %507 = vmatprep.subr.mxu0 %v114
    %508 = vmatpush1.msra.mxu0 %v113
    %509 = vmatprep.subr.mxu0 %v118
    %510 = vmatpush1.msra.mxu0 %v117
    %511 = vmatprep.subr.mxu0 %v122
    %512 = vmatpush1.msra.mxu0 %v121
    %513 = vmatprep.subr.mxu0 %v126
    %514 = vmatpush1.msra.mxu0 %v125
    %515 = vmatprep.subr.mxu0 %v130
    %516 = vmatpush1.msra.mxu0 %v129
    %517 = vmatprep.subr.mxu0 %v134
    %518 = vmatpush1.msra.mxu0 %v133
    %519 = vmatprep.subr.mxu0 %v138
    %520 = vmatpush1.msra.mxu0 %v137
    %521 = vmatprep.subr.mxu0 %v142
    %522 = vmatpush1.msra.mxu0 %v141
    %523 = vmatprep.subr.mxu0 %v146
    %524 = vmatpush1.msra.mxu0 %v145
    %525 = vmatprep.subr.mxu0 %v150
    %526 = vmatpush1.msra.mxu0 %v149
    %527 = vmatprep.subr.mxu0 %v154
    %528 = vmatpush1.msra.mxu0 %v153
    %529 = vmatprep.subr.mxu0 %v158
    %530 = vmatpush1.msra.mxu0 %v157
    %531 = vmatprep.subr.mxu0 0.0
    %532 = vmatpush1.msra.mxu0 0.0
    %533 = vmatprep.subr.mxu0 0.0
    %534 = vmatpush1.msra.mxu0 0.0
    %535 = vmatprep.subr.mxu0 0.0
    %536 = vmatpush1.msra.mxu0 0.0
    %537 = vmatprep.subr.mxu0 0.0
    %538 = vmatpush1.msra.mxu0 0.0
    %539 = vmatprep.subr.mxu0 0.0
    %540 = vmatpush1.msra.mxu0 0.0
    %541 = vmatprep.subr.mxu0 0.0
    %542 = vmatpush1.msra.mxu0 0.0
    %543 = vmatprep.subr.mxu0 0.0
    %544 = vmatpush1.msra.mxu0 0.0
    %545 = vmatprep.subr.mxu0 0.0
    %546 = vmatpush1.msra.mxu0 0.0
    %547 = vmatprep.subr.mxu0 0.0
    %548 = vmatpush1.msra.mxu0 0.0
    %549 = vmatprep.subr.mxu0 0.0
    %550 = vmatpush1.msra.mxu0 0.0
    %551 = vmatprep.subr.mxu0 0.0
    %552 = vmatpush1.msra.mxu0 0.0
    %553 = vmatprep.subr.mxu0 0.0
    %554 = vmatpush1.msra.mxu0 0.0
    %555 = vmatprep.subr.mxu0 0.0
    %556 = vmatpush1.msra.mxu0 0.0
    %557 = vmatprep.subr.mxu0 0.0
    %558 = vmatpush1.msra.mxu0 0.0
    %559 = vmatprep.subr.mxu0 0.0
    %560 = vmatpush1.msra.mxu0 0.0
    %561 = vmatprep.subr.mxu0 0.0
    %562 = vmatpush1.msra.mxu0 0.0
    %563 = vmatprep.mubr.f32.mxu0 0.0
    %564 = vmatmul.mubr.f32.gmra.mrb[0].mxu0 %v498
    %v565 = vpop.f32.mrb[0].mxu0
    %v566 = vadd.f32 0.0, %v565
    %v567 = vpop.f32.mrb[0].mxu0
    %v568 = vadd.f32 0.0, %v567
    %569 = vdwg.mxu0
    %570 = vmatprep.subr.mxu0 %v100
    %571 = vmatpush1.msra.mxu0 %v99
    %572 = vmatprep.subr.mxu0 %v104
    %573 = vmatpush1.msra.mxu0 %v103
    %574 = vmatprep.subr.mxu0 %v108
    %575 = vmatpush1.msra.mxu0 %v107
    %576 = vmatprep.subr.mxu0 %v112
    %577 = vmatpush1.msra.mxu0 %v111
    %578 = vmatprep.subr.mxu0 %v116
    %579 = vmatpush1.msra.mxu0 %v115
    %580 = vmatprep.subr.mxu0 %v120
    %581 = vmatpush1.msra.mxu0 %v119
    %582 = vmatprep.subr.mxu0 %v124
    %583 = vmatpush1.msra.mxu0 %v123
    %584 = vmatprep.subr.mxu0 %v128
    %585 = vmatpush1.msra.mxu0 %v127
    %586 = vmatprep.subr.mxu0 %v132
    %587 = vmatpush1.msra.mxu0 %v131
    %588 = vmatprep.subr.mxu0 %v136
    %589 = vmatpush1.msra.mxu0 %v135
    %590 = vmatprep.subr.mxu0 %v140
    %591 = vmatpush1.msra.mxu0 %v139
    %592 = vmatprep.subr.mxu0 %v144
    %593 = vmatpush1.msra.mxu0 %v143
    %594 = vmatprep.subr.mxu0 %v148
    %595 = vmatpush1.msra.mxu0 %v147
    %596 = vmatprep.subr.mxu0 %v152
    %597 = vmatpush1.msra.mxu0 %v151
    %598 = vmatprep.subr.mxu0 %v156
    %599 = vmatpush1.msra.mxu0 %v155
    %600 = vmatprep.subr.mxu0 %v160
    %601 = vmatpush1.msra.mxu0 %v159
    %602 = vmatprep.subr.mxu0 0.0
    %603 = vmatpush1.msra.mxu0 0.0
    %604 = vmatprep.subr.mxu0 0.0
    %605 = vmatpush1.msra.mxu0 0.0
    %606 = vmatprep.subr.mxu0 0.0
    %607 = vmatpush1.msra.mxu0 0.0
    %608 = vmatprep.subr.mxu0 0.0
    %609 = vmatpush1.msra.mxu0 0.0
    %610 = vmatprep.subr.mxu0 0.0
    %611 = vmatpush1.msra.mxu0 0.0
    %612 = vmatprep.subr.mxu0 0.0
    %613 = vmatpush1.msra.mxu0 0.0
    %614 = vmatprep.subr.mxu0 0.0
    %615 = vmatpush1.msra.mxu0 0.0
    %616 = vmatprep.subr.mxu0 0.0
    %617 = vmatpush1.msra.mxu0 0.0
    %618 = vmatprep.subr.mxu0 0.0
    %619 = vmatpush1.msra.mxu0 0.0
    %620 = vmatprep.subr.mxu0 0.0
    %621 = vmatpush1.msra.mxu0 0.0
    %622 = vmatprep.subr.mxu0 0.0
    %623 = vmatpush1.msra.mxu0 0.0
    %624 = vmatprep.subr.mxu0 0.0
    %625 = vmatpush1.msra.mxu0 0.0
    %626 = vmatprep.subr.mxu0 0.0
    %627 = vmatpush1.msra.mxu0 0.0
    %628 = vmatprep.subr.mxu0 0.0
    %629 = vmatpush1.msra.mxu0 0.0
    %630 = vmatprep.subr.mxu0 0.0
    %631 = vmatpush1.msra.mxu0 0.0
    %632 = vmatprep.subr.mxu0 0.0
    %633 = vmatpush1.msra.mxu0 0.0
    %634 = vmatprep.mubr.f32.mxu0 0.0
    %635 = vmatmul.mubr.f32.gmra.mrb[0].mxu0 %v498
    %v636 = vpop.f32.mrb[0].mxu0
    %v637 = vadd.f32 0.0, %v636
    %v638 = vpop.f32.mrb[0].mxu0
    %v639 = vadd.f32 0.0, %v638
    %640 = vdwg.mxu0
    %v641 = vadd.f32 %v285, %v566
    %v642 = vadd.f32 %v354, %v568
    %v643 = vadd.f32 %v356, %v637
    %v644 = vadd.f32 %v425, %v639
    %v645 = vxor.u32 %v641, 2147483648
    %v646 = vmul.f32 %v645, 1.442695
    %v647 = vpow.pop %v646
    %v648 = vadd.f32 %v647, 1.0
    %v649 = vrcp.pop %v648
    %v650 = vmul.f32 1.0, %v649
    %v651 = vxor.u32 %v642, 2147483648
    %v652 = vmul.f32 %v651, 1.442695
    %v653 = vpow.pop %v652
    %v654 = vadd.f32 %v653, 1.0
    %v655 = vrcp.pop %v654
    %v656 = vmul.f32 1.0, %v655
    %v657 = vxor.u32 %v643, 2147483648
    %v658 = vmul.f32 %v657, 1.442695
    %v659 = vpow.pop %v658
    %v660 = vadd.f32 %v659, 1.0
    %v661 = vrcp.pop %v660
    %v662 = vmul.f32 1.0, %v661
    %v663 = vtanh.pop %v644
    %v664 = vmul.f32 %v656, %v80
    %v665 = vmul.f32 %v650, %v663
    %v666 = vadd.f32 %v664, %v665
    %v667 = vtanh.pop %v666
    %v668 = vmul.f32 %v662, %v667
    %v669 = vld [vmem:[%s1] sm:$0x1]
    %v670 = vld [vmem:[%s1 + $0x8] sm:$0x1]
    %v671 = vld [vmem:[%s1 + $0x10] sm:$0x1]
    %v672 = vld [vmem:[%s1 + $0x18] sm:$0x1]
    %v673 = vld [vmem:[%s1 + $0x20] sm:$0x1]
    %v674 = vld [vmem:[%s1 + $0x28] sm:$0x1]
    %v675 = vld [vmem:[%s1 + $0x30] sm:$0x1]
    %v676 = vld [vmem:[%s1 + $0x38] sm:$0x1]
    %v677 = vsub.f32 %v668, %v79
    %679 = vset.pattern.permute.xlu0 0
    %680 = vperm.xlu0 %679, %v669
    %v681 = vpop.permute.xlu0 %680
    %684 = vset.pattern.permute.xlu0 0
    %685 = vperm.xlu0 %684, %v670
    %v686 = vpop.permute.xlu0 %685
    %689 = vset.pattern.permute.xlu0 0
    %690 = vperm.xlu0 %689, %v671
    %v691 = vpop.permute.xlu0 %690
    %694 = vset.pattern.permute.xlu0 0
    %695 = vperm.xlu0 %694, %v672
    %v696 = vpop.permute.xlu0 %695
    %699 = vset.pattern.permute.xlu0 0
    %700 = vperm.xlu0 %699, %v673
    %v701 = vpop.permute.xlu0 %700
    %704 = vset.pattern.permute.xlu0 0
    %705 = vperm.xlu0 %704, %v674
    %v706 = vpop.permute.xlu0 %705
    %709 = vset.pattern.permute.xlu0 0
    %710 = vperm.xlu0 %709, %v675
    %v711 = vpop.permute.xlu0 %710
    %714 = vset.pattern.permute.xlu0 0
    %715 = vperm.xlu0 %714, %v676
    %v716 = vpop.permute.xlu0 %715
    %v719 = vrot.slane %v677, 1
    %v720 = vrot.slane %v677, 2
    %v721 = vrot.slane %v677, 3
    %v722 = vrot.slane %v677, 4
    %v723 = vrot.slane %v677, 5
    %v724 = vrot.slane %v677, 6
    %v725 = vrot.slane %v677, 7
    %v734 = vmul.f32 %v681, %v677
    %v735 = vmul.f32 %v686, %v719
    %v736 = vmul.f32 %v691, %v720
    %v737 = vmul.f32 %v696, %v721
    %v738 = vmul.f32 %v701, %v722
    %v739 = vmul.f32 %v706, %v723
    %v740 = vmul.f32 %v711, %v724
    %v741 = vmul.f32 %v716, %v725
    %v750 = vrot.slane %v735, 7
    %v751 = vsel %vm193, %v750, %v734
    %v752 = vrot.slane %v736, 6
    %v753 = vsel %vm196, %v752, %v751
    %v754 = vrot.slane %v737, 5
    %v755 = vsel %vm199, %v754, %v753
    %v756 = vrot.slane %v738, 4
    %v757 = vsel %vm202, %v756, %v755
    %v758 = vrot.slane %v739, 3
    %v759 = vsel %vm205, %v758, %v757
    %v760 = vrot.slane %v740, 2
    %v761 = vsel %vm208, %v760, %v759
    %v762 = vrot.slane %v741, 1
    %v763 = vsel %vm211, %v762, %v761
    %v765 = vadd.f32 %v79, %v763
    %v766 = vsub.f32 %v666, %v80
    %v768 = vrot.slane %v766, 1
    %v769 = vrot.slane %v766, 2
    %v770 = vrot.slane %v766, 3
    %v771 = vrot.slane %v766, 4
    %v772 = vrot.slane %v766, 5
    %v773 = vrot.slane %v766, 6
    %v774 = vrot.slane %v766, 7
    %v783 = vmul.f32 %v681, %v766
    %v784 = vmul.f32 %v686, %v768
    %v785 = vmul.f32 %v691, %v769
    %v786 = vmul.f32 %v696, %v770
    %v787 = vmul.f32 %v701, %v771
    %v788 = vmul.f32 %v706, %v772
    %v789 = vmul.f32 %v711, %v773
    %v790 = vmul.f32 %v716, %v774
    %v799 = vrot.slane %v784, 7
    %v800 = vsel %vm193, %v799, %v783
    %v801 = vrot.slane %v785, 6
    %v802 = vsel %vm196, %v801, %v800
    %v803 = vrot.slane %v786, 5
    %v804 = vsel %vm199, %v803, %v802
    %v805 = vrot.slane %v787, 4
    %v806 = vsel %vm202, %v805, %v804
    %v807 = vrot.slane %v788, 3
    %v808 = vsel %vm205, %v807, %v806
    %v809 = vrot.slane %v789, 2
    %v810 = vsel %vm208, %v809, %v808
    %v811 = vrot.slane %v790, 1
    %v812 = vsel %vm211, %v811, %v810
    %v814 = vadd.f32 %v80, %v812
    %v816 = vcombine.high %v765, %v765
    %v818 = vunpack.c.l.s4 1966171168
    %v819 = vunpack.c.0.s8 %v818
    %v820 = vlaneseq
    %v821 = vshrl.u32 %v820, 7
    %v822 = vsub.s32 %v819, %v821
    %v823 = vrot.slane %v765, %v822
    %v825 = vunpack.c.l.s4 1966171168
    %v826 = vunpack.c.0.s8 %v825
    %v827 = vlaneseq
    %v828 = vshrl.u32 %v827, 7
    %v829 = vsub.s32 %v826, %v828
    %v830 = vrot.slane %v816, %v829
    %v831 = vcombine.high %v823, %v823
    %v832 = vcombine.high %v830, %v830
    %v834 = vunpack.c.l.s4 1966171168
    %v835 = vunpack.c.0.s8 %v834
    %v836 = vlaneseq
    %v837 = vshrl.u32 %v836, 7
    %v838 = vsub.s32 %v835, %v837
    %v839 = vrot.slane %v823, %v838
    %v841 = vunpack.c.l.s4 1966171168
    %v842 = vunpack.c.0.s8 %v841
    %v843 = vlaneseq
    %v844 = vshrl.u32 %v843, 7
    %v845 = vsub.s32 %v842, %v844
    %v846 = vrot.slane %v830, %v845
    %v848 = vunpack.c.l.s4 1966171168
    %v849 = vunpack.c.0.s8 %v848
    %v850 = vlaneseq
    %v851 = vshrl.u32 %v850, 7
    %v852 = vsub.s32 %v849, %v851
    %v853 = vrot.slane %v831, %v852
    %v855 = vunpack.c.l.s4 1966171168
    %v856 = vunpack.c.0.s8 %v855
    %v857 = vlaneseq
    %v858 = vshrl.u32 %v857, 7
    %v859 = vsub.s32 %v856, %v858
    %v860 = vrot.slane %v832, %v859
    %v861 = vcombine.high %v839, %v839
    %v862 = vcombine.high %v846, %v846
    %v863 = vcombine.high %v853, %v853
    %v864 = vcombine.high %v860, %v860
    %873 = vst [vmem:[#allocation10] sm:$0x1] %v839
    %874 = vst [vmem:[#allocation10 + $0x8] sm:$0x1] %v853
    %875 = vst [vmem:[#allocation10 + $0x10] sm:$0x1] %v861
    %876 = vst [vmem:[#allocation10 + $0x18] sm:$0x1] %v863
    %877 = vst [vmem:[#allocation10 + $0x20] sm:$0x1] %v846
    %878 = vst [vmem:[#allocation10 + $0x28] sm:$0x1] %v860
    %879 = vst [vmem:[#allocation10 + $0x30] sm:$0x1] %v862
    %880 = vst [vmem:[#allocation10 + $0x38] sm:$0x1] %v864
    %v881 = vld [vmem:[%s0 + $0x1] sm:$0x1]
    %v882 = vld [vmem:[%s0 + $0x9] sm:$0x1]
    %v883 = vld [vmem:[%s0 + $0x11] sm:$0x1]
    %v884 = vld [vmem:[%s0 + $0x19] sm:$0x1]
    %v885 = vld [vmem:[%s0 + $0x21] sm:$0x1]
    %v886 = vld [vmem:[%s0 + $0x29] sm:$0x1]
    %v887 = vld [vmem:[%s0 + $0x31] sm:$0x1]
    %v888 = vld [vmem:[%s0 + $0x39] sm:$0x1]
    %v897 = vrot.slane %v882, 7
    %v898 = vsel %vm193, %v897, %v881
    %v899 = vrot.slane %v883, 6
    %v900 = vsel %vm196, %v899, %v898
    %v901 = vrot.slane %v884, 5
    %v902 = vsel %vm199, %v901, %v900
    %v903 = vrot.slane %v885, 4
    %v904 = vsel %vm202, %v903, %v902
    %v905 = vrot.slane %v886, 3
    %v906 = vsel %vm205, %v905, %v904
    %v907 = vrot.slane %v887, 2
    %v908 = vsel %vm208, %v907, %v906
    %v909 = vrot.slane %v888, 1
    %v910 = vsel %vm211, %v909, %v908
    %v911 = vsel %vm213, %v910, 0
    %913 = vmatprep.subr.mxu0 %v162
    %914 = vmatpush1.msra.mxu0 %v161
    %915 = vmatprep.subr.mxu0 %v167
    %916 = vmatpush1.msra.mxu0 %v166
    %917 = vmatprep.subr.mxu0 %v172
    %918 = vmatpush1.msra.mxu0 %v171
    %919 = vmatprep.subr.mxu0 0.0
    %920 = vmatpush1.msra.mxu0 0.0
    %921 = vmatprep.subr.mxu0 0.0
    %922 = vmatpush1.msra.mxu0 0.0
    %923 = vmatprep.subr.mxu0 0.0
    %924 = vmatpush1.msra.mxu0 0.0
    %925 = vmatprep.subr.mxu0 0.0
    %926 = vmatpush1.msra.mxu0 0.0
    %927 = vmatprep.subr.mxu0 0.0
    %928 = vmatpush1.msra.mxu0 0.0
    %929 = vmatprep.subr.mxu0 0.0
    %930 = vmatpush1.msra.mxu0 0.0
    %931 = vmatprep.subr.mxu0 0.0
    %932 = vmatpush1.msra.mxu0 0.0
    %933 = vmatprep.subr.mxu0 0.0
    %934 = vmatpush1.msra.mxu0 0.0
    %935 = vmatprep.subr.mxu0 0.0
    %936 = vmatpush1.msra.mxu0 0.0
    %937 = vmatprep.subr.mxu0 0.0
    %938 = vmatpush1.msra.mxu0 0.0
    %939 = vmatprep.subr.mxu0 0.0
    %940 = vmatpush1.msra.mxu0 0.0
    %941 = vmatprep.subr.mxu0 0.0
    %942 = vmatpush1.msra.mxu0 0.0
    %943 = vmatprep.subr.mxu0 0.0
    %944 = vmatpush1.msra.mxu0 0.0
    %945 = vmatprep.subr.mxu0 0.0
    %946 = vmatpush1.msra.mxu0 0.0
    %947 = vmatprep.subr.mxu0 0.0
    %948 = vmatpush1.msra.mxu0 0.0
    %949 = vmatprep.subr.mxu0 0.0
    %950 = vmatpush1.msra.mxu0 0.0
    %951 = vmatprep.subr.mxu0 0.0
    %952 = vmatpush1.msra.mxu0 0.0
    %953 = vmatprep.subr.mxu0 0.0
    %954 = vmatpush1.msra.mxu0 0.0
    %955 = vmatprep.subr.mxu0 0.0
    %956 = vmatpush1.msra.mxu0 0.0
    %957 = vmatprep.subr.mxu0 0.0
    %958 = vmatpush1.msra.mxu0 0.0
    %959 = vmatprep.subr.mxu0 0.0
    %960 = vmatpush1.msra.mxu0 0.0
    %961 = vmatprep.subr.mxu0 0.0
    %962 = vmatpush1.msra.mxu0 0.0
    %963 = vmatprep.subr.mxu0 0.0
    %964 = vmatpush1.msra.mxu0 0.0
    %965 = vmatprep.subr.mxu0 0.0
    %966 = vmatpush1.msra.mxu0 0.0
    %967 = vmatprep.subr.mxu0 0.0
    %968 = vmatpush1.msra.mxu0 0.0
    %969 = vmatprep.subr.mxu0 0.0
    %970 = vmatpush1.msra.mxu0 0.0
    %971 = vmatprep.subr.mxu0 0.0
    %972 = vmatpush1.msra.mxu0 0.0
    %973 = vmatprep.subr.mxu0 0.0
    %974 = vmatpush1.msra.mxu0 0.0
    %975 = vmatprep.subr.mxu0 0.0
    %976 = vmatpush1.msra.mxu0 0.0
    %977 = vmatprep.mubr.f32.mxu0 0.0
    %978 = vmatmul.mubr.f32.gmra.mrb[0].mxu0 %v911
    %v979 = vpop.f32.mrb[0].mxu0
    %v980 = vadd.f32 0.0, %v979
    %v981 = vpop.f32.mrb[0].mxu0
    %v982 = vadd.f32 0.0, %v981
    %983 = vdwg.mxu0
    %984 = vmatprep.subr.mxu0 %v164
    %985 = vmatpush1.msra.mxu0 %v163
    %986 = vmatprep.subr.mxu0 %v169
    %987 = vmatpush1.msra.mxu0 %v168
    %988 = vmatprep.subr.mxu0 %v174
    %989 = vmatpush1.msra.mxu0 %v173
    %990 = vmatprep.subr.mxu0 0.0
    %991 = vmatpush1.msra.mxu0 0.0
    %992 = vmatprep.subr.mxu0 0.0
    %993 = vmatpush1.msra.mxu0 0.0
    %994 = vmatprep.subr.mxu0 0.0
    %995 = vmatpush1.msra.mxu0 0.0
    %996 = vmatprep.subr.mxu0 0.0
    %997 = vmatpush1.msra.mxu0 0.0
    %998 = vmatprep.subr.mxu0 0.0
    %999 = vmatpush1.msra.mxu0 0.0
    %1000 = vmatprep.subr.mxu0 0.0
    %1001 = vmatpush1.msra.mxu0 0.0
    %1002 = vmatprep.subr.mxu0 0.0
    %1003 = vmatpush1.msra.mxu0 0.0
    %1004 = vmatprep.subr.mxu0 0.0
    %1005 = vmatpush1.msra.mxu0 0.0
    %1006 = vmatprep.subr.mxu0 0.0
    %1007 = vmatpush1.msra.mxu0 0.0
    %1008 = vmatprep.subr.mxu0 0.0
    %1009 = vmatpush1.msra.mxu0 0.0
    %1010 = vmatprep.subr.mxu0 0.0
    %1011 = vmatpush1.msra.mxu0 0.0
    %1012 = vmatprep.subr.mxu0 0.0
    %1013 = vmatpush1.msra.mxu0 0.0
    %1014 = vmatprep.subr.mxu0 0.0
    %1015 = vmatpush1.msra.mxu0 0.0
    %1016 = vmatprep.subr.mxu0 0.0
    %1017 = vmatpush1.msra.mxu0 0.0
    %1018 = vmatprep.subr.mxu0 0.0
    %1019 = vmatpush1.msra.mxu0 0.0
    %1020 = vmatprep.subr.mxu0 0.0
    %1021 = vmatpush1.msra.mxu0 0.0
    %1022 = vmatprep.subr.mxu0 0.0
    %1023 = vmatpush1.msra.mxu0 0.0
    %1024 = vmatprep.subr.mxu0 0.0
    %1025 = vmatpush1.msra.mxu0 0.0
    %1026 = vmatprep.subr.mxu0 0.0
    %1027 = vmatpush1.msra.mxu0 0.0
    %1028 = vmatprep.subr.mxu0 0.0
    %1029 = vmatpush1.msra.mxu0 0.0
    %1030 = vmatprep.subr.mxu0 0.0
    %1031 = vmatpush1.msra.mxu0 0.0
    %1032 = vmatprep.subr.mxu0 0.0
    %1033 = vmatpush1.msra.mxu0 0.0
    %1034 = vmatprep.subr.mxu0 0.0
    %1035 = vmatpush1.msra.mxu0 0.0
    %1036 = vmatprep.subr.mxu0 0.0
    %1037 = vmatpush1.msra.mxu0 0.0
    %1038 = vmatprep.subr.mxu0 0.0
    %1039 = vmatpush1.msra.mxu0 0.0
    %1040 = vmatprep.subr.mxu0 0.0
    %1041 = vmatpush1.msra.mxu0 0.0
    %1042 = vmatprep.subr.mxu0 0.0
    %1043 = vmatpush1.msra.mxu0 0.0
    %1044 = vmatprep.subr.mxu0 0.0
    %1045 = vmatpush1.msra.mxu0 0.0
    %1046 = vmatprep.subr.mxu0 0.0
    %1047 = vmatpush1.msra.mxu0 0.0
    %1048 = vmatprep.mubr.f32.mxu0 0.0
    %1049 = vmatmul.mubr.f32.gmra.mrb[0].mxu0 %v911
    %v1050 = vpop.f32.mrb[0].mxu0
    %v1051 = vadd.f32 0.0, %v1050
    %v1052 = vpop.f32.mrb[0].mxu0
    %v1053 = vadd.f32 0.0, %v1052
    %1054 = vdwg.mxu0
    %1055 = vmatprep.subr.mxu0 0.0
    %1056 = vmatpush1.msra.mxu0 %v165
    %1057 = vmatprep.subr.mxu0 0.0
    %1058 = vmatpush1.msra.mxu0 %v170
    %1059 = vmatprep.subr.mxu0 0.0
    %1060 = vmatpush1.msra.mxu0 %v175
    %1061 = vmatprep.subr.mxu0 0.0
    %1062 = vmatpush1.msra.mxu0 0.0
    %1063 = vmatprep.subr.mxu0 0.0
    %1064 = vmatpush1.msra.mxu0 0.0
    %1065 = vmatprep.subr.mxu0 0.0
    %1066 = vmatpush1.msra.mxu0 0.0
    %1067 = vmatprep.subr.mxu0 0.0
    %1068 = vmatpush1.msra.mxu0 0.0
    %1069 = vmatprep.subr.mxu0 0.0
    %1070 = vmatpush1.msra.mxu0 0.0
    %1071 = vmatprep.subr.mxu0 0.0
    %1072 = vmatpush1.msra.mxu0 0.0
    %1073 = vmatprep.subr.mxu0 0.0
    %1074 = vmatpush1.msra.mxu0 0.0
    %1075 = vmatprep.subr.mxu0 0.0
    %1076 = vmatpush1.msra.mxu0 0.0
    %1077 = vmatprep.subr.mxu0 0.0
    %1078 = vmatpush1.msra.mxu0 0.0
    %1079 = vmatprep.subr.mxu0 0.0
    %1080 = vmatpush1.msra.mxu0 0.0
    %1081 = vmatprep.subr.mxu0 0.0
    %1082 = vmatpush1.msra.mxu0 0.0
    %1083 = vmatprep.subr.mxu0 0.0
    %1084 = vmatpush1.msra.mxu0 0.0
    %1085 = vmatprep.subr.mxu0 0.0
    %1086 = vmatpush1.msra.mxu0 0.0
    %1087 = vmatprep.subr.mxu0 0.0
    %1088 = vmatpush1.msra.mxu0 0.0
    %1089 = vmatprep.subr.mxu0 0.0
    %1090 = vmatpush1.msra.mxu0 0.0
    %1091 = vmatprep.subr.mxu0 0.0
    %1092 = vmatpush1.msra.mxu0 0.0
    %1093 = vmatprep.subr.mxu0 0.0
    %1094 = vmatpush1.msra.mxu0 0.0
    %1095 = vmatprep.subr.mxu0 0.0
    %1096 = vmatpush1.msra.mxu0 0.0
    %1097 = vmatprep.subr.mxu0 0.0
    %1098 = vmatpush1.msra.mxu0 0.0
    %1099 = vmatprep.subr.mxu0 0.0
    %1100 = vmatpush1.msra.mxu0 0.0
    %1101 = vmatprep.subr.mxu0 0.0
    %1102 = vmatpush1.msra.mxu0 0.0
    %1103 = vmatprep.subr.mxu0 0.0
    %1104 = vmatpush1.msra.mxu0 0.0
    %1105 = vmatprep.subr.mxu0 0.0
    %1106 = vmatpush1.msra.mxu0 0.0
    %1107 = vmatprep.subr.mxu0 0.0
    %1108 = vmatpush1.msra.mxu0 0.0
    %1109 = vmatprep.subr.mxu0 0.0
    %1110 = vmatpush1.msra.mxu0 0.0
    %1111 = vmatprep.subr.mxu0 0.0
    %1112 = vmatpush1.msra.mxu0 0.0
    %1113 = vmatprep.subr.mxu0 0.0
    %1114 = vmatpush1.msra.mxu0 0.0
    %1115 = vmatprep.subr.mxu0 0.0
    %1116 = vmatpush1.msra.mxu0 0.0
    %1117 = vmatprep.subr.mxu0 0.0
    %1118 = vmatpush1.msra.mxu0 0.0
    %1119 = vmatprep.mubr.f32.mxu0 0.0
    %1120 = vmatmul.mubr.f32.gmra.mrb[0].mxu0 %v911
    %v1121 = vpop.f32.mrb[0].mxu0
    %v1122 = vadd.f32 0.0, %v1121
    %v1123 = vpop.f32.mrb[0].mxu0
    %1124 = vdwg.mxu0
    %1125 = vmatprep.subr.mxu0 0.0
    %1126 = vmatpush1.msra.mxu0 %v81
    %1127 = vmatprep.subr.mxu0 0.0
    %1128 = vmatpush1.msra.mxu0 %v82
    %1129 = vmatprep.subr.mxu0 0.0
    %1130 = vmatpush1.msra.mxu0 %v83
    %1131 = vmatprep.subr.mxu0 0.0
    %1132 = vmatpush1.msra.mxu0 %v84
    %1133 = vmatprep.subr.mxu0 0.0
    %1134 = vmatpush1.msra.mxu0 %v85
    %1135 = vmatprep.subr.mxu0 0.0
    %1136 = vmatpush1.msra.mxu0 %v86
    %1137 = vmatprep.subr.mxu0 0.0
    %1138 = vmatpush1.msra.mxu0 %v87
    %1139 = vmatprep.subr.mxu0 0.0
    %1140 = vmatpush1.msra.mxu0 %v88
    %1141 = vmatprep.subr.mxu0 0.0
    %1142 = vmatpush1.msra.mxu0 %v89
    %1143 = vmatprep.subr.mxu0 0.0
    %1144 = vmatpush1.msra.mxu0 %v90
    %1145 = vmatprep.subr.mxu0 0.0
    %1146 = vmatpush1.msra.mxu0 %v91
    %1147 = vmatprep.subr.mxu0 0.0
    %1148 = vmatpush1.msra.mxu0 %v92
    %1149 = vmatprep.subr.mxu0 0.0
    %1150 = vmatpush1.msra.mxu0 %v93
    %1151 = vmatprep.subr.mxu0 0.0
    %1152 = vmatpush1.msra.mxu0 %v94
    %1153 = vmatprep.subr.mxu0 0.0
    %1154 = vmatpush1.msra.mxu0 %v95
    %1155 = vmatprep.subr.mxu0 0.0
    %1156 = vmatpush1.msra.mxu0 %v96
    %1157 = vmatprep.subr.mxu0 0.0
    %1158 = vmatpush1.msra.mxu0 0.0
    %1159 = vmatprep.subr.mxu0 0.0
    %1160 = vmatpush1.msra.mxu0 0.0
    %1161 = vmatprep.subr.mxu0 0.0
    %1162 = vmatpush1.msra.mxu0 0.0
    %1163 = vmatprep.subr.mxu0 0.0
    %1164 = vmatpush1.msra.mxu0 0.0
    %1165 = vmatprep.subr.mxu0 0.0
    %1166 = vmatpush1.msra.mxu0 0.0
    %1167 = vmatprep.subr.mxu0 0.0
    %1168 = vmatpush1.msra.mxu0 0.0
    %1169 = vmatprep.subr.mxu0 0.0
    %1170 = vmatpush1.msra.mxu0 0.0
    %1171 = vmatprep.subr.mxu0 0.0
    %1172 = vmatpush1.msra.mxu0 0.0
    %1173 = vmatprep.subr.mxu0 0.0
    %1174 = vmatpush1.msra.mxu0 0.0
    %1175 = vmatprep.subr.mxu0 0.0
    %1176 = vmatpush1.msra.mxu0 0.0
    %1177 = vmatprep.subr.mxu0 0.0
    %1178 = vmatpush1.msra.mxu0 0.0
    %1179 = vmatprep.subr.mxu0 0.0
    %1180 = vmatpush1.msra.mxu0 0.0
    %1181 = vmatprep.subr.mxu0 0.0
    %1182 = vmatpush1.msra.mxu0 0.0
    %1183 = vmatprep.subr.mxu0 0.0
    %1184 = vmatpush1.msra.mxu0 0.0
    %1185 = vmatprep.subr.mxu0 0.0
    %1186 = vmatpush1.msra.mxu0 0.0
    %1187 = vmatprep.subr.mxu0 0.0
    %1188 = vmatpush1.msra.mxu0 0.0
    %1189 = vmatprep.mubr.f32.mxu0 0.0
    %1190 = vmatmul.mubr.f32.gmra.mrb[0].mxu0 %v765
    %v1191 = vpop.f32.mrb[0].mxu0
    %v1192 = vadd.f32 0.0, %v1191
    %v1193 = vpop.f32.mrb[0].mxu0
    %1194 = vdwg.mxu0
    %v1195 = vmul.f32 %v980, %v1192
    %1196 = vmatprep.subr.mxu0 %v98
    %1197 = vmatpush1.msra.mxu0 %v97
    %1198 = vmatprep.subr.mxu0 %v102
    %1199 = vmatpush1.msra.mxu0 %v101
    %1200 = vmatprep.subr.mxu0 %v106
    %1201 = vmatpush1.msra.mxu0 %v105
    %1202 = vmatprep.subr.mxu0 %v110
    %1203 = vmatpush1.msra.mxu0 %v109
    %1204 = vmatprep.subr.mxu0 %v114
    %1205 = vmatpush1.msra.mxu0 %v113
    %1206 = vmatprep.subr.mxu0 %v118
    %1207 = vmatpush1.msra.mxu0 %v117
    %1208 = vmatprep.subr.mxu0 %v122
    %1209 = vmatpush1.msra.mxu0 %v121
    %1210 = vmatprep.subr.mxu0 %v126
    %1211 = vmatpush1.msra.mxu0 %v125
    %1212 = vmatprep.subr.mxu0 %v130
    %1213 = vmatpush1.msra.mxu0 %v129
    %1214 = vmatprep.subr.mxu0 %v134
    %1215 = vmatpush1.msra.mxu0 %v133
    %1216 = vmatprep.subr.mxu0 %v138
    %1217 = vmatpush1.msra.mxu0 %v137
    %1218 = vmatprep.subr.mxu0 %v142
    %1219 = vmatpush1.msra.mxu0 %v141
    %1220 = vmatprep.subr.mxu0 %v146
    %1221 = vmatpush1.msra.mxu0 %v145
    %1222 = vmatprep.subr.mxu0 %v150
    %1223 = vmatpush1.msra.mxu0 %v149
    %1224 = vmatprep.subr.mxu0 %v154
    %1225 = vmatpush1.msra.mxu0 %v153
    %1226 = vmatprep.subr.mxu0 %v158
    %1227 = vmatpush1.msra.mxu0 %v157
    %1228 = vmatprep.subr.mxu0 0.0
    %1229 = vmatpush1.msra.mxu0 0.0
    %1230 = vmatprep.subr.mxu0 0.0
    %1231 = vmatpush1.msra.mxu0 0.0
    %1232 = vmatprep.subr.mxu0 0.0
    %1233 = vmatpush1.msra.mxu0 0.0
    %1234 = vmatprep.subr.mxu0 0.0
    %1235 = vmatpush1.msra.mxu0 0.0
    %1236 = vmatprep.subr.mxu0 0.0
    %1237 = vmatpush1.msra.mxu0 0.0
    %1238 = vmatprep.subr.mxu0 0.0
    %1239 = vmatpush1.msra.mxu0 0.0
    %1240 = vmatprep.subr.mxu0 0.0
    %1241 = vmatpush1.msra.mxu0 0.0
    %1242 = vmatprep.subr.mxu0 0.0
    %1243 = vmatpush1.msra.mxu0 0.0
    %1244 = vmatprep.subr.mxu0 0.0
    %1245 = vmatpush1.msra.mxu0 0.0
    %1246 = vmatprep.subr.mxu0 0.0
    %1247 = vmatpush1.msra.mxu0 0.0
    %1248 = vmatprep.subr.mxu0 0.0
    %1249 = vmatpush1.msra.mxu0 0.0
    %1250 = vmatprep.subr.mxu0 0.0
    %1251 = vmatpush1.msra.mxu0 0.0
    %1252 = vmatprep.subr.mxu0 0.0
    %1253 = vmatpush1.msra.mxu0 0.0
    %1254 = vmatprep.subr.mxu0 0.0
    %1255 = vmatpush1.msra.mxu0 0.0
    %1256 = vmatprep.subr.mxu0 0.0
    %1257 = vmatpush1.msra.mxu0 0.0
    %1258 = vmatprep.subr.mxu0 0.0
    %1259 = vmatpush1.msra.mxu0 0.0
    %1260 = vmatprep.mubr.f32.mxu0 0.0
    %1261 = vmatmul.mubr.f32.gmra.mrb[0].mxu0 %v1195
    %v1262 = vpop.f32.mrb[0].mxu0
    %v1263 = vadd.f32 0.0, %v1262
    %v1264 = vpop.f32.mrb[0].mxu0
    %v1265 = vadd.f32 0.0, %v1264
    %1266 = vdwg.mxu0
    %1267 = vmatprep.subr.mxu0 %v100
    %1268 = vmatpush1.msra.mxu0 %v99
    %1269 = vmatprep.subr.mxu0 %v104
    %1270 = vmatpush1.msra.mxu0 %v103
    %1271 = vmatprep.subr.mxu0 %v108
    %1272 = vmatpush1.msra.mxu0 %v107
    %1273 = vmatprep.subr.mxu0 %v112
    %1274 = vmatpush1.msra.mxu0 %v111
    %1275 = vmatprep.subr.mxu0 %v116
    %1276 = vmatpush1.msra.mxu0 %v115
    %1277 = vmatprep.subr.mxu0 %v120
    %1278 = vmatpush1.msra.mxu0 %v119
    %1279 = vmatprep.subr.mxu0 %v124
    %1280 = vmatpush1.msra.mxu0 %v123
    %1281 = vmatprep.subr.mxu0 %v128
    %1282 = vmatpush1.msra.mxu0 %v127
    %1283 = vmatprep.subr.mxu0 %v132
    %1284 = vmatpush1.msra.mxu0 %v131
    %1285 = vmatprep.subr.mxu0 %v136
    %1286 = vmatpush1.msra.mxu0 %v135
    %1287 = vmatprep.subr.mxu0 %v140
    %1288 = vmatpush1.msra.mxu0 %v139
    %1289 = vmatprep.subr.mxu0 %v144
    %1290 = vmatpush1.msra.mxu0 %v143
    %1291 = vmatprep.subr.mxu0 %v148
    %1292 = vmatpush1.msra.mxu0 %v147
    %1293 = vmatprep.subr.mxu0 %v152
    %1294 = vmatpush1.msra.mxu0 %v151
    %1295 = vmatprep.subr.mxu0 %v156
    %1296 = vmatpush1.msra.mxu0 %v155
    %1297 = vmatprep.subr.mxu0 %v160
    %1298 = vmatpush1.msra.mxu0 %v159
    %1299 = vmatprep.subr.mxu0 0.0
    %1300 = vmatpush1.msra.mxu0 0.0
    %1301 = vmatprep.subr.mxu0 0.0
    %1302 = vmatpush1.msra.mxu0 0.0
    %1303 = vmatprep.subr.mxu0 0.0
    %1304 = vmatpush1.msra.mxu0 0.0
    %1305 = vmatprep.subr.mxu0 0.0
    %1306 = vmatpush1.msra.mxu0 0.0
    %1307 = vmatprep.subr.mxu0 0.0
    %1308 = vmatpush1.msra.mxu0 0.0
    %1309 = vmatprep.subr.mxu0 0.0
    %1310 = vmatpush1.msra.mxu0 0.0
    %1311 = vmatprep.subr.mxu0 0.0
    %1312 = vmatpush1.msra.mxu0 0.0
    %1313 = vmatprep.subr.mxu0 0.0
    %1314 = vmatpush1.msra.mxu0 0.0
    %1315 = vmatprep.subr.mxu0 0.0
    %1316 = vmatpush1.msra.mxu0 0.0
    %1317 = vmatprep.subr.mxu0 0.0
    %1318 = vmatpush1.msra.mxu0 0.0
    %1319 = vmatprep.subr.mxu0 0.0
    %1320 = vmatpush1.msra.mxu0 0.0
    %1321 = vmatprep.subr.mxu0 0.0
    %1322 = vmatpush1.msra.mxu0 0.0
    %1323 = vmatprep.subr.mxu0 0.0
    %1324 = vmatpush1.msra.mxu0 0.0
    %1325 = vmatprep.subr.mxu0 0.0
    %1326 = vmatpush1.msra.mxu0 0.0
    %1327 = vmatprep.subr.mxu0 0.0
    %1328 = vmatpush1.msra.mxu0 0.0
    %1329 = vmatprep.subr.mxu0 0.0
    %1330 = vmatpush1.msra.mxu0 0.0
    %1331 = vmatprep.mubr.f32.mxu0 0.0
    %1332 = vmatmul.mubr.f32.gmra.mrb[0].mxu0 %v1195
    %v1333 = vpop.f32.mrb[0].mxu0
    %v1334 = vadd.f32 0.0, %v1333
    %v1335 = vpop.f32.mrb[0].mxu0
    %v1336 = vadd.f32 0.0, %v1335
    %1337 = vdwg.mxu0
    %v1338 = vadd.f32 %v982, %v1263
    %v1339 = vadd.f32 %v1051, %v1265
    %v1340 = vadd.f32 %v1053, %v1334
    %v1341 = vadd.f32 %v1122, %v1336
    %v1342 = vxor.u32 %v1338, 2147483648
    %v1343 = vmul.f32 %v1342, 1.442695
    %v1344 = vpow.pop %v1343
    %v1345 = vadd.f32 %v1344, 1.0
    %v1346 = vrcp.pop %v1345
    %v1347 = vmul.f32 1.0, %v1346
    %v1348 = vxor.u32 %v1339, 2147483648
    %v1349 = vmul.f32 %v1348, 1.442695
    %v1350 = vpow.pop %v1349
    %v1351 = vadd.f32 %v1350, 1.0
    %v1352 = vrcp.pop %v1351
    %v1353 = vmul.f32 1.0, %v1352
    %v1354 = vxor.u32 %v1340, 2147483648
    %v1355 = vmul.f32 %v1354, 1.442695
    %v1356 = vpow.pop %v1355
    %v1357 = vadd.f32 %v1356, 1.0
    %v1358 = vrcp.pop %v1357
    %v1359 = vmul.f32 1.0, %v1358
    %v1360 = vtanh.pop %v1341
    %v1361 = vmul.f32 %v1353, %v814
    %v1362 = vmul.f32 %v1347, %v1360
    %v1363 = vadd.f32 %v1361, %v1362
    %v1364 = vtanh.pop %v1363
    %v1365 = vmul.f32 %v1359, %v1364
    %v1366 = vld [vmem:[%s1 + $0x1] sm:$0x1]
    %v1367 = vld [vmem:[%s1 + $0x9] sm:$0x1]
    %v1368 = vld [vmem:[%s1 + $0x11] sm:$0x1]
    %v1369 = vld [vmem:[%s1 + $0x19] sm:$0x1]
    %v1370 = vld [vmem:[%s1 + $0x21] sm:$0x1]
    %v1371 = vld [vmem:[%s1 + $0x29] sm:$0x1]
    %v1372 = vld [vmem:[%s1 + $0x31] sm:$0x1]
    %v1373 = vld [vmem:[%s1 + $0x39] sm:$0x1]
    %v1374 = vsub.f32 %v1365, %v765
    %1376 = vset.pattern.permute.xlu0 0
    %1377 = vperm.xlu0 %1376, %v1366
    %v1378 = vpop.permute.xlu0 %1377
    %1381 = vset.pattern.permute.xlu0 0
    %1382 = vperm.xlu0 %1381, %v1367
    %v1383 = vpop.permute.xlu0 %1382
    %1386 = vset.pattern.permute.xlu0 0
    %1387 = vperm.xlu0 %1386, %v1368
    %v1388 = vpop.permute.xlu0 %1387
    %1391 = vset.pattern.permute.xlu0 0
    %1392 = vperm.xlu0 %1391, %v1369
    %v1393 = vpop.permute.xlu0 %1392
    %1396 = vset.pattern.permute.xlu0 0
    %1397 = vperm.xlu0 %1396, %v1370
    %v1398 = vpop.permute.xlu0 %1397
    %1401 = vset.pattern.permute.xlu0 0
    %1402 = vperm.xlu0 %1401, %v1371
    %v1403 = vpop.permute.xlu0 %1402
    %1406 = vset.pattern.permute.xlu0 0
    %1407 = vperm.xlu0 %1406, %v1372
    %v1408 = vpop.permute.xlu0 %1407
    %1411 = vset.pattern.permute.xlu0 0
    %1412 = vperm.xlu0 %1411, %v1373
    %v1413 = vpop.permute.xlu0 %1412
    %v1416 = vrot.slane %v1374, 1
    %v1417 = vrot.slane %v1374, 2
    %v1418 = vrot.slane %v1374, 3
    %v1419 = vrot.slane %v1374, 4
    %v1420 = vrot.slane %v1374, 5
    %v1421 = vrot.slane %v1374, 6
    %v1422 = vrot.slane %v1374, 7
    %v1431 = vmul.f32 %v1378, %v1374
    %v1432 = vmul.f32 %v1383, %v1416
    %v1433 = vmul.f32 %v1388, %v1417
    %v1434 = vmul.f32 %v1393, %v1418
    %v1435 = vmul.f32 %v1398, %v1419
    %v1436 = vmul.f32 %v1403, %v1420
    %v1437 = vmul.f32 %v1408, %v1421
    %v1438 = vmul.f32 %v1413, %v1422
    %v1447 = vrot.slane %v1432, 7
    %v1448 = vsel %vm193, %v1447, %v1431
    %v1449 = vrot.slane %v1433, 6
    %v1450 = vsel %vm196, %v1449, %v1448
    %v1451 = vrot.slane %v1434, 5
    %v1452 = vsel %vm199, %v1451, %v1450
    %v1453 = vrot.slane %v1435, 4
    %v1454 = vsel %vm202, %v1453, %v1452
    %v1455 = vrot.slane %v1436, 3
    %v1456 = vsel %vm205, %v1455, %v1454
    %v1457 = vrot.slane %v1437, 2
    %v1458 = vsel %vm208, %v1457, %v1456
    %v1459 = vrot.slane %v1438, 1
    %v1460 = vsel %vm211, %v1459, %v1458
    %v1462 = vadd.f32 %v765, %v1460
    %v1463 = vsub.f32 %v1363, %v814
    %v1465 = vrot.slane %v1463, 1
    %v1466 = vrot.slane %v1463, 2
    %v1467 = vrot.slane %v1463, 3
    %v1468 = vrot.slane %v1463, 4
    %v1469 = vrot.slane %v1463, 5
    %v1470 = vrot.slane %v1463, 6
    %v1471 = vrot.slane %v1463, 7
    %v1480 = vmul.f32 %v1378, %v1463
    %v1481 = vmul.f32 %v1383, %v1465
    %v1482 = vmul.f32 %v1388, %v1466
    %v1483 = vmul.f32 %v1393, %v1467
    %v1484 = vmul.f32 %v1398, %v1468
    %v1485 = vmul.f32 %v1403, %v1469
    %v1486 = vmul.f32 %v1408, %v1470
    %v1487 = vmul.f32 %v1413, %v1471
    %v1496 = vrot.slane %v1481, 7
    %v1497 = vsel %vm193, %v1496, %v1480
    %v1498 = vrot.slane %v1482, 6
    %v1499 = vsel %vm196, %v1498, %v1497
    %v1500 = vrot.slane %v1483, 5
    %v1501 = vsel %vm199, %v1500, %v1499
    %v1502 = vrot.slane %v1484, 4
    %v1503 = vsel %vm202, %v1502, %v1501
    %v1504 = vrot.slane %v1485, 3
    %v1505 = vsel %vm205, %v1504, %v1503
    %v1506 = vrot.slane %v1486, 2
    %v1507 = vsel %vm208, %v1506, %v1505
    %v1508 = vrot.slane %v1487, 1
    %v1509 = vsel %vm211, %v1508, %v1507
    %v1511 = vadd.f32 %v814, %v1509
    %v1513 = vcombine.high %v1462, %v1462
    %v1515 = vunpack.c.l.s4 1966171168
    %v1516 = vunpack.c.0.s8 %v1515
    %v1517 = vlaneseq
    %v1518 = vshrl.u32 %v1517, 7
    %v1519 = vsub.s32 %v1516, %v1518
    %v1520 = vrot.slane %v1462, %v1519
    %v1522 = vunpack.c.l.s4 1966171168
    %v1523 = vunpack.c.0.s8 %v1522
    %v1524 = vlaneseq
    %v1525 = vshrl.u32 %v1524, 7
    %v1526 = vsub.s32 %v1523, %v1525
    %v1527 = vrot.slane %v1513, %v1526
    %v1528 = vcombine.high %v1520, %v1520
    %v1529 = vcombine.high %v1527, %v1527
    %v1531 = vunpack.c.l.s4 1966171168
    %v1532 = vunpack.c.0.s8 %v1531
    %v1533 = vlaneseq
    %v1534 = vshrl.u32 %v1533, 7
    %v1535 = vsub.s32 %v1532, %v1534
    %v1536 = vrot.slane %v1520, %v1535
    %v1538 = vunpack.c.l.s4 1966171168
    %v1539 = vunpack.c.0.s8 %v1538
    %v1540 = vlaneseq
    %v1541 = vshrl.u32 %v1540, 7
    %v1542 = vsub.s32 %v1539, %v1541
    %v1543 = vrot.slane %v1527, %v1542
    %v1545 = vunpack.c.l.s4 1966171168
    %v1546 = vunpack.c.0.s8 %v1545
    %v1547 = vlaneseq
    %v1548 = vshrl.u32 %v1547, 7
    %v1549 = vsub.s32 %v1546, %v1548
    %v1550 = vrot.slane %v1528, %v1549
    %v1552 = vunpack.c.l.s4 1966171168
    %v1553 = vunpack.c.0.s8 %v1552
    %v1554 = vlaneseq
    %v1555 = vshrl.u32 %v1554, 7
    %v1556 = vsub.s32 %v1553, %v1555
    %v1557 = vrot.slane %v1529, %v1556
    %v1558 = vcombine.high %v1536, %v1536
    %v1559 = vcombine.high %v1543, %v1543
    %v1560 = vcombine.high %v1550, %v1550
    %v1561 = vcombine.high %v1557, %v1557
    %1570 = vst [vmem:[#allocation10 + $0x1] sm:$0x1] %v1536
    %1571 = vst [vmem:[#allocation10 + $0x9] sm:$0x1] %v1550
    %1572 = vst [vmem:[#allocation10 + $0x11] sm:$0x1] %v1558
    %1573 = vst [vmem:[#allocation10 + $0x19] sm:$0x1] %v1560
    %1574 = vst [vmem:[#allocation10 + $0x21] sm:$0x1] %v1543
    %1575 = vst [vmem:[#allocation10 + $0x29] sm:$0x1] %v1557
    %1576 = vst [vmem:[#allocation10 + $0x31] sm:$0x1] %v1559
    %1577 = vst [vmem:[#allocation10 + $0x39] sm:$0x1] %v1561
    %v1578 = vld [vmem:[%s0 + $0x2] sm:$0x1]
    %v1579 = vld [vmem:[%s0 + $0xa] sm:$0x1]
    %v1580 = vld [vmem:[%s0 + $0x12] sm:$0x1]
    %v1581 = vld [vmem:[%s0 + $0x1a] sm:$0x1]
    %v1582 = vld [vmem:[%s0 + $0x22] sm:$0x1]
    %v1583 = vld [vmem:[%s0 + $0x2a] sm:$0x1]
    %v1584 = vld [vmem:[%s0 + $0x32] sm:$0x1]
    %v1585 = vld [vmem:[%s0 + $0x3a] sm:$0x1]
    %v1594 = vrot.slane %v1579, 7
    %v1595 = vsel %vm193, %v1594, %v1578
    %v1596 = vrot.slane %v1580, 6
    %v1597 = vsel %vm196, %v1596, %v1595
    %v1598 = vrot.slane %v1581, 5
    %v1599 = vsel %vm199, %v1598, %v1597
    %v1600 = vrot.slane %v1582, 4
    %v1601 = vsel %vm202, %v1600, %v1599
    %v1602 = vrot.slane %v1583, 3
    %v1603 = vsel %vm205, %v1602, %v1601
    %v1604 = vrot.slane %v1584, 2
    %v1605 = vsel %vm208, %v1604, %v1603
    %v1606 = vrot.slane %v1585, 1
    %v1607 = vsel %vm211, %v1606, %v1605
    %v1608 = vsel %vm213, %v1607, 0
    %1610 = vmatprep.subr.mxu0 %v162
    %1611 = vmatpush1.msra.mxu0 %v161
    %1612 = vmatprep.subr.mxu0 %v167
    %1613 = vmatpush1.msra.mxu0 %v166
    %1614 = vmatprep.subr.mxu0 %v172
    %1615 = vmatpush1.msra.mxu0 %v171
    %1616 = vmatprep.subr.mxu0 0.0
    %1617 = vmatpush1.msra.mxu0 0.0
    %1618 = vmatprep.subr.mxu0 0.0
    %1619 = vmatpush1.msra.mxu0 0.0
    %1620 = vmatprep.subr.mxu0 0.0
    %1621 = vmatpush1.msra.mxu0 0.0
    %1622 = vmatprep.subr.mxu0 0.0
    %1623 = vmatpush1.msra.mxu0 0.0
    %1624 = vmatprep.subr.mxu0 0.0
    %1625 = vmatpush1.msra.mxu0 0.0
    %1626 = vmatprep.subr.mxu0 0.0
    %1627 = vmatpush1.msra.mxu0 0.0
    %1628 = vmatprep.subr.mxu0 0.0
    %1629 = vmatpush1.msra.mxu0 0.0
    %1630 = vmatprep.subr.mxu0 0.0
    %1631 = vmatpush1.msra.mxu0 0.0
    %1632 = vmatprep.subr.mxu0 0.0
    %1633 = vmatpush1.msra.mxu0 0.0
    %1634 = vmatprep.subr.mxu0 0.0
    %1635 = vmatpush1.msra.mxu0 0.0
    %1636 = vmatprep.subr.mxu0 0.0
    %1637 = vmatpush1.msra.mxu0 0.0
    %1638 = vmatprep.subr.mxu0 0.0
    %1639 = vmatpush1.msra.mxu0 0.0
    %1640 = vmatprep.subr.mxu0 0.0
    %1641 = vmatpush1.msra.mxu0 0.0
    %1642 = vmatprep.subr.mxu0 0.0
    %1643 = vmatpush1.msra.mxu0 0.0
    %1644 = vmatprep.subr.mxu0 0.0
    %1645 = vmatpush1.msra.mxu0 0.0
    %1646 = vmatprep.subr.mxu0 0.0
    %1647 = vmatpush1.msra.mxu0 0.0
    %1648 = vmatprep.subr.mxu0 0.0
    %1649 = vmatpush1.msra.mxu0 0.0
    %1650 = vmatprep.subr.mxu0 0.0
    %1651 = vmatpush1.msra.mxu0 0.0
    %1652 = vmatprep.subr.mxu0 0.0
    %1653 = vmatpush1.msra.mxu0 0.0
    %1654 = vmatprep.subr.mxu0 0.0
    %1655 = vmatpush1.msra.mxu0 0.0
    %1656 = vmatprep.subr.mxu0 0.0
    %1657 = vmatpush1.msra.mxu0 0.0
    %1658 = vmatprep.subr.mxu0 0.0
    %1659 = vmatpush1.msra.mxu0 0.0
    %1660 = vmatprep.subr.mxu0 0.0
    %1661 = vmatpush1.msra.mxu0 0.0
    %1662 = vmatprep.subr.mxu0 0.0
    %1663 = vmatpush1.msra.mxu0 0.0
    %1664 = vmatprep.subr.mxu0 0.0
    %1665 = vmatpush1.msra.mxu0 0.0
    %1666 = vmatprep.subr.mxu0 0.0
    %1667 = vmatpush1.msra.mxu0 0.0
    %1668 = vmatprep.subr.mxu0 0.0
    %1669 = vmatpush1.msra.mxu0 0.0
    %1670 = vmatprep.subr.mxu0 0.0
    %1671 = vmatpush1.msra.mxu0 0.0
    %1672 = vmatprep.subr.mxu0 0.0
    %1673 = vmatpush1.msra.mxu0 0.0
    %1674 = vmatprep.mubr.f32.mxu0 0.0
    %1675 = vmatmul.mubr.f32.gmra.mrb[0].mxu0 %v1608
    %v1676 = vpop.f32.mrb[0].mxu0
    %v1677 = vadd.f32 0.0, %v1676
    %v1678 = vpop.f32.mrb[0].mxu0
    %v1679 = vadd.f32 0.0, %v1678
    %1680 = vdwg.mxu0
    %1681 = vmatprep.subr.mxu0 %v164
    %1682 = vmatpush1.msra.mxu0 %v163
    %1683 = vmatprep.subr.mxu0 %v169
    %1684 = vmatpush1.msra.mxu0 %v168
    %1685 = vmatprep.subr.mxu0 %v174
    %1686 = vmatpush1.msra.mxu0 %v173
    %1687 = vmatprep.subr.mxu0 0.0
    %1688 = vmatpush1.msra.mxu0 0.0
    %1689 = vmatprep.subr.mxu0 0.0
    %1690 = vmatpush1.msra.mxu0 0.0
    %1691 = vmatprep.subr.mxu0 0.0
    %1692 = vmatpush1.msra.mxu0 0.0
    %1693 = vmatprep.subr.mxu0 0.0
    %1694 = vmatpush1.msra.mxu0 0.0
    %1695 = vmatprep.subr.mxu0 0.0
    %1696 = vmatpush1.msra.mxu0 0.0
    %1697 = vmatprep.subr.mxu0 0.0
    %1698 = vmatpush1.msra.mxu0 0.0
    %1699 = vmatprep.subr.mxu0 0.0
    %1700 = vmatpush1.msra.mxu0 0.0
    %1701 = vmatprep.subr.mxu0 0.0
    %1702 = vmatpush1.msra.mxu0 0.0
    %1703 = vmatprep.subr.mxu0 0.0
    %1704 = vmatpush1.msra.mxu0 0.0
    %1705 = vmatprep.subr.mxu0 0.0
    %1706 = vmatpush1.msra.mxu0 0.0
    %1707 = vmatprep.subr.mxu0 0.0
    %1708 = vmatpush1.msra.mxu0 0.0
    %1709 = vmatprep.subr.mxu0 0.0
    %1710 = vmatpush1.msra.mxu0 0.0
    %1711 = vmatprep.subr.mxu0 0.0
    %1712 = vmatpush1.msra.mxu0 0.0
    %1713 = vmatprep.subr.mxu0 0.0
    %1714 = vmatpush1.msra.mxu0 0.0
    %1715 = vmatprep.subr.mxu0 0.0
    %1716 = vmatpush1.msra.mxu0 0.0
    %1717 = vmatprep.subr.mxu0 0.0
    %1718 = vmatpush1.msra.mxu0 0.0
    %1719 = vmatprep.subr.mxu0 0.0
    %1720 = vmatpush1.msra.mxu0 0.0
    %1721 = vmatprep.subr.mxu0 0.0
    %1722 = vmatpush1.msra.mxu0 0.0
    %1723 = vmatprep.subr.mxu0 0.0
    %1724 = vmatpush1.msra.mxu0 0.0
    %1725 = vmatprep.subr.mxu0 0.0
    %1726 = vmatpush1.msra.mxu0 0.0
    %1727 = vmatprep.subr.mxu0 0.0
    %1728 = vmatpush1.msra.mxu0 0.0
    %1729 = vmatprep.subr.mxu0 0.0
    %1730 = vmatpush1.msra.mxu0 0.0
    %1731 = vmatprep.subr.mxu0 0.0
    %1732 = vmatpush1.msra.mxu0 0.0
    %1733 = vmatprep.subr.mxu0 0.0
    %1734 = vmatpush1.msra.mxu0 0.0
    %1735 = vmatprep.subr.mxu0 0.0
    %1736 = vmatpush1.msra.mxu0 0.0
    %1737 = vmatprep.subr.mxu0 0.0
    %1738 = vmatpush1.msra.mxu0 0.0
    %1739 = vmatprep.subr.mxu0 0.0
    %1740 = vmatpush1.msra.mxu0 0.0
    %1741 = vmatprep.subr.mxu0 0.0
    %1742 = vmatpush1.msra.mxu0 0.0
    %1743 = vmatprep.subr.mxu0 0.0
    %1744 = vmatpush1.msra.mxu0 0.0
    %1745 = vmatprep.mubr.f32.mxu0 0.0
    %1746 = vmatmul.mubr.f32.gmra.mrb[0].mxu0 %v1608
    %v1747 = vpop.f32.mrb[0].mxu0
    %v1748 = vadd.f32 0.0, %v1747
    %v1749 = vpop.f32.mrb[0].mxu0
    %v1750 = vadd.f32 0.0, %v1749
    %1751 = vdwg.mxu0
    %1752 = vmatprep.subr.mxu0 0.0
    %1753 = vmatpush1.msra.mxu0 %v165
    %1754 = vmatprep.subr.mxu0 0.0
    %1755 = vmatpush1.msra.mxu0 %v170
    %1756 = vmatprep.subr.mxu0 0.0
    %1757 = vmatpush1.msra.mxu0 %v175
    %1758 = vmatprep.subr.mxu0 0.0
    %1759 = vmatpush1.msra.mxu0 0.0
    %1760 = vmatprep.subr.mxu0 0.0
    %1761 = vmatpush1.msra.mxu0 0.0
    %1762 = vmatprep.subr.mxu0 0.0
    %1763 = vmatpush1.msra.mxu0 0.0
    %1764 = vmatprep.subr.mxu0 0.0
    %1765 = vmatpush1.msra.mxu0 0.0
    %1766 = vmatprep.subr.mxu0 0.0
    %1767 = vmatpush1.msra.mxu0 0.0
    %1768 = vmatprep.subr.mxu0 0.0
    %1769 = vmatpush1.msra.mxu0 0.0
    %1770 = vmatprep.subr.mxu0 0.0
    %1771 = vmatpush1.msra.mxu0 0.0
    %1772 = vmatprep.subr.mxu0 0.0
    %1773 = vmatpush1.msra.mxu0 0.0
    %1774 = vmatprep.subr.mxu0 0.0
    %1775 = vmatpush1.msra.mxu0 0.0
    %1776 = vmatprep.subr.mxu0 0.0
    %1777 = vmatpush1.msra.mxu0 0.0
    %1778 = vmatprep.subr.mxu0 0.0
    %1779 = vmatpush1.msra.mxu0 0.0
    %1780 = vmatprep.subr.mxu0 0.0
    %1781 = vmatpush1.msra.mxu0 0.0
    %1782 = vmatprep.subr.mxu0 0.0
    %1783 = vmatpush1.msra.mxu0 0.0
    %1784 = vmatprep.subr.mxu0 0.0
    %1785 = vmatpush1.msra.mxu0 0.0
    %1786 = vmatprep.subr.mxu0 0.0
    %1787 = vmatpush1.msra.mxu0 0.0
    %1788 = vmatprep.subr.mxu0 0.0
    %1789 = vmatpush1.msra.mxu0 0.0
    %1790 = vmatprep.subr.mxu0 0.0
    %1791 = vmatpush1.msra.mxu0 0.0
    %1792 = vmatprep.subr.mxu0 0.0
    %1793 = vmatpush1.msra.mxu0 0.0
    %1794 = vmatprep.subr.mxu0 0.0
    %1795 = vmatpush1.msra.mxu0 0.0
    %1796 = vmatprep.subr.mxu0 0.0
    %1797 = vmatpush1.msra.mxu0 0.0
    %1798 = vmatprep.subr.mxu0 0.0
    %1799 = vmatpush1.msra.mxu0 0.0
    %1800 = vmatprep.subr.mxu0 0.0
    %1801 = vmatpush1.msra.mxu0 0.0
    %1802 = vmatprep.subr.mxu0 0.0
    %1803 = vmatpush1.msra.mxu0 0.0
    %1804 = vmatprep.subr.mxu0 0.0
    %1805 = vmatpush1.msra.mxu0 0.0
    %1806 = vmatprep.subr.mxu0 0.0
    %1807 = vmatpush1.msra.mxu0 0.0
    %1808 = vmatprep.subr.mxu0 0.0
    %1809 = vmatpush1.msra.mxu0 0.0
    %1810 = vmatprep.subr.mxu0 0.0
    %1811 = vmatpush1.msra.mxu0 0.0
    %1812 = vmatprep.subr.mxu0 0.0
    %1813 = vmatpush1.msra.mxu0 0.0
    %1814 = vmatprep.subr.mxu0 0.0
    %1815 = vmatpush1.msra.mxu0 0.0
    %1816 = vmatprep.mubr.f32.mxu0 0.0
    %1817 = vmatmul.mubr.f32.gmra.mrb[0].mxu0 %v1608
    %v1818 = vpop.f32.mrb[0].mxu0
    %v1819 = vadd.f32 0.0, %v1818
    %v1820 = vpop.f32.mrb[0].mxu0
    %1821 = vdwg.mxu0
    %1822 = vmatprep.subr.mxu0 0.0
    %1823 = vmatpush1.msra.mxu0 %v81
    %1824 = vmatprep.subr.mxu0 0.0
    %1825 = vmatpush1.msra.mxu0 %v82
    %1826 = vmatprep.subr.mxu0 0.0
    %1827 = vmatpush1.msra.mxu0 %v83
    %1828 = vmatprep.subr.mxu0 0.0
    %1829 = vmatpush1.msra.mxu0 %v84
    %1830 = vmatprep.subr.mxu0 0.0
    %1831 = vmatpush1.msra.mxu0 %v85
    %1832 = vmatprep.subr.mxu0 0.0
    %1833 = vmatpush1.msra.mxu0 %v86
    %1834 = vmatprep.subr.mxu0 0.0
    %1835 = vmatpush1.msra.mxu0 %v87
    %1836 = vmatprep.subr.mxu0 0.0
    %1837 = vmatpush1.msra.mxu0 %v88
    %1838 = vmatprep.subr.mxu0 0.0
    %1839 = vmatpush1.msra.mxu0 %v89
    %1840 = vmatprep.subr.mxu0 0.0
    %1841 = vmatpush1.msra.mxu0 %v90
    %1842 = vmatprep.subr.mxu0 0.0
    %1843 = vmatpush1.msra.mxu0 %v91
    %1844 = vmatprep.subr.mxu0 0.0
    %1845 = vmatpush1.msra.mxu0 %v92
    %1846 = vmatprep.subr.mxu0 0.0
    %1847 = vmatpush1.msra.mxu0 %v93
    %1848 = vmatprep.subr.mxu0 0.0
    %1849 = vmatpush1.msra.mxu0 %v94
    %1850 = vmatprep.subr.mxu0 0.0
    %1851 = vmatpush1.msra.mxu0 %v95
    %1852 = vmatprep.subr.mxu0 0.0
    %1853 = vmatpush1.msra.mxu0 %v96
    %1854 = vmatprep.subr.mxu0 0.0
    %1855 = vmatpush1.msra.mxu0 0.0
    %1856 = vmatprep.subr.mxu0 0.0
    %1857 = vmatpush1.msra.mxu0 0.0
    %1858 = vmatprep.subr.mxu0 0.0
    %1859 = vmatpush1.msra.mxu0 0.0
    %1860 = vmatprep.subr.mxu0 0.0
    %1861 = vmatpush1.msra.mxu0 0.0
    %1862 = vmatprep.subr.mxu0 0.0
    %1863 = vmatpush1.msra.mxu0 0.0
    %1864 = vmatprep.subr.mxu0 0.0
    %1865 = vmatpush1.msra.mxu0 0.0
    %1866 = vmatprep.subr.mxu0 0.0
    %1867 = vmatpush1.msra.mxu0 0.0
    %1868 = vmatprep.subr.mxu0 0.0
    %1869 = vmatpush1.msra.mxu0 0.0
    %1870 = vmatprep.subr.mxu0 0.0
    %1871 = vmatpush1.msra.mxu0 0.0
    %1872 = vmatprep.subr.mxu0 0.0
    %1873 = vmatpush1.msra.mxu0 0.0
    %1874 = vmatprep.subr.mxu0 0.0
    %1875 = vmatpush1.msra.mxu0 0.0
    %1876 = vmatprep.subr.mxu0 0.0
    %1877 = vmatpush1.msra.mxu0 0.0
    %1878 = vmatprep.subr.mxu0 0.0
    %1879 = vmatpush1.msra.mxu0 0.0
    %1880 = vmatprep.subr.mxu0 0.0
    %1881 = vmatpush1.msra.mxu0 0.0
    %1882 = vmatprep.subr.mxu0 0.0
    %1883 = vmatpush1.msra.mxu0 0.0
    %1884 = vmatprep.subr.mxu0 0.0
    %1885 = vmatpush1.msra.mxu0 0.0
    %1886 = vmatprep.mubr.f32.mxu0 0.0
    %1887 = vmatmul.mubr.f32.gmra.mrb[0].mxu0 %v1462
    %v1888 = vpop.f32.mrb[0].mxu0
    %v1889 = vadd.f32 0.0, %v1888
    %v1890 = vpop.f32.mrb[0].mxu0
    %1891 = vdwg.mxu0
    %v1892 = vmul.f32 %v1677, %v1889
    %1893 = vmatprep.subr.mxu0 %v98
    %1894 = vmatpush1.msra.mxu0 %v97
    %1895 = vmatprep.subr.mxu0 %v102
    %1896 = vmatpush1.msra.mxu0 %v101
    %1897 = vmatprep.subr.mxu0 %v106
    %1898 = vmatpush1.msra.mxu0 %v105
    %1899 = vmatprep.subr.mxu0 %v110
    %1900 = vmatpush1.msra.mxu0 %v109
    %1901 = vmatprep.subr.mxu0 %v114
    %1902 = vmatpush1.msra.mxu0 %v113
    %1903 = vmatprep.subr.mxu0 %v118
    %1904 = vmatpush1.msra.mxu0 %v117
    %1905 = vmatprep.subr.mxu0 %v122
    %1906 = vmatpush1.msra.mxu0 %v121
    %1907 = vmatprep.subr.mxu0 %v126
    %1908 = vmatpush1.msra.mxu0 %v125
    %1909 = vmatprep.subr.mxu0 %v130
    %1910 = vmatpush1.msra.mxu0 %v129
    %1911 = vmatprep.subr.mxu0 %v134
    %1912 = vmatpush1.msra.mxu0 %v133
    %1913 = vmatprep.subr.mxu0 %v138
    %1914 = vmatpush1.msra.mxu0 %v137
    %1915 = vmatprep.subr.mxu0 %v142
    %1916 = vmatpush1.msra.mxu0 %v141
    %1917 = vmatprep.subr.mxu0 %v146
    %1918 = vmatpush1.msra.mxu0 %v145
    %1919 = vmatprep.subr.mxu0 %v150
    %1920 = vmatpush1.msra.mxu0 %v149
    %1921 = vmatprep.subr.mxu0 %v154
    %1922 = vmatpush1.msra.mxu0 %v153
    %1923 = vmatprep.subr.mxu0 %v158
    %1924 = vmatpush1.msra.mxu0 %v157
    %1925 = vmatprep.subr.mxu0 0.0
    %1926 = vmatpush1.msra.mxu0 0.0
    %1927 = vmatprep.subr.mxu0 0.0
    %1928 = vmatpush1.msra.mxu0 0.0
    %1929 = vmatprep.subr.mxu0 0.0
    %1930 = vmatpush1.msra.mxu0 0.0
    %1931 = vmatprep.subr.mxu0 0.0
    %1932 = vmatpush1.msra.mxu0 0.0
    %1933 = vmatprep.subr.mxu0 0.0
    %1934 = vmatpush1.msra.mxu0 0.0
    %1935 = vmatprep.subr.mxu0 0.0
    %1936 = vmatpush1.msra.mxu0 0.0
    %1937 = vmatprep.subr.mxu0 0.0
    %1938 = vmatpush1.msra.mxu0 0.0
    %1939 = vmatprep.subr.mxu0 0.0
    %1940 = vmatpush1.msra.mxu0 0.0
    %1941 = vmatprep.subr.mxu0 0.0
    %1942 = vmatpush1.msra.mxu0 0.0
    %1943 = vmatprep.subr.mxu0 0.0
    %1944 = vmatpush1.msra.mxu0 0.0
    %1945 = vmatprep.subr.mxu0 0.0
    %1946 = vmatpush1.msra.mxu0 0.0
    %1947 = vmatprep.subr.mxu0 0.0
    %1948 = vmatpush1.msra.mxu0 0.0
    %1949 = vmatprep.subr.mxu0 0.0
    %1950 = vmatpush1.msra.mxu0 0.0
    %1951 = vmatprep.subr.mxu0 0.0
    %1952 = vmatpush1.msra.mxu0 0.0
    %1953 = vmatprep.subr.mxu0 0.0
    %1954 = vmatpush1.msra.mxu0 0.0
    %1955 = vmatprep.subr.mxu0 0.0
    %1956 = vmatpush1.msra.mxu0 0.0
    %1957 = vmatprep.mubr.f32.mxu0 0.0
    %1958 = vmatmul.mubr.f32.gmra.mrb[0].mxu0 %v1892
    %v1959 = vpop.f32.mrb[0].mxu0
    %v1960 = vadd.f32 0.0, %v1959
    %v1961 = vpop.f32.mrb[0].mxu0
    %v1962 = vadd.f32 0.0, %v1961
    %1963 = vdwg.mxu0
    %1964 = vmatprep.subr.mxu0 %v100
    %1965 = vmatpush1.msra.mxu0 %v99
    %1966 = vmatprep.subr.mxu0 %v104
    %1967 = vmatpush1.msra.mxu0 %v103
    %1968 = vmatprep.subr.mxu0 %v108
    %1969 = vmatpush1.msra.mxu0 %v107
    %1970 = vmatprep.subr.mxu0 %v112
    %1971 = vmatpush1.msra.mxu0 %v111
    %1972 = vmatprep.subr.mxu0 %v116
    %1973 = vmatpush1.msra.mxu0 %v115
    %1974 = vmatprep.subr.mxu0 %v120
    %1975 = vmatpush1.msra.mxu0 %v119
    %1976 = vmatprep.subr.mxu0 %v124
    %1977 = vmatpush1.msra.mxu0 %v123
    %1978 = vmatprep.subr.mxu0 %v128
    %1979 = vmatpush1.msra.mxu0 %v127
    %1980 = vmatprep.subr.mxu0 %v132
    %1981 = vmatpush1.msra.mxu0 %v131
    %1982 = vmatprep.subr.mxu0 %v136
    %1983 = vmatpush1.msra.mxu0 %v135
    %1984 = vmatprep.subr.mxu0 %v140
    %1985 = vmatpush1.msra.mxu0 %v139
    %1986 = vmatprep.subr.mxu0 %v144
    %1987 = vmatpush1.msra.mxu0 %v143
    %1988 = vmatprep.subr.mxu0 %v148
    %1989 = vmatpush1.msra.mxu0 %v147
    %1990 = vmatprep.subr.mxu0 %v152
    %1991 = vmatpush1.msra.mxu0 %v151
    %1992 = vmatprep.subr.mxu0 %v156
    %1993 = vmatpush1.msra.mxu0 %v155
    %1994 = vmatprep.subr.mxu0 %v160
    %1995 = vmatpush1.msra.mxu0 %v159
    %1996 = vmatprep.subr.mxu0 0.0
    %1997 = vmatpush1.msra.mxu0 0.0
    %1998 = vmatprep.subr.mxu0 0.0
    %1999 = vmatpush1.msra.mxu0 0.0
    %2000 = vmatprep.subr.mxu0 0.0
    %2001 = vmatpush1.msra.mxu0 0.0
    %2002 = vmatprep.subr.mxu0 0.0
    %2003 = vmatpush1.msra.mxu0 0.0
    %2004 = vmatprep.subr.mxu0 0.0
    %2005 = vmatpush1.msra.mxu0 0.0
    %2006 = vmatprep.subr.mxu0 0.0
    %2007 = vmatpush1.msra.mxu0 0.0
    %2008 = vmatprep.subr.mxu0 0.0
    %2009 = vmatpush1.msra.mxu0 0.0
    %2010 = vmatprep.subr.mxu0 0.0
    %2011 = vmatpush1.msra.mxu0 0.0
    %2012 = vmatprep.subr.mxu0 0.0
    %2013 = vmatpush1.msra.mxu0 0.0
    %2014 = vmatprep.subr.mxu0 0.0
    %2015 = vmatpush1.msra.mxu0 0.0
    %2016 = vmatprep.subr.mxu0 0.0
    %2017 = vmatpush1.msra.mxu0 0.0
    %2018 = vmatprep.subr.mxu0 0.0
    %2019 = vmatpush1.msra.mxu0 0.0
    %2020 = vmatprep.subr.mxu0 0.0
    %2021 = vmatpush1.msra.mxu0 0.0
    %2022 = vmatprep.subr.mxu0 0.0
    %2023 = vmatpush1.msra.mxu0 0.0
    %2024 = vmatprep.subr.mxu0 0.0
    %2025 = vmatpush1.msra.mxu0 0.0
    %2026 = vmatprep.subr.mxu0 0.0
    %2027 = vmatpush1.msra.mxu0 0.0
    %2028 = vmatprep.mubr.f32.mxu0 0.0
    %2029 = vmatmul.mubr.f32.gmra.mrb[0].mxu0 %v1892
    %v2030 = vpop.f32.mrb[0].mxu0
    %v2031 = vadd.f32 0.0, %v2030
    %v2032 = vpop.f32.mrb[0].mxu0
    %v2033 = vadd.f32 0.0, %v2032
    %2034 = vdwg.mxu0
    %v2035 = vadd.f32 %v1679, %v1960
    %v2036 = vadd.f32 %v1748, %v1962
    %v2037 = vadd.f32 %v1750, %v2031
    %v2038 = vadd.f32 %v1819, %v2033
    %v2039 = vxor.u32 %v2035, 2147483648
    %v2040 = vmul.f32 %v2039, 1.442695
    %v2041 = vpow.pop %v2040
    %v2042 = vadd.f32 %v2041, 1.0
    %v2043 = vrcp.pop %v2042
    %v2044 = vmul.f32 1.0, %v2043
    %v2045 = vxor.u32 %v2036, 2147483648
    %v2046 = vmul.f32 %v2045, 1.442695
    %v2047 = vpow.pop %v2046
    %v2048 = vadd.f32 %v2047, 1.0
    %v2049 = vrcp.pop %v2048
    %v2050 = vmul.f32 1.0, %v2049
    %v2051 = vxor.u32 %v2037, 2147483648
    %v2052 = vmul.f32 %v2051, 1.442695
    %v2053 = vpow.pop %v2052
    %v2054 = vadd.f32 %v2053, 1.0
    %v2055 = vrcp.pop %v2054
    %v2056 = vmul.f32 1.0, %v2055
    %v2057 = vtanh.pop %v2038
    %v2058 = vmul.f32 %v2050, %v1511
    %v2059 = vmul.f32 %v2044, %v2057
    %v2060 = vadd.f32 %v2058, %v2059
    %v2061 = vtanh.pop %v2060
    %v2062 = vmul.f32 %v2056, %v2061
    %v2063 = vld [vmem:[%s1 + $0x2] sm:$0x1]
    %v2064 = vld [vmem:[%s1 + $0xa] sm:$0x1]
    %v2065 = vld [vmem:[%s1 + $0x12] sm:$0x1]
    %v2066 = vld [vmem:[%s1 + $0x1a] sm:$0x1]
    %v2067 = vld [vmem:[%s1 + $0x22] sm:$0x1]
    %v2068 = vld [vmem:[%s1 + $0x2a] sm:$0x1]
    %v2069 = vld [vmem:[%s1 + $0x32] sm:$0x1]
    %v2070 = vld [vmem:[%s1 + $0x3a] sm:$0x1]
    %v2071 = vsub.f32 %v2062, %v1462
    %2073 = vset.pattern.permute.xlu0 0
    %2074 = vperm.xlu0 %2073, %v2063
    %v2075 = vpop.permute.xlu0 %2074
    %2078 = vset.pattern.permute.xlu0 0
    %2079 = vperm.xlu0 %2078, %v2064
    %v2080 = vpop.permute.xlu0 %2079
    %2083 = vset.pattern.permute.xlu0 0
    %2084 = vperm.xlu0 %2083, %v2065
    %v2085 = vpop.permute.xlu0 %2084
    %2088 = vset.pattern.permute.xlu0 0
    %2089 = vperm.xlu0 %2088, %v2066
    %v2090 = vpop.permute.xlu0 %2089
    %2093 = vset.pattern.permute.xlu0 0
    %2094 = vperm.xlu0 %2093, %v2067
    %v2095 = vpop.permute.xlu0 %2094
    %2098 = vset.pattern.permute.xlu0 0
    %2099 = vperm.xlu0 %2098, %v2068
    %v2100 = vpop.permute.xlu0 %2099
    %2103 = vset.pattern.permute.xlu0 0
    %2104 = vperm.xlu0 %2103, %v2069
    %v2105 = vpop.permute.xlu0 %2104
    %2108 = vset.pattern.permute.xlu0 0
    %2109 = vperm.xlu0 %2108, %v2070
    %v2110 = vpop.permute.xlu0 %2109
    %v2113 = vrot.slane %v2071, 1
    %v2114 = vrot.slane %v2071, 2
    %v2115 = vrot.slane %v2071, 3
    %v2116 = vrot.slane %v2071, 4
    %v2117 = vrot.slane %v2071, 5
    %v2118 = vrot.slane %v2071, 6
    %v2119 = vrot.slane %v2071, 7
    %v2128 = vmul.f32 %v2075, %v2071
    %v2129 = vmul.f32 %v2080, %v2113
    %v2130 = vmul.f32 %v2085, %v2114
    %v2131 = vmul.f32 %v2090, %v2115
    %v2132 = vmul.f32 %v2095, %v2116
    %v2133 = vmul.f32 %v2100, %v2117
    %v2134 = vmul.f32 %v2105, %v2118
    %v2135 = vmul.f32 %v2110, %v2119
    %v2144 = vrot.slane %v2129, 7
    %v2145 = vsel %vm193, %v2144, %v2128
    %v2146 = vrot.slane %v2130, 6
    %v2147 = vsel %vm196, %v2146, %v2145
    %v2148 = vrot.slane %v2131, 5
    %v2149 = vsel %vm199, %v2148, %v2147
    %v2150 = vrot.slane %v2132, 4
    %v2151 = vsel %vm202, %v2150, %v2149
    %v2152 = vrot.slane %v2133, 3
    %v2153 = vsel %vm205, %v2152, %v2151
    %v2154 = vrot.slane %v2134, 2
    %v2155 = vsel %vm208, %v2154, %v2153
    %v2156 = vrot.slane %v2135, 1
    %v2157 = vsel %vm211, %v2156, %v2155
    %v2159 = vadd.f32 %v1462, %v2157
    %v2160 = vsub.f32 %v2060, %v1511
    %v2162 = vrot.slane %v2160, 1
    %v2163 = vrot.slane %v2160, 2
    %v2164 = vrot.slane %v2160, 3
    %v2165 = vrot.slane %v2160, 4
    %v2166 = vrot.slane %v2160, 5
    %v2167 = vrot.slane %v2160, 6
    %v2168 = vrot.slane %v2160, 7
    %v2177 = vmul.f32 %v2075, %v2160
    %v2178 = vmul.f32 %v2080, %v2162
    %v2179 = vmul.f32 %v2085, %v2163
    %v2180 = vmul.f32 %v2090, %v2164
    %v2181 = vmul.f32 %v2095, %v2165
    %v2182 = vmul.f32 %v2100, %v2166
    %v2183 = vmul.f32 %v2105, %v2167
    %v2184 = vmul.f32 %v2110, %v2168
    %v2193 = vrot.slane %v2178, 7
    %v2194 = vsel %vm193, %v2193, %v2177
    %v2195 = vrot.slane %v2179, 6
    %v2196 = vsel %vm196, %v2195, %v2194
    %v2197 = vrot.slane %v2180, 5
    %v2198 = vsel %vm199, %v2197, %v2196
    %v2199 = vrot.slane %v2181, 4
    %v2200 = vsel %vm202, %v2199, %v2198
    %v2201 = vrot.slane %v2182, 3
    %v2202 = vsel %vm205, %v2201, %v2200
    %v2203 = vrot.slane %v2183, 2
    %v2204 = vsel %vm208, %v2203, %v2202
    %v2205 = vrot.slane %v2184, 1
    %v2206 = vsel %vm211, %v2205, %v2204
    %v2208 = vadd.f32 %v1511, %v2206
    %v2210 = vcombine.high %v2159, %v2159
    %v2212 = vunpack.c.l.s4 1966171168
    %v2213 = vunpack.c.0.s8 %v2212
    %v2214 = vlaneseq
    %v2215 = vshrl.u32 %v2214, 7
    %v2216 = vsub.s32 %v2213, %v2215
    %v2217 = vrot.slane %v2159, %v2216
    %v2219 = vunpack.c.l.s4 1966171168
    %v2220 = vunpack.c.0.s8 %v2219
    %v2221 = vlaneseq
    %v2222 = vshrl.u32 %v2221, 7
    %v2223 = vsub.s32 %v2220, %v2222
    %v2224 = vrot.slane %v2210, %v2223
    %v2225 = vcombine.high %v2217, %v2217
    %v2226 = vcombine.high %v2224, %v2224
    %v2228 = vunpack.c.l.s4 1966171168
    %v2229 = vunpack.c.0.s8 %v2228
    %v2230 = vlaneseq
    %v2231 = vshrl.u32 %v2230, 7
    %v2232 = vsub.s32 %v2229, %v2231
    %v2233 = vrot.slane %v2217, %v2232
    %v2235 = vunpack.c.l.s4 1966171168
    %v2236 = vunpack.c.0.s8 %v2235
    %v2237 = vlaneseq
    %v2238 = vshrl.u32 %v2237, 7
    %v2239 = vsub.s32 %v2236, %v2238
    %v2240 = vrot.slane %v2224, %v2239
    %v2242 = vunpack.c.l.s4 1966171168
    %v2243 = vunpack.c.0.s8 %v2242
    %v2244 = vlaneseq
    %v2245 = vshrl.u32 %v2244, 7
    %v2246 = vsub.s32 %v2243, %v2245
    %v2247 = vrot.slane %v2225, %v2246
    %v2249 = vunpack.c.l.s4 1966171168
    %v2250 = vunpack.c.0.s8 %v2249
    %v2251 = vlaneseq
    %v2252 = vshrl.u32 %v2251, 7
    %v2253 = vsub.s32 %v2250, %v2252
    %v2254 = vrot.slane %v2226, %v2253
    %v2255 = vcombine.high %v2233, %v2233
    %v2256 = vcombine.high %v2240, %v2240
    %v2257 = vcombine.high %v2247, %v2247
    %v2258 = vcombine.high %v2254, %v2254
    %2267 = vst [vmem:[#allocation10 + $0x2] sm:$0x1] %v2233
    %2268 = vst [vmem:[#allocation10 + $0xa] sm:$0x1] %v2247
    %2269 = vst [vmem:[#allocation10 + $0x12] sm:$0x1] %v2255
    %2270 = vst [vmem:[#allocation10 + $0x1a] sm:$0x1] %v2257
    %2271 = vst [vmem:[#allocation10 + $0x22] sm:$0x1] %v2240
    %2272 = vst [vmem:[#allocation10 + $0x2a] sm:$0x1] %v2254
    %2273 = vst [vmem:[#allocation10 + $0x32] sm:$0x1] %v2256
    %2274 = vst [vmem:[#allocation10 + $0x3a] sm:$0x1] %v2258
    %v2275 = vld [vmem:[%s0 + $0x3] sm:$0x1]
    %v2276 = vld [vmem:[%s0 + $0xb] sm:$0x1]
    %v2277 = vld [vmem:[%s0 + $0x13] sm:$0x1]
    %v2278 = vld [vmem:[%s0 + $0x1b] sm:$0x1]
    %v2279 = vld [vmem:[%s0 + $0x23] sm:$0x1]
    %v2280 = vld [vmem:[%s0 + $0x2b] sm:$0x1]
    %v2281 = vld [vmem:[%s0 + $0x33] sm:$0x1]
    %v2282 = vld [vmem:[%s0 + $0x3b] sm:$0x1]
    %v2291 = vrot.slane %v2276, 7
    %v2292 = vsel %vm193, %v2291, %v2275
    %v2293 = vrot.slane %v2277, 6
    %v2294 = vsel %vm196, %v2293, %v2292
    %v2295 = vrot.slane %v2278, 5
    %v2296 = vsel %vm199, %v2295, %v2294
    %v2297 = vrot.slane %v2279, 4
    %v2298 = vsel %vm202, %v2297, %v2296
    %v2299 = vrot.slane %v2280, 3
    %v2300 = vsel %vm205, %v2299, %v2298
    %v2301 = vrot.slane %v2281, 2
    %v2302 = vsel %vm208, %v2301, %v2300
    %v2303 = vrot.slane %v2282, 1
    %v2304 = vsel %vm211, %v2303, %v2302
    %v2305 = vsel %vm213, %v2304, 0
    %2307 = vmatprep.subr.mxu0 %v162
    %2308 = vmatpush1.msra.mxu0 %v161
    %2309 = vmatprep.subr.mxu0 %v167
    %2310 = vmatpush1.msra.mxu0 %v166
    %2311 = vmatprep.subr.mxu0 %v172
    %2312 = vmatpush1.msra.mxu0 %v171
    %2313 = vmatprep.subr.mxu0 0.0
    %2314 = vmatpush1.msra.mxu0 0.0
    %2315 = vmatprep.subr.mxu0 0.0
    %2316 = vmatpush1.msra.mxu0 0.0
    %2317 = vmatprep.subr.mxu0 0.0
    %2318 = vmatpush1.msra.mxu0 0.0
    %2319 = vmatprep.subr.mxu0 0.0
    %2320 = vmatpush1.msra.mxu0 0.0
    %2321 = vmatprep.subr.mxu0 0.0
    %2322 = vmatpush1.msra.mxu0 0.0
    %2323 = vmatprep.subr.mxu0 0.0
    %2324 = vmatpush1.msra.mxu0 0.0
    %2325 = vmatprep.subr.mxu0 0.0
    %2326 = vmatpush1.msra.mxu0 0.0
    %2327 = vmatprep.subr.mxu0 0.0
    %2328 = vmatpush1.msra.mxu0 0.0
    %2329 = vmatprep.subr.mxu0 0.0
    %2330 = vmatpush1.msra.mxu0 0.0
    %2331 = vmatprep.subr.mxu0 0.0
    %2332 = vmatpush1.msra.mxu0 0.0
    %2333 = vmatprep.subr.mxu0 0.0
    %2334 = vmatpush1.msra.mxu0 0.0
    %2335 = vmatprep.subr.mxu0 0.0
    %2336 = vmatpush1.msra.mxu0 0.0
    %2337 = vmatprep.subr.mxu0 0.0
    %2338 = vmatpush1.msra.mxu0 0.0
    %2339 = vmatprep.subr.mxu0 0.0
    %2340 = vmatpush1.msra.mxu0 0.0
    %2341 = vmatprep.subr.mxu0 0.0
    %2342 = vmatpush1.msra.mxu0 0.0
    %2343 = vmatprep.subr.mxu0 0.0
    %2344 = vmatpush1.msra.mxu0 0.0
    %2345 = vmatprep.subr.mxu0 0.0
    %2346 = vmatpush1.msra.mxu0 0.0
    %2347 = vmatprep.subr.mxu0 0.0
    %2348 = vmatpush1.msra.mxu0 0.0
    %2349 = vmatprep.subr.mxu0 0.0
    %2350 = vmatpush1.msra.mxu0 0.0
    %2351 = vmatprep.subr.mxu0 0.0
    %2352 = vmatpush1.msra.mxu0 0.0
    %2353 = vmatprep.subr.mxu0 0.0
    %2354 = vmatpush1.msra.mxu0 0.0
    %2355 = vmatprep.subr.mxu0 0.0
    %2356 = vmatpush1.msra.mxu0 0.0
    %2357 = vmatprep.subr.mxu0 0.0
    %2358 = vmatpush1.msra.mxu0 0.0
    %2359 = vmatprep.subr.mxu0 0.0
    %2360 = vmatpush1.msra.mxu0 0.0
    %2361 = vmatprep.subr.mxu0 0.0
    %2362 = vmatpush1.msra.mxu0 0.0
    %2363 = vmatprep.subr.mxu0 0.0
    %2364 = vmatpush1.msra.mxu0 0.0
    %2365 = vmatprep.subr.mxu0 0.0
    %2366 = vmatpush1.msra.mxu0 0.0
    %2367 = vmatprep.subr.mxu0 0.0
    %2368 = vmatpush1.msra.mxu0 0.0
    %2369 = vmatprep.subr.mxu0 0.0
    %2370 = vmatpush1.msra.mxu0 0.0
    %2371 = vmatprep.mubr.f32.mxu0 0.0
    %2372 = vmatmul.mubr.f32.gmra.mrb[0].mxu0 %v2305
    %v2373 = vpop.f32.mrb[0].mxu0
    %v2374 = vadd.f32 0.0, %v2373
    %v2375 = vpop.f32.mrb[0].mxu0
    %v2376 = vadd.f32 0.0, %v2375
    %2377 = vdwg.mxu0
    %2378 = vmatprep.subr.mxu0 %v164
    %2379 = vmatpush1.msra.mxu0 %v163
    %2380 = vmatprep.subr.mxu0 %v169
    %2381 = vmatpush1.msra.mxu0 %v168
    %2382 = vmatprep.subr.mxu0 %v174
    %2383 = vmatpush1.msra.mxu0 %v173
    %2384 = vmatprep.subr.mxu0 0.0
    %2385 = vmatpush1.msra.mxu0 0.0
    %2386 = vmatprep.subr.mxu0 0.0
    %2387 = vmatpush1.msra.mxu0 0.0
    %2388 = vmatprep.subr.mxu0 0.0
    %2389 = vmatpush1.msra.mxu0 0.0
    %2390 = vmatprep.subr.mxu0 0.0
    %2391 = vmatpush1.msra.mxu0 0.0
    %2392 = vmatprep.subr.mxu0 0.0
    %2393 = vmatpush1.msra.mxu0 0.0
    %2394 = vmatprep.subr.mxu0 0.0
    %2395 = vmatpush1.msra.mxu0 0.0
    %2396 = vmatprep.subr.mxu0 0.0
    %2397 = vmatpush1.msra.mxu0 0.0
    %2398 = vmatprep.subr.mxu0 0.0
    %2399 = vmatpush1.msra.mxu0 0.0
    %2400 = vmatprep.subr.mxu0 0.0
    %2401 = vmatpush1.msra.mxu0 0.0
    %2402 = vmatprep.subr.mxu0 0.0
    %2403 = vmatpush1.msra.mxu0 0.0
    %2404 = vmatprep.subr.mxu0 0.0
    %2405 = vmatpush1.msra.mxu0 0.0
    %2406 = vmatprep.subr.mxu0 0.0
    %2407 = vmatpush1.msra.mxu0 0.0
    %2408 = vmatprep.subr.mxu0 0.0
    %2409 = vmatpush1.msra.mxu0 0.0
    %2410 = vmatprep.subr.mxu0 0.0
    %2411 = vmatpush1.msra.mxu0 0.0
    %2412 = vmatprep.subr.mxu0 0.0
    %2413 = vmatpush1.msra.mxu0 0.0
    %2414 = vmatprep.subr.mxu0 0.0
    %2415 = vmatpush1.msra.mxu0 0.0
    %2416 = vmatprep.subr.mxu0 0.0
    %2417 = vmatpush1.msra.mxu0 0.0
    %2418 = vmatprep.subr.mxu0 0.0
    %2419 = vmatpush1.msra.mxu0 0.0
    %2420 = vmatprep.subr.mxu0 0.0
    %2421 = vmatpush1.msra.mxu0 0.0
    %2422 = vmatprep.subr.mxu0 0.0
    %2423 = vmatpush1.msra.mxu0 0.0
    %2424 = vmatprep.subr.mxu0 0.0
    %2425 = vmatpush1.msra.mxu0 0.0
    %2426 = vmatprep.subr.mxu0 0.0
    %2427 = vmatpush1.msra.mxu0 0.0
    %2428 = vmatprep.subr.mxu0 0.0
    %2429 = vmatpush1.msra.mxu0 0.0
    %2430 = vmatprep.subr.mxu0 0.0
    %2431 = vmatpush1.msra.mxu0 0.0
    %2432 = vmatprep.subr.mxu0 0.0
    %2433 = vmatpush1.msra.mxu0 0.0
    %2434 = vmatprep.subr.mxu0 0.0
    %2435 = vmatpush1.msra.mxu0 0.0
    %2436 = vmatprep.subr.mxu0 0.0
    %2437 = vmatpush1.msra.mxu0 0.0
    %2438 = vmatprep.subr.mxu0 0.0
    %2439 = vmatpush1.msra.mxu0 0.0
    %2440 = vmatprep.subr.mxu0 0.0
    %2441 = vmatpush1.msra.mxu0 0.0
    %2442 = vmatprep.mubr.f32.mxu0 0.0
    %2443 = vmatmul.mubr.f32.gmra.mrb[0].mxu0 %v2305
    %v2444 = vpop.f32.mrb[0].mxu0
    %v2445 = vadd.f32 0.0, %v2444
    %v2446 = vpop.f32.mrb[0].mxu0
    %v2447 = vadd.f32 0.0, %v2446
    %2448 = vdwg.mxu0
    %2449 = vmatprep.subr.mxu0 0.0
    %2450 = vmatpush1.msra.mxu0 %v165
    %2451 = vmatprep.subr.mxu0 0.0
    %2452 = vmatpush1.msra.mxu0 %v170
    %2453 = vmatprep.subr.mxu0 0.0
    %2454 = vmatpush1.msra.mxu0 %v175
    %2455 = vmatprep.subr.mxu0 0.0
    %2456 = vmatpush1.msra.mxu0 0.0
    %2457 = vmatprep.subr.mxu0 0.0
    %2458 = vmatpush1.msra.mxu0 0.0
    %2459 = vmatprep.subr.mxu0 0.0
    %2460 = vmatpush1.msra.mxu0 0.0
    %2461 = vmatprep.subr.mxu0 0.0
    %2462 = vmatpush1.msra.mxu0 0.0
    %2463 = vmatprep.subr.mxu0 0.0
    %2464 = vmatpush1.msra.mxu0 0.0
    %2465 = vmatprep.subr.mxu0 0.0
    %2466 = vmatpush1.msra.mxu0 0.0
    %2467 = vmatprep.subr.mxu0 0.0
    %2468 = vmatpush1.msra.mxu0 0.0
    %2469 = vmatprep.subr.mxu0 0.0
    %2470 = vmatpush1.msra.mxu0 0.0
    %2471 = vmatprep.subr.mxu0 0.0
    %2472 = vmatpush1.msra.mxu0 0.0
    %2473 = vmatprep.subr.mxu0 0.0
    %2474 = vmatpush1.msra.mxu0 0.0
    %2475 = vmatprep.subr.mxu0 0.0
    %2476 = vmatpush1.msra.mxu0 0.0
    %2477 = vmatprep.subr.mxu0 0.0
    %2478 = vmatpush1.msra.mxu0 0.0
    %2479 = vmatprep.subr.mxu0 0.0
    %2480 = vmatpush1.msra.mxu0 0.0
    %2481 = vmatprep.subr.mxu0 0.0
    %2482 = vmatpush1.msra.mxu0 0.0
    %2483 = vmatprep.subr.mxu0 0.0
    %2484 = vmatpush1.msra.mxu0 0.0
    %2485 = vmatprep.subr.mxu0 0.0
    %2486 = vmatpush1.msra.mxu0 0.0
    %2487 = vmatprep.subr.mxu0 0.0
    %2488 = vmatpush1.msra.mxu0 0.0
    %2489 = vmatprep.subr.mxu0 0.0
    %2490 = vmatpush1.msra.mxu0 0.0
    %2491 = vmatprep.subr.mxu0 0.0
    %2492 = vmatpush1.msra.mxu0 0.0
    %2493 = vmatprep.subr.mxu0 0.0
    %2494 = vmatpush1.msra.mxu0 0.0
    %2495 = vmatprep.subr.mxu0 0.0
    %2496 = vmatpush1.msra.mxu0 0.0
    %2497 = vmatprep.subr.mxu0 0.0
    %2498 = vmatpush1.msra.mxu0 0.0
    %2499 = vmatprep.subr.mxu0 0.0
    %2500 = vmatpush1.msra.mxu0 0.0
    %2501 = vmatprep.subr.mxu0 0.0
    %2502 = vmatpush1.msra.mxu0 0.0
    %2503 = vmatprep.subr.mxu0 0.0
    %2504 = vmatpush1.msra.mxu0 0.0
    %2505 = vmatprep.subr.mxu0 0.0
    %2506 = vmatpush1.msra.mxu0 0.0
    %2507 = vmatprep.subr.mxu0 0.0
    %2508 = vmatpush1.msra.mxu0 0.0
    %2509 = vmatprep.subr.mxu0 0.0
    %2510 = vmatpush1.msra.mxu0 0.0
    %2511 = vmatprep.subr.mxu0 0.0
    %2512 = vmatpush1.msra.mxu0 0.0
    %2513 = vmatprep.mubr.f32.mxu0 0.0
    %2514 = vmatmul.mubr.f32.gmra.mrb[0].mxu0 %v2305
    %v2515 = vpop.f32.mrb[0].mxu0
    %v2516 = vadd.f32 0.0, %v2515
    %v2517 = vpop.f32.mrb[0].mxu0
    %2518 = vdwg.mxu0
    %2519 = vmatprep.subr.mxu0 0.0
    %2520 = vmatpush1.msra.mxu0 %v81
    %2521 = vmatprep.subr.mxu0 0.0
    %2522 = vmatpush1.msra.mxu0 %v82
    %2523 = vmatprep.subr.mxu0 0.0
    %2524 = vmatpush1.msra.mxu0 %v83
    %2525 = vmatprep.subr.mxu0 0.0
    %2526 = vmatpush1.msra.mxu0 %v84
    %2527 = vmatprep.subr.mxu0 0.0
    %2528 = vmatpush1.msra.mxu0 %v85
    %2529 = vmatprep.subr.mxu0 0.0
    %2530 = vmatpush1.msra.mxu0 %v86
    %2531 = vmatprep.subr.mxu0 0.0
    %2532 = vmatpush1.msra.mxu0 %v87
    %2533 = vmatprep.subr.mxu0 0.0
    %2534 = vmatpush1.msra.mxu0 %v88
    %2535 = vmatprep.subr.mxu0 0.0
    %2536 = vmatpush1.msra.mxu0 %v89
    %2537 = vmatprep.subr.mxu0 0.0
    %2538 = vmatpush1.msra.mxu0 %v90
    %2539 = vmatprep.subr.mxu0 0.0
    %2540 = vmatpush1.msra.mxu0 %v91
    %2541 = vmatprep.subr.mxu0 0.0
    %2542 = vmatpush1.msra.mxu0 %v92
    %2543 = vmatprep.subr.mxu0 0.0
    %2544 = vmatpush1.msra.mxu0 %v93
    %2545 = vmatprep.subr.mxu0 0.0
    %2546 = vmatpush1.msra.mxu0 %v94
    %2547 = vmatprep.subr.mxu0 0.0
    %2548 = vmatpush1.msra.mxu0 %v95
    %2549 = vmatprep.subr.mxu0 0.0
    %2550 = vmatpush1.msra.mxu0 %v96
    %2551 = vmatprep.subr.mxu0 0.0
    %2552 = vmatpush1.msra.mxu0 0.0
    %2553 = vmatprep.subr.mxu0 0.0
    %2554 = vmatpush1.msra.mxu0 0.0
    %2555 = vmatprep.subr.mxu0 0.0
    %2556 = vmatpush1.msra.mxu0 0.0
    %2557 = vmatprep.subr.mxu0 0.0
    %2558 = vmatpush1.msra.mxu0 0.0
    %2559 = vmatprep.subr.mxu0 0.0
    %2560 = vmatpush1.msra.mxu0 0.0
    %2561 = vmatprep.subr.mxu0 0.0
    %2562 = vmatpush1.msra.mxu0 0.0
    %2563 = vmatprep.subr.mxu0 0.0
    %2564 = vmatpush1.msra.mxu0 0.0
    %2565 = vmatprep.subr.mxu0 0.0
    %2566 = vmatpush1.msra.mxu0 0.0
    %2567 = vmatprep.subr.mxu0 0.0
    %2568 = vmatpush1.msra.mxu0 0.0
    %2569 = vmatprep.subr.mxu0 0.0
    %2570 = vmatpush1.msra.mxu0 0.0
    %2571 = vmatprep.subr.mxu0 0.0
    %2572 = vmatpush1.msra.mxu0 0.0
    %2573 = vmatprep.subr.mxu0 0.0
    %2574 = vmatpush1.msra.mxu0 0.0
    %2575 = vmatprep.subr.mxu0 0.0
    %2576 = vmatpush1.msra.mxu0 0.0
    %2577 = vmatprep.subr.mxu0 0.0
    %2578 = vmatpush1.msra.mxu0 0.0
    %2579 = vmatprep.subr.mxu0 0.0
    %2580 = vmatpush1.msra.mxu0 0.0
    %2581 = vmatprep.subr.mxu0 0.0
    %2582 = vmatpush1.msra.mxu0 0.0
    %2583 = vmatprep.mubr.f32.mxu0 0.0
    %2584 = vmatmul.mubr.f32.gmra.mrb[0].mxu0 %v2159
    %v2585 = vpop.f32.mrb[0].mxu0
    %v2586 = vadd.f32 0.0, %v2585
    %v2587 = vpop.f32.mrb[0].mxu0
    %2588 = vdwg.mxu0
    %v2589 = vmul.f32 %v2374, %v2586
    %2590 = vmatprep.subr.mxu0 %v98
    %2591 = vmatpush1.msra.mxu0 %v97
    %2592 = vmatprep.subr.mxu0 %v102
    %2593 = vmatpush1.msra.mxu0 %v101
    %2594 = vmatprep.subr.mxu0 %v106
    %2595 = vmatpush1.msra.mxu0 %v105
    %2596 = vmatprep.subr.mxu0 %v110
    %2597 = vmatpush1.msra.mxu0 %v109
    %2598 = vmatprep.subr.mxu0 %v114
    %2599 = vmatpush1.msra.mxu0 %v113
    %2600 = vmatprep.subr.mxu0 %v118
    %2601 = vmatpush1.msra.mxu0 %v117
    %2602 = vmatprep.subr.mxu0 %v122
    %2603 = vmatpush1.msra.mxu0 %v121
    %2604 = vmatprep.subr.mxu0 %v126
    %2605 = vmatpush1.msra.mxu0 %v125
    %2606 = vmatprep.subr.mxu0 %v130
    %2607 = vmatpush1.msra.mxu0 %v129
    %2608 = vmatprep.subr.mxu0 %v134
    %2609 = vmatpush1.msra.mxu0 %v133
    %2610 = vmatprep.subr.mxu0 %v138
    %2611 = vmatpush1.msra.mxu0 %v137
    %2612 = vmatprep.subr.mxu0 %v142
    %2613 = vmatpush1.msra.mxu0 %v141
    %2614 = vmatprep.subr.mxu0 %v146
    %2615 = vmatpush1.msra.mxu0 %v145
    %2616 = vmatprep.subr.mxu0 %v150
    %2617 = vmatpush1.msra.mxu0 %v149
    %2618 = vmatprep.subr.mxu0 %v154
    %2619 = vmatpush1.msra.mxu0 %v153
    %2620 = vmatprep.subr.mxu0 %v158
    %2621 = vmatpush1.msra.mxu0 %v157
    %2622 = vmatprep.subr.mxu0 0.0
    %2623 = vmatpush1.msra.mxu0 0.0
    %2624 = vmatprep.subr.mxu0 0.0
    %2625 = vmatpush1.msra.mxu0 0.0
    %2626 = vmatprep.subr.mxu0 0.0
    %2627 = vmatpush1.msra.mxu0 0.0
    %2628 = vmatprep.subr.mxu0 0.0
    %2629 = vmatpush1.msra.mxu0 0.0
    %2630 = vmatprep.subr.mxu0 0.0
    %2631 = vmatpush1.msra.mxu0 0.0
    %2632 = vmatprep.subr.mxu0 0.0
    %2633 = vmatpush1.msra.mxu0 0.0
    %2634 = vmatprep.subr.mxu0 0.0
    %2635 = vmatpush1.msra.mxu0 0.0
    %2636 = vmatprep.subr.mxu0 0.0
    %2637 = vmatpush1.msra.mxu0 0.0
    %2638 = vmatprep.subr.mxu0 0.0
    %2639 = vmatpush1.msra.mxu0 0.0
    %2640 = vmatprep.subr.mxu0 0.0
    %2641 = vmatpush1.msra.mxu0 0.0
    %2642 = vmatprep.subr.mxu0 0.0
    %2643 = vmatpush1.msra.mxu0 0.0
    %2644 = vmatprep.subr.mxu0 0.0
    %2645 = vmatpush1.msra.mxu0 0.0
    %2646 = vmatprep.subr.mxu0 0.0
    %2647 = vmatpush1.msra.mxu0 0.0
    %2648 = vmatprep.subr.mxu0 0.0
    %2649 = vmatpush1.msra.mxu0 0.0
    %2650 = vmatprep.subr.mxu0 0.0
    %2651 = vmatpush1.msra.mxu0 0.0
    %2652 = vmatprep.subr.mxu0 0.0
    %2653 = vmatpush1.msra.mxu0 0.0
    %2654 = vmatprep.mubr.f32.mxu0 0.0
    %2655 = vmatmul.mubr.f32.gmra.mrb[0].mxu0 %v2589
    %v2656 = vpop.f32.mrb[0].mxu0
    %v2657 = vadd.f32 0.0, %v2656
    %v2658 = vpop.f32.mrb[0].mxu0
    %v2659 = vadd.f32 0.0, %v2658
    %2660 = vdwg.mxu0
    %2661 = vmatprep.subr.mxu0 %v100
    %2662 = vmatpush1.msra.mxu0 %v99
    %2663 = vmatprep.subr.mxu0 %v104
    %2664 = vmatpush1.msra.mxu0 %v103
    %2665 = vmatprep.subr.mxu0 %v108
    %2666 = vmatpush1.msra.mxu0 %v107
    %2667 = vmatprep.subr.mxu0 %v112
    %2668 = vmatpush1.msra.mxu0 %v111
    %2669 = vmatprep.subr.mxu0 %v116
    %2670 = vmatpush1.msra.mxu0 %v115
    %2671 = vmatprep.subr.mxu0 %v120
    %2672 = vmatpush1.msra.mxu0 %v119
    %2673 = vmatprep.subr.mxu0 %v124
    %2674 = vmatpush1.msra.mxu0 %v123
    %2675 = vmatprep.subr.mxu0 %v128
    %2676 = vmatpush1.msra.mxu0 %v127
    %2677 = vmatprep.subr.mxu0 %v132
    %2678 = vmatpush1.msra.mxu0 %v131
    %2679 = vmatprep.subr.mxu0 %v136
    %2680 = vmatpush1.msra.mxu0 %v135
    %2681 = vmatprep.subr.mxu0 %v140
    %2682 = vmatpush1.msra.mxu0 %v139
    %2683 = vmatprep.subr.mxu0 %v144
    %2684 = vmatpush1.msra.mxu0 %v143
    %2685 = vmatprep.subr.mxu0 %v148
    %2686 = vmatpush1.msra.mxu0 %v147
    %2687 = vmatprep.subr.mxu0 %v152
    %2688 = vmatpush1.msra.mxu0 %v151
    %2689 = vmatprep.subr.mxu0 %v156
    %2690 = vmatpush1.msra.mxu0 %v155
    %2691 = vmatprep.subr.mxu0 %v160
    %2692 = vmatpush1.msra.mxu0 %v159
    %2693 = vmatprep.subr.mxu0 0.0
    %2694 = vmatpush1.msra.mxu0 0.0
    %2695 = vmatprep.subr.mxu0 0.0
    %2696 = vmatpush1.msra.mxu0 0.0
    %2697 = vmatprep.subr.mxu0 0.0
    %2698 = vmatpush1.msra.mxu0 0.0
    %2699 = vmatprep.subr.mxu0 0.0
    %2700 = vmatpush1.msra.mxu0 0.0
    %2701 = vmatprep.subr.mxu0 0.0
    %2702 = vmatpush1.msra.mxu0 0.0
    %2703 = vmatprep.subr.mxu0 0.0
    %2704 = vmatpush1.msra.mxu0 0.0
    %2705 = vmatprep.subr.mxu0 0.0
    %2706 = vmatpush1.msra.mxu0 0.0
    %2707 = vmatprep.subr.mxu0 0.0
    %2708 = vmatpush1.msra.mxu0 0.0
    %2709 = vmatprep.subr.mxu0 0.0
    %2710 = vmatpush1.msra.mxu0 0.0
    %2711 = vmatprep.subr.mxu0 0.0
    %2712 = vmatpush1.msra.mxu0 0.0
    %2713 = vmatprep.subr.mxu0 0.0
    %2714 = vmatpush1.msra.mxu0 0.0
    %2715 = vmatprep.subr.mxu0 0.0
    %2716 = vmatpush1.msra.mxu0 0.0
    %2717 = vmatprep.subr.mxu0 0.0
    %2718 = vmatpush1.msra.mxu0 0.0
    %2719 = vmatprep.subr.mxu0 0.0
    %2720 = vmatpush1.msra.mxu0 0.0
    %2721 = vmatprep.subr.mxu0 0.0
    %2722 = vmatpush1.msra.mxu0 0.0
    %2723 = vmatprep.subr.mxu0 0.0
    %2724 = vmatpush1.msra.mxu0 0.0
    %2725 = vmatprep.mubr.f32.mxu0 0.0
    %2726 = vmatmul.mubr.f32.gmra.mrb[0].mxu0 %v2589
    %v2727 = vpop.f32.mrb[0].mxu0
    %v2728 = vadd.f32 0.0, %v2727
    %v2729 = vpop.f32.mrb[0].mxu0
    %v2730 = vadd.f32 0.0, %v2729
    %2731 = vdwg.mxu0
    %v2732 = vadd.f32 %v2376, %v2657
    %v2733 = vadd.f32 %v2445, %v2659
    %v2734 = vadd.f32 %v2447, %v2728
    %v2735 = vadd.f32 %v2516, %v2730
    %v2736 = vxor.u32 %v2732, 2147483648
    %v2737 = vmul.f32 %v2736, 1.442695
    %v2738 = vpow.pop %v2737
    %v2739 = vadd.f32 %v2738, 1.0
    %v2740 = vrcp.pop %v2739
    %v2741 = vmul.f32 1.0, %v2740
    %v2742 = vxor.u32 %v2733, 2147483648
    %v2743 = vmul.f32 %v2742, 1.442695
    %v2744 = vpow.pop %v2743
    %v2745 = vadd.f32 %v2744, 1.0
    %v2746 = vrcp.pop %v2745
    %v2747 = vmul.f32 1.0, %v2746
    %v2748 = vxor.u32 %v2734, 2147483648
    %v2749 = vmul.f32 %v2748, 1.442695
    %v2750 = vpow.pop %v2749
    %v2751 = vadd.f32 %v2750, 1.0
    %v2752 = vrcp.pop %v2751
    %v2753 = vmul.f32 1.0, %v2752
    %v2754 = vtanh.pop %v2735
    %v2755 = vmul.f32 %v2747, %v2208
    %v2756 = vmul.f32 %v2741, %v2754
    %v2757 = vadd.f32 %v2755, %v2756
    %v2758 = vtanh.pop %v2757
    %v2759 = vmul.f32 %v2753, %v2758
    %v2760 = vld [vmem:[%s1 + $0x3] sm:$0x1]
    %v2761 = vld [vmem:[%s1 + $0xb] sm:$0x1]
    %v2762 = vld [vmem:[%s1 + $0x13] sm:$0x1]
    %v2763 = vld [vmem:[%s1 + $0x1b] sm:$0x1]
    %v2764 = vld [vmem:[%s1 + $0x23] sm:$0x1]
    %v2765 = vld [vmem:[%s1 + $0x2b] sm:$0x1]
    %v2766 = vld [vmem:[%s1 + $0x33] sm:$0x1]
    %v2767 = vld [vmem:[%s1 + $0x3b] sm:$0x1]
    %v2768 = vsub.f32 %v2759, %v2159
    %2770 = vset.pattern.permute.xlu0 0
    %2771 = vperm.xlu0 %2770, %v2760
    %v2772 = vpop.permute.xlu0 %2771
    %2775 = vset.pattern.permute.xlu0 0
    %2776 = vperm.xlu0 %2775, %v2761
    %v2777 = vpop.permute.xlu0 %2776
    %2780 = vset.pattern.permute.xlu0 0
    %2781 = vperm.xlu0 %2780, %v2762
    %v2782 = vpop.permute.xlu0 %2781
    %2785 = vset.pattern.permute.xlu0 0
    %2786 = vperm.xlu0 %2785, %v2763
    %v2787 = vpop.permute.xlu0 %2786
    %2790 = vset.pattern.permute.xlu0 0
    %2791 = vperm.xlu0 %2790, %v2764
    %v2792 = vpop.permute.xlu0 %2791
    %2795 = vset.pattern.permute.xlu0 0
    %2796 = vperm.xlu0 %2795, %v2765
    %v2797 = vpop.permute.xlu0 %2796
    %2800 = vset.pattern.permute.xlu0 0
    %2801 = vperm.xlu0 %2800, %v2766
    %v2802 = vpop.permute.xlu0 %2801
    %2805 = vset.pattern.permute.xlu0 0
    %2806 = vperm.xlu0 %2805, %v2767
    %v2807 = vpop.permute.xlu0 %2806
    %v2810 = vrot.slane %v2768, 1
    %v2811 = vrot.slane %v2768, 2
    %v2812 = vrot.slane %v2768, 3
    %v2813 = vrot.slane %v2768, 4
    %v2814 = vrot.slane %v2768, 5
    %v2815 = vrot.slane %v2768, 6
    %v2816 = vrot.slane %v2768, 7
    %v2825 = vmul.f32 %v2772, %v2768
    %v2826 = vmul.f32 %v2777, %v2810
    %v2827 = vmul.f32 %v2782, %v2811
    %v2828 = vmul.f32 %v2787, %v2812
    %v2829 = vmul.f32 %v2792, %v2813
    %v2830 = vmul.f32 %v2797, %v2814
    %v2831 = vmul.f32 %v2802, %v2815
    %v2832 = vmul.f32 %v2807, %v2816
    %v2841 = vrot.slane %v2826, 7
    %v2842 = vsel %vm193, %v2841, %v2825
    %v2843 = vrot.slane %v2827, 6
    %v2844 = vsel %vm196, %v2843, %v2842
    %v2845 = vrot.slane %v2828, 5
    %v2846 = vsel %vm199, %v2845, %v2844
    %v2847 = vrot.slane %v2829, 4
    %v2848 = vsel %vm202, %v2847, %v2846
    %v2849 = vrot.slane %v2830, 3
    %v2850 = vsel %vm205, %v2849, %v2848
    %v2851 = vrot.slane %v2831, 2
    %v2852 = vsel %vm208, %v2851, %v2850
    %v2853 = vrot.slane %v2832, 1
    %v2854 = vsel %vm211, %v2853, %v2852
    %v2856 = vadd.f32 %v2159, %v2854
    %v2857 = vsub.f32 %v2757, %v2208
    %v2859 = vrot.slane %v2857, 1
    %v2860 = vrot.slane %v2857, 2
    %v2861 = vrot.slane %v2857, 3
    %v2862 = vrot.slane %v2857, 4
    %v2863 = vrot.slane %v2857, 5
    %v2864 = vrot.slane %v2857, 6
    %v2865 = vrot.slane %v2857, 7
    %v2874 = vmul.f32 %v2772, %v2857
    %v2875 = vmul.f32 %v2777, %v2859
    %v2876 = vmul.f32 %v2782, %v2860
    %v2877 = vmul.f32 %v2787, %v2861
    %v2878 = vmul.f32 %v2792, %v2862
    %v2879 = vmul.f32 %v2797, %v2863
    %v2880 = vmul.f32 %v2802, %v2864
    %v2881 = vmul.f32 %v2807, %v2865
    %v2890 = vrot.slane %v2875, 7
    %v2891 = vsel %vm193, %v2890, %v2874
    %v2892 = vrot.slane %v2876, 6
    %v2893 = vsel %vm196, %v2892, %v2891
    %v2894 = vrot.slane %v2877, 5
    %v2895 = vsel %vm199, %v2894, %v2893
    %v2896 = vrot.slane %v2878, 4
    %v2897 = vsel %vm202, %v2896, %v2895
    %v2898 = vrot.slane %v2879, 3
    %v2899 = vsel %vm205, %v2898, %v2897
    %v2900 = vrot.slane %v2880, 2
    %v2901 = vsel %vm208, %v2900, %v2899
    %v2902 = vrot.slane %v2881, 1
    %v2903 = vsel %vm211, %v2902, %v2901
    %v2905 = vadd.f32 %v2208, %v2903
    %v2907 = vcombine.high %v2856, %v2856
    %v2909 = vunpack.c.l.s4 1966171168
    %v2910 = vunpack.c.0.s8 %v2909
    %v2911 = vlaneseq
    %v2912 = vshrl.u32 %v2911, 7
    %v2913 = vsub.s32 %v2910, %v2912
    %v2914 = vrot.slane %v2856, %v2913
    %v2916 = vunpack.c.l.s4 1966171168
    %v2917 = vunpack.c.0.s8 %v2916
    %v2918 = vlaneseq
    %v2919 = vshrl.u32 %v2918, 7
    %v2920 = vsub.s32 %v2917, %v2919
    %v2921 = vrot.slane %v2907, %v2920
    %v2922 = vcombine.high %v2914, %v2914
    %v2923 = vcombine.high %v2921, %v2921
    %v2925 = vunpack.c.l.s4 1966171168
    %v2926 = vunpack.c.0.s8 %v2925
    %v2927 = vlaneseq
    %v2928 = vshrl.u32 %v2927, 7
    %v2929 = vsub.s32 %v2926, %v2928
    %v2930 = vrot.slane %v2914, %v2929
    %v2932 = vunpack.c.l.s4 1966171168
    %v2933 = vunpack.c.0.s8 %v2932
    %v2934 = vlaneseq
    %v2935 = vshrl.u32 %v2934, 7
    %v2936 = vsub.s32 %v2933, %v2935
    %v2937 = vrot.slane %v2921, %v2936
    %v2939 = vunpack.c.l.s4 1966171168
    %v2940 = vunpack.c.0.s8 %v2939
    %v2941 = vlaneseq
    %v2942 = vshrl.u32 %v2941, 7
    %v2943 = vsub.s32 %v2940, %v2942
    %v2944 = vrot.slane %v2922, %v2943
    %v2946 = vunpack.c.l.s4 1966171168
    %v2947 = vunpack.c.0.s8 %v2946
    %v2948 = vlaneseq
    %v2949 = vshrl.u32 %v2948, 7
    %v2950 = vsub.s32 %v2947, %v2949
    %v2951 = vrot.slane %v2923, %v2950
    %v2952 = vcombine.high %v2930, %v2930
    %v2953 = vcombine.high %v2937, %v2937
    %v2954 = vcombine.high %v2944, %v2944
    %v2955 = vcombine.high %v2951, %v2951
    %2964 = vst [vmem:[#allocation10 + $0x3] sm:$0x1] %v2930
    %2965 = vst [vmem:[#allocation10 + $0xb] sm:$0x1] %v2944
    %2966 = vst [vmem:[#allocation10 + $0x13] sm:$0x1] %v2952
    %2967 = vst [vmem:[#allocation10 + $0x1b] sm:$0x1] %v2954
    %2968 = vst [vmem:[#allocation10 + $0x23] sm:$0x1] %v2937
    %2969 = vst [vmem:[#allocation10 + $0x2b] sm:$0x1] %v2951
    %2970 = vst [vmem:[#allocation10 + $0x33] sm:$0x1] %v2953
    %2971 = vst [vmem:[#allocation10 + $0x3b] sm:$0x1] %v2955
    %v2972 = vld [vmem:[%s0 + $0x4] sm:$0x1]
    %v2973 = vld [vmem:[%s0 + $0xc] sm:$0x1]
    %v2974 = vld [vmem:[%s0 + $0x14] sm:$0x1]
    %v2975 = vld [vmem:[%s0 + $0x1c] sm:$0x1]
    %v2976 = vld [vmem:[%s0 + $0x24] sm:$0x1]
    %v2977 = vld [vmem:[%s0 + $0x2c] sm:$0x1]
    %v2978 = vld [vmem:[%s0 + $0x34] sm:$0x1]
    %v2979 = vld [vmem:[%s0 + $0x3c] sm:$0x1]
    %v2988 = vrot.slane %v2973, 7
    %v2989 = vsel %vm193, %v2988, %v2972
    %v2990 = vrot.slane %v2974, 6
    %v2991 = vsel %vm196, %v2990, %v2989
    %v2992 = vrot.slane %v2975, 5
    %v2993 = vsel %vm199, %v2992, %v2991
    %v2994 = vrot.slane %v2976, 4
    %v2995 = vsel %vm202, %v2994, %v2993
    %v2996 = vrot.slane %v2977, 3
    %v2997 = vsel %vm205, %v2996, %v2995
    %v2998 = vrot.slane %v2978, 2
    %v2999 = vsel %vm208, %v2998, %v2997
    %v3000 = vrot.slane %v2979, 1
    %v3001 = vsel %vm211, %v3000, %v2999
    %v3002 = vsel %vm213, %v3001, 0
    %3004 = vmatprep.subr.mxu0 %v162
    %3005 = vmatpush1.msra.mxu0 %v161
    %3006 = vmatprep.subr.mxu0 %v167
    %3007 = vmatpush1.msra.mxu0 %v166
    %3008 = vmatprep.subr.mxu0 %v172
    %3009 = vmatpush1.msra.mxu0 %v171
    %3010 = vmatprep.subr.mxu0 0.0
    %3011 = vmatpush1.msra.mxu0 0.0
    %3012 = vmatprep.subr.mxu0 0.0
    %3013 = vmatpush1.msra.mxu0 0.0
    %3014 = vmatprep.subr.mxu0 0.0
    %3015 = vmatpush1.msra.mxu0 0.0
    %3016 = vmatprep.subr.mxu0 0.0
    %3017 = vmatpush1.msra.mxu0 0.0
    %3018 = vmatprep.subr.mxu0 0.0
    %3019 = vmatpush1.msra.mxu0 0.0
    %3020 = vmatprep.subr.mxu0 0.0
    %3021 = vmatpush1.msra.mxu0 0.0
    %3022 = vmatprep.subr.mxu0 0.0
    %3023 = vmatpush1.msra.mxu0 0.0
    %3024 = vmatprep.subr.mxu0 0.0
    %3025 = vmatpush1.msra.mxu0 0.0
    %3026 = vmatprep.subr.mxu0 0.0
    %3027 = vmatpush1.msra.mxu0 0.0
    %3028 = vmatprep.subr.mxu0 0.0
    %3029 = vmatpush1.msra.mxu0 0.0
    %3030 = vmatprep.subr.mxu0 0.0
    %3031 = vmatpush1.msra.mxu0 0.0
    %3032 = vmatprep.subr.mxu0 0.0
    %3033 = vmatpush1.msra.mxu0 0.0
    %3034 = vmatprep.subr.mxu0 0.0
    %3035 = vmatpush1.msra.mxu0 0.0
    %3036 = vmatprep.subr.mxu0 0.0
    %3037 = vmatpush1.msra.mxu0 0.0
    %3038 = vmatprep.subr.mxu0 0.0
    %3039 = vmatpush1.msra.mxu0 0.0
    %3040 = vmatprep.subr.mxu0 0.0
    %3041 = vmatpush1.msra.mxu0 0.0
    %3042 = vmatprep.subr.mxu0 0.0
    %3043 = vmatpush1.msra.mxu0 0.0
    %3044 = vmatprep.subr.mxu0 0.0
    %3045 = vmatpush1.msra.mxu0 0.0
    %3046 = vmatprep.subr.mxu0 0.0
    %3047 = vmatpush1.msra.mxu0 0.0
    %3048 = vmatprep.subr.mxu0 0.0
    %3049 = vmatpush1.msra.mxu0 0.0
    %3050 = vmatprep.subr.mxu0 0.0
    %3051 = vmatpush1.msra.mxu0 0.0
    %3052 = vmatprep.subr.mxu0 0.0
    %3053 = vmatpush1.msra.mxu0 0.0
    %3054 = vmatprep.subr.mxu0 0.0
    %3055 = vmatpush1.msra.mxu0 0.0
    %3056 = vmatprep.subr.mxu0 0.0
    %3057 = vmatpush1.msra.mxu0 0.0
    %3058 = vmatprep.subr.mxu0 0.0
    %3059 = vmatpush1.msra.mxu0 0.0
    %3060 = vmatprep.subr.mxu0 0.0
    %3061 = vmatpush1.msra.mxu0 0.0
    %3062 = vmatprep.subr.mxu0 0.0
    %3063 = vmatpush1.msra.mxu0 0.0
    %3064 = vmatprep.subr.mxu0 0.0
    %3065 = vmatpush1.msra.mxu0 0.0
    %3066 = vmatprep.subr.mxu0 0.0
    %3067 = vmatpush1.msra.mxu0 0.0
    %3068 = vmatprep.mubr.f32.mxu0 0.0
    %3069 = vmatmul.mubr.f32.gmra.mrb[0].mxu0 %v3002
    %v3070 = vpop.f32.mrb[0].mxu0
    %v3071 = vadd.f32 0.0, %v3070
    %v3072 = vpop.f32.mrb[0].mxu0
    %v3073 = vadd.f32 0.0, %v3072
    %3074 = vdwg.mxu0
    %3075 = vmatprep.subr.mxu0 %v164
    %3076 = vmatpush1.msra.mxu0 %v163
    %3077 = vmatprep.subr.mxu0 %v169
    %3078 = vmatpush1.msra.mxu0 %v168
    %3079 = vmatprep.subr.mxu0 %v174
    %3080 = vmatpush1.msra.mxu0 %v173
    %3081 = vmatprep.subr.mxu0 0.0
    %3082 = vmatpush1.msra.mxu0 0.0
    %3083 = vmatprep.subr.mxu0 0.0
    %3084 = vmatpush1.msra.mxu0 0.0
    %3085 = vmatprep.subr.mxu0 0.0
    %3086 = vmatpush1.msra.mxu0 0.0
    %3087 = vmatprep.subr.mxu0 0.0
    %3088 = vmatpush1.msra.mxu0 0.0
    %3089 = vmatprep.subr.mxu0 0.0
    %3090 = vmatpush1.msra.mxu0 0.0
    %3091 = vmatprep.subr.mxu0 0.0
    %3092 = vmatpush1.msra.mxu0 0.0
    %3093 = vmatprep.subr.mxu0 0.0
    %3094 = vmatpush1.msra.mxu0 0.0
    %3095 = vmatprep.subr.mxu0 0.0
    %3096 = vmatpush1.msra.mxu0 0.0
    %3097 = vmatprep.subr.mxu0 0.0
    %3098 = vmatpush1.msra.mxu0 0.0
    %3099 = vmatprep.subr.mxu0 0.0
    %3100 = vmatpush1.msra.mxu0 0.0
    %3101 = vmatprep.subr.mxu0 0.0
    %3102 = vmatpush1.msra.mxu0 0.0
    %3103 = vmatprep.subr.mxu0 0.0
    %3104 = vmatpush1.msra.mxu0 0.0
    %3105 = vmatprep.subr.mxu0 0.0
    %3106 = vmatpush1.msra.mxu0 0.0
    %3107 = vmatprep.subr.mxu0 0.0
    %3108 = vmatpush1.msra.mxu0 0.0
    %3109 = vmatprep.subr.mxu0 0.0
    %3110 = vmatpush1.msra.mxu0 0.0
    %3111 = vmatprep.subr.mxu0 0.0
    %3112 = vmatpush1.msra.mxu0 0.0
    %3113 = vmatprep.subr.mxu0 0.0
    %3114 = vmatpush1.msra.mxu0 0.0
    %3115 = vmatprep.subr.mxu0 0.0
    %3116 = vmatpush1.msra.mxu0 0.0
    %3117 = vmatprep.subr.mxu0 0.0
    %3118 = vmatpush1.msra.mxu0 0.0
    %3119 = vmatprep.subr.mxu0 0.0
    %3120 = vmatpush1.msra.mxu0 0.0
    %3121 = vmatprep.subr.mxu0 0.0
    %3122 = vmatpush1.msra.mxu0 0.0
    %3123 = vmatprep.subr.mxu0 0.0
    %3124 = vmatpush1.msra.mxu0 0.0
    %3125 = vmatprep.subr.mxu0 0.0
    %3126 = vmatpush1.msra.mxu0 0.0
    %3127 = vmatprep.subr.mxu0 0.0
    %3128 = vmatpush1.msra.mxu0 0.0
    %3129 = vmatprep.subr.mxu0 0.0
    %3130 = vmatpush1.msra.mxu0 0.0
    %3131 = vmatprep.subr.mxu0 0.0
    %3132 = vmatpush1.msra.mxu0 0.0
    %3133 = vmatprep.subr.mxu0 0.0
    %3134 = vmatpush1.msra.mxu0 0.0
    %3135 = vmatprep.subr.mxu0 0.0
    %3136 = vmatpush1.msra.mxu0 0.0
    %3137 = vmatprep.subr.mxu0 0.0
    %3138 = vmatpush1.msra.mxu0 0.0
    %3139 = vmatprep.mubr.f32.mxu0 0.0
    %3140 = vmatmul.mubr.f32.gmra.mrb[0].mxu0 %v3002
    %v3141 = vpop.f32.mrb[0].mxu0
    %v3142 = vadd.f32 0.0, %v3141
    %v3143 = vpop.f32.mrb[0].mxu0
    %v3144 = vadd.f32 0.0, %v3143
    %3145 = vdwg.mxu0
    %3146 = vmatprep.subr.mxu0 0.0
    %3147 = vmatpush1.msra.mxu0 %v165
    %3148 = vmatprep.subr.mxu0 0.0
    %3149 = vmatpush1.msra.mxu0 %v170
    %3150 = vmatprep.subr.mxu0 0.0
    %3151 = vmatpush1.msra.mxu0 %v175
    %3152 = vmatprep.subr.mxu0 0.0
    %3153 = vmatpush1.msra.mxu0 0.0
    %3154 = vmatprep.subr.mxu0 0.0
    %3155 = vmatpush1.msra.mxu0 0.0
    %3156 = vmatprep.subr.mxu0 0.0
    %3157 = vmatpush1.msra.mxu0 0.0
    %3158 = vmatprep.subr.mxu0 0.0
    %3159 = vmatpush1.msra.mxu0 0.0
    %3160 = vmatprep.subr.mxu0 0.0
    %3161 = vmatpush1.msra.mxu0 0.0
    %3162 = vmatprep.subr.mxu0 0.0
    %3163 = vmatpush1.msra.mxu0 0.0
    %3164 = vmatprep.subr.mxu0 0.0
    %3165 = vmatpush1.msra.mxu0 0.0
    %3166 = vmatprep.subr.mxu0 0.0
    %3167 = vmatpush1.msra.mxu0 0.0
    %3168 = vmatprep.subr.mxu0 0.0
    %3169 = vmatpush1.msra.mxu0 0.0
    %3170 = vmatprep.subr.mxu0 0.0
    %3171 = vmatpush1.msra.mxu0 0.0
    %3172 = vmatprep.subr.mxu0 0.0
    %3173 = vmatpush1.msra.mxu0 0.0
    %3174 = vmatprep.subr.mxu0 0.0
    %3175 = vmatpush1.msra.mxu0 0.0
    %3176 = vmatprep.subr.mxu0 0.0
    %3177 = vmatpush1.msra.mxu0 0.0
    %3178 = vmatprep.subr.mxu0 0.0
    %3179 = vmatpush1.msra.mxu0 0.0
    %3180 = vmatprep.subr.mxu0 0.0
    %3181 = vmatpush1.msra.mxu0 0.0
    %3182 = vmatprep.subr.mxu0 0.0
    %3183 = vmatpush1.msra.mxu0 0.0
    %3184 = vmatprep.subr.mxu0 0.0
    %3185 = vmatpush1.msra.mxu0 0.0
    %3186 = vmatprep.subr.mxu0 0.0
    %3187 = vmatpush1.msra.mxu0 0.0
    %3188 = vmatprep.subr.mxu0 0.0
    %3189 = vmatpush1.msra.mxu0 0.0
    %3190 = vmatprep.subr.mxu0 0.0
    %3191 = vmatpush1.msra.mxu0 0.0
    %3192 = vmatprep.subr.mxu0 0.0
    %3193 = vmatpush1.msra.mxu0 0.0
    %3194 = vmatprep.subr.mxu0 0.0
    %3195 = vmatpush1.msra.mxu0 0.0
    %3196 = vmatprep.subr.mxu0 0.0
    %3197 = vmatpush1.msra.mxu0 0.0
    %3198 = vmatprep.subr.mxu0 0.0
    %3199 = vmatpush1.msra.mxu0 0.0
    %3200 = vmatprep.subr.mxu0 0.0
    %3201 = vmatpush1.msra.mxu0 0.0
    %3202 = vmatprep.subr.mxu0 0.0
    %3203 = vmatpush1.msra.mxu0 0.0
    %3204 = vmatprep.subr.mxu0 0.0
    %3205 = vmatpush1.msra.mxu0 0.0
    %3206 = vmatprep.subr.mxu0 0.0
    %3207 = vmatpush1.msra.mxu0 0.0
    %3208 = vmatprep.subr.mxu0 0.0
    %3209 = vmatpush1.msra.mxu0 0.0
    %3210 = vmatprep.mubr.f32.mxu0 0.0
    %3211 = vmatmul.mubr.f32.gmra.mrb[0].mxu0 %v3002
    %v3212 = vpop.f32.mrb[0].mxu0
    %v3213 = vadd.f32 0.0, %v3212
    %v3214 = vpop.f32.mrb[0].mxu0
    %3215 = vdwg.mxu0
    %3216 = vmatprep.subr.mxu0 0.0
    %3217 = vmatpush1.msra.mxu0 %v81
    %3218 = vmatprep.subr.mxu0 0.0
    %3219 = vmatpush1.msra.mxu0 %v82
    %3220 = vmatprep.subr.mxu0 0.0
    %3221 = vmatpush1.msra.mxu0 %v83
    %3222 = vmatprep.subr.mxu0 0.0
    %3223 = vmatpush1.msra.mxu0 %v84
    %3224 = vmatprep.subr.mxu0 0.0
    %3225 = vmatpush1.msra.mxu0 %v85
    %3226 = vmatprep.subr.mxu0 0.0
    %3227 = vmatpush1.msra.mxu0 %v86
    %3228 = vmatprep.subr.mxu0 0.0
    %3229 = vmatpush1.msra.mxu0 %v87
    %3230 = vmatprep.subr.mxu0 0.0
    %3231 = vmatpush1.msra.mxu0 %v88
    %3232 = vmatprep.subr.mxu0 0.0
    %3233 = vmatpush1.msra.mxu0 %v89
    %3234 = vmatprep.subr.mxu0 0.0
    %3235 = vmatpush1.msra.mxu0 %v90
    %3236 = vmatprep.subr.mxu0 0.0
    %3237 = vmatpush1.msra.mxu0 %v91
    %3238 = vmatprep.subr.mxu0 0.0
    %3239 = vmatpush1.msra.mxu0 %v92
    %3240 = vmatprep.subr.mxu0 0.0
    %3241 = vmatpush1.msra.mxu0 %v93
    %3242 = vmatprep.subr.mxu0 0.0
    %3243 = vmatpush1.msra.mxu0 %v94
    %3244 = vmatprep.subr.mxu0 0.0
    %3245 = vmatpush1.msra.mxu0 %v95
    %3246 = vmatprep.subr.mxu0 0.0
    %3247 = vmatpush1.msra.mxu0 %v96
    %3248 = vmatprep.subr.mxu0 0.0
    %3249 = vmatpush1.msra.mxu0 0.0
    %3250 = vmatprep.subr.mxu0 0.0
    %3251 = vmatpush1.msra.mxu0 0.0
    %3252 = vmatprep.subr.mxu0 0.0
    %3253 = vmatpush1.msra.mxu0 0.0
    %3254 = vmatprep.subr.mxu0 0.0
    %3255 = vmatpush1.msra.mxu0 0.0
    %3256 = vmatprep.subr.mxu0 0.0
    %3257 = vmatpush1.msra.mxu0 0.0
    %3258 = vmatprep.subr.mxu0 0.0
    %3259 = vmatpush1.msra.mxu0 0.0
    %3260 = vmatprep.subr.mxu0 0.0
    %3261 = vmatpush1.msra.mxu0 0.0
    %3262 = vmatprep.subr.mxu0 0.0
    %3263 = vmatpush1.msra.mxu0 0.0
    %3264 = vmatprep.subr.mxu0 0.0
    %3265 = vmatpush1.msra.mxu0 0.0
    %3266 = vmatprep.subr.mxu0 0.0
    %3267 = vmatpush1.msra.mxu0 0.0
    %3268 = vmatprep.subr.mxu0 0.0
    %3269 = vmatpush1.msra.mxu0 0.0
    %3270 = vmatprep.subr.mxu0 0.0
    %3271 = vmatpush1.msra.mxu0 0.0
    %3272 = vmatprep.subr.mxu0 0.0
    %3273 = vmatpush1.msra.mxu0 0.0
    %3274 = vmatprep.subr.mxu0 0.0
    %3275 = vmatpush1.msra.mxu0 0.0
    %3276 = vmatprep.subr.mxu0 0.0
    %3277 = vmatpush1.msra.mxu0 0.0
    %3278 = vmatprep.subr.mxu0 0.0
    %3279 = vmatpush1.msra.mxu0 0.0
    %3280 = vmatprep.mubr.f32.mxu0 0.0
    %3281 = vmatmul.mubr.f32.gmra.mrb[0].mxu0 %v2856
    %v3282 = vpop.f32.mrb[0].mxu0
    %v3283 = vadd.f32 0.0, %v3282
    %v3284 = vpop.f32.mrb[0].mxu0
    %3285 = vdwg.mxu0
    %v3286 = vmul.f32 %v3071, %v3283
    %3287 = vmatprep.subr.mxu0 %v98
    %3288 = vmatpush1.msra.mxu0 %v97
    %3289 = vmatprep.subr.mxu0 %v102
    %3290 = vmatpush1.msra.mxu0 %v101
    %3291 = vmatprep.subr.mxu0 %v106
    %3292 = vmatpush1.msra.mxu0 %v105
    %3293 = vmatprep.subr.mxu0 %v110
    %3294 = vmatpush1.msra.mxu0 %v109
    %3295 = vmatprep.subr.mxu0 %v114
    %3296 = vmatpush1.msra.mxu0 %v113
    %3297 = vmatprep.subr.mxu0 %v118
    %3298 = vmatpush1.msra.mxu0 %v117
    %3299 = vmatprep.subr.mxu0 %v122
    %3300 = vmatpush1.msra.mxu0 %v121
    %3301 = vmatprep.subr.mxu0 %v126
    %3302 = vmatpush1.msra.mxu0 %v125
    %3303 = vmatprep.subr.mxu0 %v130
    %3304 = vmatpush1.msra.mxu0 %v129
    %3305 = vmatprep.subr.mxu0 %v134
    %3306 = vmatpush1.msra.mxu0 %v133
    %3307 = vmatprep.subr.mxu0 %v138
    %3308 = vmatpush1.msra.mxu0 %v137
    %3309 = vmatprep.subr.mxu0 %v142
    %3310 = vmatpush1.msra.mxu0 %v141
    %3311 = vmatprep.subr.mxu0 %v146
    %3312 = vmatpush1.msra.mxu0 %v145
    %3313 = vmatprep.subr.mxu0 %v150
    %3314 = vmatpush1.msra.mxu0 %v149
    %3315 = vmatprep.subr.mxu0 %v154
    %3316 = vmatpush1.msra.mxu0 %v153
    %3317 = vmatprep.subr.mxu0 %v158
    %3318 = vmatpush1.msra.mxu0 %v157
    %3319 = vmatprep.subr.mxu0 0.0
    %3320 = vmatpush1.msra.mxu0 0.0
    %3321 = vmatprep.subr.mxu0 0.0
    %3322 = vmatpush1.msra.mxu0 0.0
    %3323 = vmatprep.subr.mxu0 0.0
    %3324 = vmatpush1.msra.mxu0 0.0
    %3325 = vmatprep.subr.mxu0 0.0
    %3326 = vmatpush1.msra.mxu0 0.0
    %3327 = vmatprep.subr.mxu0 0.0
    %3328 = vmatpush1.msra.mxu0 0.0
    %3329 = vmatprep.subr.mxu0 0.0
    %3330 = vmatpush1.msra.mxu0 0.0
    %3331 = vmatprep.subr.mxu0 0.0
    %3332 = vmatpush1.msra.mxu0 0.0
    %3333 = vmatprep.subr.mxu0 0.0
    %3334 = vmatpush1.msra.mxu0 0.0
    %3335 = vmatprep.subr.mxu0 0.0
    %3336 = vmatpush1.msra.mxu0 0.0
    %3337 = vmatprep.subr.mxu0 0.0
    %3338 = vmatpush1.msra.mxu0 0.0
    %3339 = vmatprep.subr.mxu0 0.0
    %3340 = vmatpush1.msra.mxu0 0.0
    %3341 = vmatprep.subr.mxu0 0.0
    %3342 = vmatpush1.msra.mxu0 0.0
    %3343 = vmatprep.subr.mxu0 0.0
    %3344 = vmatpush1.msra.mxu0 0.0
    %3345 = vmatprep.subr.mxu0 0.0
    %3346 = vmatpush1.msra.mxu0 0.0
    %3347 = vmatprep.subr.mxu0 0.0
    %3348 = vmatpush1.msra.mxu0 0.0
    %3349 = vmatprep.subr.mxu0 0.0
    %3350 = vmatpush1.msra.mxu0 0.0
    %3351 = vmatprep.mubr.f32.mxu0 0.0
    %3352 = vmatmul.mubr.f32.gmra.mrb[0].mxu0 %v3286
    %v3353 = vpop.f32.mrb[0].mxu0
    %v3354 = vadd.f32 0.0, %v3353
    %v3355 = vpop.f32.mrb[0].mxu0
    %v3356 = vadd.f32 0.0, %v3355
    %3357 = vdwg.mxu0
    %3358 = vmatprep.subr.mxu0 %v100
    %3359 = vmatpush1.msra.mxu0 %v99
    %3360 = vmatprep.subr.mxu0 %v104
    %3361 = vmatpush1.msra.mxu0 %v103
    %3362 = vmatprep.subr.mxu0 %v108
    %3363 = vmatpush1.msra.mxu0 %v107
    %3364 = vmatprep.subr.mxu0 %v112
    %3365 = vmatpush1.msra.mxu0 %v111
    %3366 = vmatprep.subr.mxu0 %v116
    %3367 = vmatpush1.msra.mxu0 %v115
    %3368 = vmatprep.subr.mxu0 %v120
    %3369 = vmatpush1.msra.mxu0 %v119
    %3370 = vmatprep.subr.mxu0 %v124
    %3371 = vmatpush1.msra.mxu0 %v123
    %3372 = vmatprep.subr.mxu0 %v128
    %3373 = vmatpush1.msra.mxu0 %v127
    %3374 = vmatprep.subr.mxu0 %v132
    %3375 = vmatpush1.msra.mxu0 %v131
    %3376 = vmatprep.subr.mxu0 %v136
    %3377 = vmatpush1.msra.mxu0 %v135
    %3378 = vmatprep.subr.mxu0 %v140
    %3379 = vmatpush1.msra.mxu0 %v139
    %3380 = vmatprep.subr.mxu0 %v144
    %3381 = vmatpush1.msra.mxu0 %v143
    %3382 = vmatprep.subr.mxu0 %v148
    %3383 = vmatpush1.msra.mxu0 %v147
    %3384 = vmatprep.subr.mxu0 %v152
    %3385 = vmatpush1.msra.mxu0 %v151
    %3386 = vmatprep.subr.mxu0 %v156
    %3387 = vmatpush1.msra.mxu0 %v155
    %3388 = vmatprep.subr.mxu0 %v160
    %3389 = vmatpush1.msra.mxu0 %v159
    %3390 = vmatprep.subr.mxu0 0.0
    %3391 = vmatpush1.msra.mxu0 0.0
    %3392 = vmatprep.subr.mxu0 0.0
    %3393 = vmatpush1.msra.mxu0 0.0
    %3394 = vmatprep.subr.mxu0 0.0
    %3395 = vmatpush1.msra.mxu0 0.0
    %3396 = vmatprep.subr.mxu0 0.0
    %3397 = vmatpush1.msra.mxu0 0.0
    %3398 = vmatprep.subr.mxu0 0.0
    %3399 = vmatpush1.msra.mxu0 0.0
    %3400 = vmatprep.subr.mxu0 0.0
    %3401 = vmatpush1.msra.mxu0 0.0
    %3402 = vmatprep.subr.mxu0 0.0
    %3403 = vmatpush1.msra.mxu0 0.0
    %3404 = vmatprep.subr.mxu0 0.0
    %3405 = vmatpush1.msra.mxu0 0.0
    %3406 = vmatprep.subr.mxu0 0.0
    %3407 = vmatpush1.msra.mxu0 0.0
    %3408 = vmatprep.subr.mxu0 0.0
    %3409 = vmatpush1.msra.mxu0 0.0
    %3410 = vmatprep.subr.mxu0 0.0
    %3411 = vmatpush1.msra.mxu0 0.0
    %3412 = vmatprep.subr.mxu0 0.0
    %3413 = vmatpush1.msra.mxu0 0.0
    %3414 = vmatprep.subr.mxu0 0.0
    %3415 = vmatpush1.msra.mxu0 0.0
    %3416 = vmatprep.subr.mxu0 0.0
    %3417 = vmatpush1.msra.mxu0 0.0
    %3418 = vmatprep.subr.mxu0 0.0
    %3419 = vmatpush1.msra.mxu0 0.0
    %3420 = vmatprep.subr.mxu0 0.0
    %3421 = vmatpush1.msra.mxu0 0.0
    %3422 = vmatprep.mubr.f32.mxu0 0.0
    %3423 = vmatmul.mubr.f32.gmra.mrb[0].mxu0 %v3286
    %v3424 = vpop.f32.mrb[0].mxu0
    %v3425 = vadd.f32 0.0, %v3424
    %v3426 = vpop.f32.mrb[0].mxu0
    %v3427 = vadd.f32 0.0, %v3426
    %3428 = vdwg.mxu0
    %v3429 = vadd.f32 %v3073, %v3354
    %v3430 = vadd.f32 %v3142, %v3356
    %v3431 = vadd.f32 %v3144, %v3425
    %v3432 = vadd.f32 %v3213, %v3427
    %v3433 = vxor.u32 %v3429, 2147483648
    %v3434 = vmul.f32 %v3433, 1.442695
    %v3435 = vpow.pop %v3434
    %v3436 = vadd.f32 %v3435, 1.0
    %v3437 = vrcp.pop %v3436
    %v3438 = vmul.f32 1.0, %v3437
    %v3439 = vxor.u32 %v3430, 2147483648
    %v3440 = vmul.f32 %v3439, 1.442695
    %v3441 = vpow.pop %v3440
    %v3442 = vadd.f32 %v3441, 1.0
    %v3443 = vrcp.pop %v3442
    %v3444 = vmul.f32 1.0, %v3443
    %v3445 = vxor.u32 %v3431, 2147483648
    %v3446 = vmul.f32 %v3445, 1.442695
    %v3447 = vpow.pop %v3446
    %v3448 = vadd.f32 %v3447, 1.0
    %v3449 = vrcp.pop %v3448
    %v3450 = vmul.f32 1.0, %v3449
    %v3451 = vtanh.pop %v3432
    %v3452 = vmul.f32 %v3444, %v2905
    %v3453 = vmul.f32 %v3438, %v3451
    %v3454 = vadd.f32 %v3452, %v3453
    %v3455 = vtanh.pop %v3454
    %v3456 = vmul.f32 %v3450, %v3455
    %v3457 = vld [vmem:[%s1 + $0x4] sm:$0x1]
    %v3458 = vld [vmem:[%s1 + $0xc] sm:$0x1]
    %v3459 = vld [vmem:[%s1 + $0x14] sm:$0x1]
    %v3460 = vld [vmem:[%s1 + $0x1c] sm:$0x1]
    %v3461 = vld [vmem:[%s1 + $0x24] sm:$0x1]
    %v3462 = vld [vmem:[%s1 + $0x2c] sm:$0x1]
    %v3463 = vld [vmem:[%s1 + $0x34] sm:$0x1]
    %v3464 = vld [vmem:[%s1 + $0x3c] sm:$0x1]
    %v3465 = vsub.f32 %v3456, %v2856
    %3467 = vset.pattern.permute.xlu0 0
    %3468 = vperm.xlu0 %3467, %v3457
    %v3469 = vpop.permute.xlu0 %3468
    %3472 = vset.pattern.permute.xlu0 0
    %3473 = vperm.xlu0 %3472, %v3458
    %v3474 = vpop.permute.xlu0 %3473
    %3477 = vset.pattern.permute.xlu0 0
    %3478 = vperm.xlu0 %3477, %v3459
    %v3479 = vpop.permute.xlu0 %3478
    %3482 = vset.pattern.permute.xlu0 0
    %3483 = vperm.xlu0 %3482, %v3460
    %v3484 = vpop.permute.xlu0 %3483
    %3487 = vset.pattern.permute.xlu0 0
    %3488 = vperm.xlu0 %3487, %v3461
    %v3489 = vpop.permute.xlu0 %3488
    %3492 = vset.pattern.permute.xlu0 0
    %3493 = vperm.xlu0 %3492, %v3462
    %v3494 = vpop.permute.xlu0 %3493
    %3497 = vset.pattern.permute.xlu0 0
    %3498 = vperm.xlu0 %3497, %v3463
    %v3499 = vpop.permute.xlu0 %3498
    %3502 = vset.pattern.permute.xlu0 0
    %3503 = vperm.xlu0 %3502, %v3464
    %v3504 = vpop.permute.xlu0 %3503
    %v3507 = vrot.slane %v3465, 1
    %v3508 = vrot.slane %v3465, 2
    %v3509 = vrot.slane %v3465, 3
    %v3510 = vrot.slane %v3465, 4
    %v3511 = vrot.slane %v3465, 5
    %v3512 = vrot.slane %v3465, 6
    %v3513 = vrot.slane %v3465, 7
    %v3522 = vmul.f32 %v3469, %v3465
    %v3523 = vmul.f32 %v3474, %v3507
    %v3524 = vmul.f32 %v3479, %v3508
    %v3525 = vmul.f32 %v3484, %v3509
    %v3526 = vmul.f32 %v3489, %v3510
    %v3527 = vmul.f32 %v3494, %v3511
    %v3528 = vmul.f32 %v3499, %v3512
    %v3529 = vmul.f32 %v3504, %v3513
    %v3538 = vrot.slane %v3523, 7
    %v3539 = vsel %vm193, %v3538, %v3522
    %v3540 = vrot.slane %v3524, 6
    %v3541 = vsel %vm196, %v3540, %v3539
    %v3542 = vrot.slane %v3525, 5
    %v3543 = vsel %vm199, %v3542, %v3541
    %v3544 = vrot.slane %v3526, 4
    %v3545 = vsel %vm202, %v3544, %v3543
    %v3546 = vrot.slane %v3527, 3
    %v3547 = vsel %vm205, %v3546, %v3545
    %v3548 = vrot.slane %v3528, 2
    %v3549 = vsel %vm208, %v3548, %v3547
    %v3550 = vrot.slane %v3529, 1
    %v3551 = vsel %vm211, %v3550, %v3549
    %v3553 = vadd.f32 %v2856, %v3551
    %v3554 = vsub.f32 %v3454, %v2905
    %v3556 = vrot.slane %v3554, 1
    %v3557 = vrot.slane %v3554, 2
    %v3558 = vrot.slane %v3554, 3
    %v3559 = vrot.slane %v3554, 4
    %v3560 = vrot.slane %v3554, 5
    %v3561 = vrot.slane %v3554, 6
    %v3562 = vrot.slane %v3554, 7
    %v3571 = vmul.f32 %v3469, %v3554
    %v3572 = vmul.f32 %v3474, %v3556
    %v3573 = vmul.f32 %v3479, %v3557
    %v3574 = vmul.f32 %v3484, %v3558
    %v3575 = vmul.f32 %v3489, %v3559
    %v3576 = vmul.f32 %v3494, %v3560
    %v3577 = vmul.f32 %v3499, %v3561
    %v3578 = vmul.f32 %v3504, %v3562
    %v3587 = vrot.slane %v3572, 7
    %v3588 = vsel %vm193, %v3587, %v3571
    %v3589 = vrot.slane %v3573, 6
    %v3590 = vsel %vm196, %v3589, %v3588
    %v3591 = vrot.slane %v3574, 5
    %v3592 = vsel %vm199, %v3591, %v3590
    %v3593 = vrot.slane %v3575, 4
    %v3594 = vsel %vm202, %v3593, %v3592
    %v3595 = vrot.slane %v3576, 3
    %v3596 = vsel %vm205, %v3595, %v3594
    %v3597 = vrot.slane %v3577, 2
    %v3598 = vsel %vm208, %v3597, %v3596
    %v3599 = vrot.slane %v3578, 1
    %v3600 = vsel %vm211, %v3599, %v3598
    %v3602 = vadd.f32 %v2905, %v3600
    %v3604 = vcombine.high %v3553, %v3553
    %v3606 = vunpack.c.l.s4 1966171168
    %v3607 = vunpack.c.0.s8 %v3606
    %v3608 = vlaneseq
    %v3609 = vshrl.u32 %v3608, 7
    %v3610 = vsub.s32 %v3607, %v3609
    %v3611 = vrot.slane %v3553, %v3610
    %v3613 = vunpack.c.l.s4 1966171168
    %v3614 = vunpack.c.0.s8 %v3613
    %v3615 = vlaneseq
    %v3616 = vshrl.u32 %v3615, 7
    %v3617 = vsub.s32 %v3614, %v3616
    %v3618 = vrot.slane %v3604, %v3617
    %v3619 = vcombine.high %v3611, %v3611
    %v3620 = vcombine.high %v3618, %v3618
    %v3622 = vunpack.c.l.s4 1966171168
    %v3623 = vunpack.c.0.s8 %v3622
    %v3624 = vlaneseq
    %v3625 = vshrl.u32 %v3624, 7
    %v3626 = vsub.s32 %v3623, %v3625
    %v3627 = vrot.slane %v3611, %v3626
    %v3629 = vunpack.c.l.s4 1966171168
    %v3630 = vunpack.c.0.s8 %v3629
    %v3631 = vlaneseq
    %v3632 = vshrl.u32 %v3631, 7
    %v3633 = vsub.s32 %v3630, %v3632
    %v3634 = vrot.slane %v3618, %v3633
    %v3636 = vunpack.c.l.s4 1966171168
    %v3637 = vunpack.c.0.s8 %v3636
    %v3638 = vlaneseq
    %v3639 = vshrl.u32 %v3638, 7
    %v3640 = vsub.s32 %v3637, %v3639
    %v3641 = vrot.slane %v3619, %v3640
    %v3643 = vunpack.c.l.s4 1966171168
    %v3644 = vunpack.c.0.s8 %v3643
    %v3645 = vlaneseq
    %v3646 = vshrl.u32 %v3645, 7
    %v3647 = vsub.s32 %v3644, %v3646
    %v3648 = vrot.slane %v3620, %v3647
    %v3649 = vcombine.high %v3627, %v3627
    %v3650 = vcombine.high %v3634, %v3634
    %v3651 = vcombine.high %v3641, %v3641
    %v3652 = vcombine.high %v3648, %v3648
    %3661 = vst [vmem:[#allocation10 + $0x4] sm:$0x1] %v3627
    %3662 = vst [vmem:[#allocation10 + $0xc] sm:$0x1] %v3641
    %3663 = vst [vmem:[#allocation10 + $0x14] sm:$0x1] %v3649
    %3664 = vst [vmem:[#allocation10 + $0x1c] sm:$0x1] %v3651
    %3665 = vst [vmem:[#allocation10 + $0x24] sm:$0x1] %v3634
    %3666 = vst [vmem:[#allocation10 + $0x2c] sm:$0x1] %v3648
    %3667 = vst [vmem:[#allocation10 + $0x34] sm:$0x1] %v3650
    %3668 = vst [vmem:[#allocation10 + $0x3c] sm:$0x1] %v3652
    %v3669 = vld [vmem:[%s0 + $0x5] sm:$0x1]
    %v3670 = vld [vmem:[%s0 + $0xd] sm:$0x1]
    %v3671 = vld [vmem:[%s0 + $0x15] sm:$0x1]
    %v3672 = vld [vmem:[%s0 + $0x1d] sm:$0x1]
    %v3673 = vld [vmem:[%s0 + $0x25] sm:$0x1]
    %v3674 = vld [vmem:[%s0 + $0x2d] sm:$0x1]
    %v3675 = vld [vmem:[%s0 + $0x35] sm:$0x1]
    %v3676 = vld [vmem:[%s0 + $0x3d] sm:$0x1]
    %v3685 = vrot.slane %v3670, 7
    %v3686 = vsel %vm193, %v3685, %v3669
    %v3687 = vrot.slane %v3671, 6
    %v3688 = vsel %vm196, %v3687, %v3686
    %v3689 = vrot.slane %v3672, 5
    %v3690 = vsel %vm199, %v3689, %v3688
    %v3691 = vrot.slane %v3673, 4
    %v3692 = vsel %vm202, %v3691, %v3690
    %v3693 = vrot.slane %v3674, 3
    %v3694 = vsel %vm205, %v3693, %v3692
    %v3695 = vrot.slane %v3675, 2
    %v3696 = vsel %vm208, %v3695, %v3694
    %v3697 = vrot.slane %v3676, 1
    %v3698 = vsel %vm211, %v3697, %v3696
    %v3699 = vsel %vm213, %v3698, 0
    %3701 = vmatprep.subr.mxu0 %v162
    %3702 = vmatpush1.msra.mxu0 %v161
    %3703 = vmatprep.subr.mxu0 %v167
    %3704 = vmatpush1.msra.mxu0 %v166
    %3705 = vmatprep.subr.mxu0 %v172
    %3706 = vmatpush1.msra.mxu0 %v171
    %3707 = vmatprep.subr.mxu0 0.0
    %3708 = vmatpush1.msra.mxu0 0.0
    %3709 = vmatprep.subr.mxu0 0.0
    %3710 = vmatpush1.msra.mxu0 0.0
    %3711 = vmatprep.subr.mxu0 0.0
    %3712 = vmatpush1.msra.mxu0 0.0
    %3713 = vmatprep.subr.mxu0 0.0
    %3714 = vmatpush1.msra.mxu0 0.0
    %3715 = vmatprep.subr.mxu0 0.0
    %3716 = vmatpush1.msra.mxu0 0.0
    %3717 = vmatprep.subr.mxu0 0.0
    %3718 = vmatpush1.msra.mxu0 0.0
    %3719 = vmatprep.subr.mxu0 0.0
    %3720 = vmatpush1.msra.mxu0 0.0
    %3721 = vmatprep.subr.mxu0 0.0
    %3722 = vmatpush1.msra.mxu0 0.0
    %3723 = vmatprep.subr.mxu0 0.0
    %3724 = vmatpush1.msra.mxu0 0.0
    %3725 = vmatprep.subr.mxu0 0.0
    %3726 = vmatpush1.msra.mxu0 0.0
    %3727 = vmatprep.subr.mxu0 0.0
    %3728 = vmatpush1.msra.mxu0 0.0
    %3729 = vmatprep.subr.mxu0 0.0
    %3730 = vmatpush1.msra.mxu0 0.0
    %3731 = vmatprep.subr.mxu0 0.0
    %3732 = vmatpush1.msra.mxu0 0.0
    %3733 = vmatprep.subr.mxu0 0.0
    %3734 = vmatpush1.msra.mxu0 0.0
    %3735 = vmatprep.subr.mxu0 0.0
    %3736 = vmatpush1.msra.mxu0 0.0
    %3737 = vmatprep.subr.mxu0 0.0
    %3738 = vmatpush1.msra.mxu0 0.0
    %3739 = vmatprep.subr.mxu0 0.0
    %3740 = vmatpush1.msra.mxu0 0.0
    %3741 = vmatprep.subr.mxu0 0.0
    %3742 = vmatpush1.msra.mxu0 0.0
    %3743 = vmatprep.subr.mxu0 0.0
    %3744 = vmatpush1.msra.mxu0 0.0
    %3745 = vmatprep.subr.mxu0 0.0
    %3746 = vmatpush1.msra.mxu0 0.0
    %3747 = vmatprep.subr.mxu0 0.0
    %3748 = vmatpush1.msra.mxu0 0.0
    %3749 = vmatprep.subr.mxu0 0.0
    %3750 = vmatpush1.msra.mxu0 0.0
    %3751 = vmatprep.subr.mxu0 0.0
    %3752 = vmatpush1.msra.mxu0 0.0
    %3753 = vmatprep.subr.mxu0 0.0
    %3754 = vmatpush1.msra.mxu0 0.0
    %3755 = vmatprep.subr.mxu0 0.0
    %3756 = vmatpush1.msra.mxu0 0.0
    %3757 = vmatprep.subr.mxu0 0.0
    %3758 = vmatpush1.msra.mxu0 0.0
    %3759 = vmatprep.subr.mxu0 0.0
    %3760 = vmatpush1.msra.mxu0 0.0
    %3761 = vmatprep.subr.mxu0 0.0
    %3762 = vmatpush1.msra.mxu0 0.0
    %3763 = vmatprep.subr.mxu0 0.0
    %3764 = vmatpush1.msra.mxu0 0.0
    %3765 = vmatprep.mubr.f32.mxu0 0.0
    %3766 = vmatmul.mubr.f32.gmra.mrb[0].mxu0 %v3699
    %v3767 = vpop.f32.mrb[0].mxu0
    %v3768 = vadd.f32 0.0, %v3767
    %v3769 = vpop.f32.mrb[0].mxu0
    %v3770 = vadd.f32 0.0, %v3769
    %3771 = vdwg.mxu0
    %3772 = vmatprep.subr.mxu0 %v164
    %3773 = vmatpush1.msra.mxu0 %v163
    %3774 = vmatprep.subr.mxu0 %v169
    %3775 = vmatpush1.msra.mxu0 %v168
    %3776 = vmatprep.subr.mxu0 %v174
    %3777 = vmatpush1.msra.mxu0 %v173
    %3778 = vmatprep.subr.mxu0 0.0
    %3779 = vmatpush1.msra.mxu0 0.0
    %3780 = vmatprep.subr.mxu0 0.0
    %3781 = vmatpush1.msra.mxu0 0.0
    %3782 = vmatprep.subr.mxu0 0.0
    %3783 = vmatpush1.msra.mxu0 0.0
    %3784 = vmatprep.subr.mxu0 0.0
    %3785 = vmatpush1.msra.mxu0 0.0
    %3786 = vmatprep.subr.mxu0 0.0
    %3787 = vmatpush1.msra.mxu0 0.0
    %3788 = vmatprep.subr.mxu0 0.0
    %3789 = vmatpush1.msra.mxu0 0.0
    %3790 = vmatprep.subr.mxu0 0.0
    %3791 = vmatpush1.msra.mxu0 0.0
    %3792 = vmatprep.subr.mxu0 0.0
    %3793 = vmatpush1.msra.mxu0 0.0
    %3794 = vmatprep.subr.mxu0 0.0
    %3795 = vmatpush1.msra.mxu0 0.0
    %3796 = vmatprep.subr.mxu0 0.0
    %3797 = vmatpush1.msra.mxu0 0.0
    %3798 = vmatprep.subr.mxu0 0.0
    %3799 = vmatpush1.msra.mxu0 0.0
    %3800 = vmatprep.subr.mxu0 0.0
    %3801 = vmatpush1.msra.mxu0 0.0
    %3802 = vmatprep.subr.mxu0 0.0
    %3803 = vmatpush1.msra.mxu0 0.0
    %3804 = vmatprep.subr.mxu0 0.0
    %3805 = vmatpush1.msra.mxu0 0.0
    %3806 = vmatprep.subr.mxu0 0.0
    %3807 = vmatpush1.msra.mxu0 0.0
    %3808 = vmatprep.subr.mxu0 0.0
    %3809 = vmatpush1.msra.mxu0 0.0
    %3810 = vmatprep.subr.mxu0 0.0
    %3811 = vmatpush1.msra.mxu0 0.0
    %3812 = vmatprep.subr.mxu0 0.0
    %3813 = vmatpush1.msra.mxu0 0.0
    %3814 = vmatprep.subr.mxu0 0.0
    %3815 = vmatpush1.msra.mxu0 0.0
    %3816 = vmatprep.subr.mxu0 0.0
    %3817 = vmatpush1.msra.mxu0 0.0
    %3818 = vmatprep.subr.mxu0 0.0
    %3819 = vmatpush1.msra.mxu0 0.0
    %3820 = vmatprep.subr.mxu0 0.0
    %3821 = vmatpush1.msra.mxu0 0.0
    %3822 = vmatprep.subr.mxu0 0.0
    %3823 = vmatpush1.msra.mxu0 0.0
    %3824 = vmatprep.subr.mxu0 0.0
    %3825 = vmatpush1.msra.mxu0 0.0
    %3826 = vmatprep.subr.mxu0 0.0
    %3827 = vmatpush1.msra.mxu0 0.0
    %3828 = vmatprep.subr.mxu0 0.0
    %3829 = vmatpush1.msra.mxu0 0.0
    %3830 = vmatprep.subr.mxu0 0.0
    %3831 = vmatpush1.msra.mxu0 0.0
    %3832 = vmatprep.subr.mxu0 0.0
    %3833 = vmatpush1.msra.mxu0 0.0
    %3834 = vmatprep.subr.mxu0 0.0
    %3835 = vmatpush1.msra.mxu0 0.0
    %3836 = vmatprep.mubr.f32.mxu0 0.0
    %3837 = vmatmul.mubr.f32.gmra.mrb[0].mxu0 %v3699
    %v3838 = vpop.f32.mrb[0].mxu0
    %v3839 = vadd.f32 0.0, %v3838
    %v3840 = vpop.f32.mrb[0].mxu0
    %v3841 = vadd.f32 0.0, %v3840
    %3842 = vdwg.mxu0
    %3843 = vmatprep.subr.mxu0 0.0
    %3844 = vmatpush1.msra.mxu0 %v165
    %3845 = vmatprep.subr.mxu0 0.0
    %3846 = vmatpush1.msra.mxu0 %v170
    %3847 = vmatprep.subr.mxu0 0.0
    %3848 = vmatpush1.msra.mxu0 %v175
    %3849 = vmatprep.subr.mxu0 0.0
    %3850 = vmatpush1.msra.mxu0 0.0
    %3851 = vmatprep.subr.mxu0 0.0
    %3852 = vmatpush1.msra.mxu0 0.0
    %3853 = vmatprep.subr.mxu0 0.0
    %3854 = vmatpush1.msra.mxu0 0.0
    %3855 = vmatprep.subr.mxu0 0.0
    %3856 = vmatpush1.msra.mxu0 0.0
    %3857 = vmatprep.subr.mxu0 0.0
    %3858 = vmatpush1.msra.mxu0 0.0
    %3859 = vmatprep.subr.mxu0 0.0
    %3860 = vmatpush1.msra.mxu0 0.0
    %3861 = vmatprep.subr.mxu0 0.0
    %3862 = vmatpush1.msra.mxu0 0.0
    %3863 = vmatprep.subr.mxu0 0.0
    %3864 = vmatpush1.msra.mxu0 0.0
    %3865 = vmatprep.subr.mxu0 0.0
    %3866 = vmatpush1.msra.mxu0 0.0
    %3867 = vmatprep.subr.mxu0 0.0
    %3868 = vmatpush1.msra.mxu0 0.0
    %3869 = vmatprep.subr.mxu0 0.0
    %3870 = vmatpush1.msra.mxu0 0.0
    %3871 = vmatprep.subr.mxu0 0.0
    %3872 = vmatpush1.msra.mxu0 0.0
    %3873 = vmatprep.subr.mxu0 0.0
    %3874 = vmatpush1.msra.mxu0 0.0
    %3875 = vmatprep.subr.mxu0 0.0
    %3876 = vmatpush1.msra.mxu0 0.0
    %3877 = vmatprep.subr.mxu0 0.0
    %3878 = vmatpush1.msra.mxu0 0.0
    %3879 = vmatprep.subr.mxu0 0.0
    %3880 = vmatpush1.msra.mxu0 0.0
    %3881 = vmatprep.subr.mxu0 0.0
    %3882 = vmatpush1.msra.mxu0 0.0
    %3883 = vmatprep.subr.mxu0 0.0
    %3884 = vmatpush1.msra.mxu0 0.0
    %3885 = vmatprep.subr.mxu0 0.0
    %3886 = vmatpush1.msra.mxu0 0.0
    %3887 = vmatprep.subr.mxu0 0.0
    %3888 = vmatpush1.msra.mxu0 0.0
    %3889 = vmatprep.subr.mxu0 0.0
    %3890 = vmatpush1.msra.mxu0 0.0
    %3891 = vmatprep.subr.mxu0 0.0
    %3892 = vmatpush1.msra.mxu0 0.0
    %3893 = vmatprep.subr.mxu0 0.0
    %3894 = vmatpush1.msra.mxu0 0.0
    %3895 = vmatprep.subr.mxu0 0.0
    %3896 = vmatpush1.msra.mxu0 0.0
    %3897 = vmatprep.subr.mxu0 0.0
    %3898 = vmatpush1.msra.mxu0 0.0
    %3899 = vmatprep.subr.mxu0 0.0
    %3900 = vmatpush1.msra.mxu0 0.0
    %3901 = vmatprep.subr.mxu0 0.0
    %3902 = vmatpush1.msra.mxu0 0.0
    %3903 = vmatprep.subr.mxu0 0.0
    %3904 = vmatpush1.msra.mxu0 0.0
    %3905 = vmatprep.subr.mxu0 0.0
    %3906 = vmatpush1.msra.mxu0 0.0
    %3907 = vmatprep.mubr.f32.mxu0 0.0
    %3908 = vmatmul.mubr.f32.gmra.mrb[0].mxu0 %v3699
    %v3909 = vpop.f32.mrb[0].mxu0
    %v3910 = vadd.f32 0.0, %v3909
    %v3911 = vpop.f32.mrb[0].mxu0
    %3912 = vdwg.mxu0
    %3913 = vmatprep.subr.mxu0 0.0
    %3914 = vmatpush1.msra.mxu0 %v81
    %3915 = vmatprep.subr.mxu0 0.0
    %3916 = vmatpush1.msra.mxu0 %v82
    %3917 = vmatprep.subr.mxu0 0.0
    %3918 = vmatpush1.msra.mxu0 %v83
    %3919 = vmatprep.subr.mxu0 0.0
    %3920 = vmatpush1.msra.mxu0 %v84
    %3921 = vmatprep.subr.mxu0 0.0
    %3922 = vmatpush1.msra.mxu0 %v85
    %3923 = vmatprep.subr.mxu0 0.0
    %3924 = vmatpush1.msra.mxu0 %v86
    %3925 = vmatprep.subr.mxu0 0.0
    %3926 = vmatpush1.msra.mxu0 %v87
    %3927 = vmatprep.subr.mxu0 0.0
    %3928 = vmatpush1.msra.mxu0 %v88
    %3929 = vmatprep.subr.mxu0 0.0
    %3930 = vmatpush1.msra.mxu0 %v89
    %3931 = vmatprep.subr.mxu0 0.0
    %3932 = vmatpush1.msra.mxu0 %v90
    %3933 = vmatprep.subr.mxu0 0.0
    %3934 = vmatpush1.msra.mxu0 %v91
    %3935 = vmatprep.subr.mxu0 0.0
    %3936 = vmatpush1.msra.mxu0 %v92
    %3937 = vmatprep.subr.mxu0 0.0
    %3938 = vmatpush1.msra.mxu0 %v93
    %3939 = vmatprep.subr.mxu0 0.0
    %3940 = vmatpush1.msra.mxu0 %v94
    %3941 = vmatprep.subr.mxu0 0.0
    %3942 = vmatpush1.msra.mxu0 %v95
    %3943 = vmatprep.subr.mxu0 0.0
    %3944 = vmatpush1.msra.mxu0 %v96
    %3945 = vmatprep.subr.mxu0 0.0
    %3946 = vmatpush1.msra.mxu0 0.0
    %3947 = vmatprep.subr.mxu0 0.0
    %3948 = vmatpush1.msra.mxu0 0.0
    %3949 = vmatprep.subr.mxu0 0.0
    %3950 = vmatpush1.msra.mxu0 0.0
    %3951 = vmatprep.subr.mxu0 0.0
    %3952 = vmatpush1.msra.mxu0 0.0
    %3953 = vmatprep.subr.mxu0 0.0
    %3954 = vmatpush1.msra.mxu0 0.0
    %3955 = vmatprep.subr.mxu0 0.0
    %3956 = vmatpush1.msra.mxu0 0.0
    %3957 = vmatprep.subr.mxu0 0.0
    %3958 = vmatpush1.msra.mxu0 0.0
    %3959 = vmatprep.subr.mxu0 0.0
    %3960 = vmatpush1.msra.mxu0 0.0
    %3961 = vmatprep.subr.mxu0 0.0
    %3962 = vmatpush1.msra.mxu0 0.0
    %3963 = vmatprep.subr.mxu0 0.0
    %3964 = vmatpush1.msra.mxu0 0.0
    %3965 = vmatprep.subr.mxu0 0.0
    %3966 = vmatpush1.msra.mxu0 0.0
    %3967 = vmatprep.subr.mxu0 0.0
    %3968 = vmatpush1.msra.mxu0 0.0
    %3969 = vmatprep.subr.mxu0 0.0
    %3970 = vmatpush1.msra.mxu0 0.0
    %3971 = vmatprep.subr.mxu0 0.0
    %3972 = vmatpush1.msra.mxu0 0.0
    %3973 = vmatprep.subr.mxu0 0.0
    %3974 = vmatpush1.msra.mxu0 0.0
    %3975 = vmatprep.subr.mxu0 0.0
    %3976 = vmatpush1.msra.mxu0 0.0
    %3977 = vmatprep.mubr.f32.mxu0 0.0
    %3978 = vmatmul.mubr.f32.gmra.mrb[0].mxu0 %v3553
    %v3979 = vpop.f32.mrb[0].mxu0
    %v3980 = vadd.f32 0.0, %v3979
    %v3981 = vpop.f32.mrb[0].mxu0
    %3982 = vdwg.mxu0
    %v3983 = vmul.f32 %v3768, %v3980
    %3984 = vmatprep.subr.mxu0 %v98
    %3985 = vmatpush1.msra.mxu0 %v97
    %3986 = vmatprep.subr.mxu0 %v102
    %3987 = vmatpush1.msra.mxu0 %v101
    %3988 = vmatprep.subr.mxu0 %v106
    %3989 = vmatpush1.msra.mxu0 %v105
    %3990 = vmatprep.subr.mxu0 %v110
    %3991 = vmatpush1.msra.mxu0 %v109
    %3992 = vmatprep.subr.mxu0 %v114
    %3993 = vmatpush1.msra.mxu0 %v113
    %3994 = vmatprep.subr.mxu0 %v118
    %3995 = vmatpush1.msra.mxu0 %v117
    %3996 = vmatprep.subr.mxu0 %v122
    %3997 = vmatpush1.msra.mxu0 %v121
    %3998 = vmatprep.subr.mxu0 %v126
    %3999 = vmatpush1.msra.mxu0 %v125
    %4000 = vmatprep.subr.mxu0 %v130
    %4001 = vmatpush1.msra.mxu0 %v129
    %4002 = vmatprep.subr.mxu0 %v134
    %4003 = vmatpush1.msra.mxu0 %v133
    %4004 = vmatprep.subr.mxu0 %v138
    %4005 = vmatpush1.msra.mxu0 %v137
    %4006 = vmatprep.subr.mxu0 %v142
    %4007 = vmatpush1.msra.mxu0 %v141
    %4008 = vmatprep.subr.mxu0 %v146
    %4009 = vmatpush1.msra.mxu0 %v145
    %4010 = vmatprep.subr.mxu0 %v150
    %4011 = vmatpush1.msra.mxu0 %v149
    %4012 = vmatprep.subr.mxu0 %v154
    %4013 = vmatpush1.msra.mxu0 %v153
    %4014 = vmatprep.subr.mxu0 %v158
    %4015 = vmatpush1.msra.mxu0 %v157
    %4016 = vmatprep.subr.mxu0 0.0
    %4017 = vmatpush1.msra.mxu0 0.0
    %4018 = vmatprep.subr.mxu0 0.0
    %4019 = vmatpush1.msra.mxu0 0.0
    %4020 = vmatprep.subr.mxu0 0.0
    %4021 = vmatpush1.msra.mxu0 0.0
    %4022 = vmatprep.subr.mxu0 0.0
    %4023 = vmatpush1.msra.mxu0 0.0
    %4024 = vmatprep.subr.mxu0 0.0
    %4025 = vmatpush1.msra.mxu0 0.0
    %4026 = vmatprep.subr.mxu0 0.0
    %4027 = vmatpush1.msra.mxu0 0.0
    %4028 = vmatprep.subr.mxu0 0.0
    %4029 = vmatpush1.msra.mxu0 0.0
    %4030 = vmatprep.subr.mxu0 0.0
    %4031 = vmatpush1.msra.mxu0 0.0
    %4032 = vmatprep.subr.mxu0 0.0
    %4033 = vmatpush1.msra.mxu0 0.0
    %4034 = vmatprep.subr.mxu0 0.0
    %4035 = vmatpush1.msra.mxu0 0.0
    %4036 = vmatprep.subr.mxu0 0.0
    %4037 = vmatpush1.msra.mxu0 0.0
    %4038 = vmatprep.subr.mxu0 0.0
    %4039 = vmatpush1.msra.mxu0 0.0
    %4040 = vmatprep.subr.mxu0 0.0
    %4041 = vmatpush1.msra.mxu0 0.0
    %4042 = vmatprep.subr.mxu0 0.0
    %4043 = vmatpush1.msra.mxu0 0.0
    %4044 = vmatprep.subr.mxu0 0.0
    %4045 = vmatpush1.msra.mxu0 0.0
    %4046 = vmatprep.subr.mxu0 0.0
    %4047 = vmatpush1.msra.mxu0 0.0
    %4048 = vmatprep.mubr.f32.mxu0 0.0
    %4049 = vmatmul.mubr.f32.gmra.mrb[0].mxu0 %v3983
    %v4050 = vpop.f32.mrb[0].mxu0
    %v4051 = vadd.f32 0.0, %v4050
    %v4052 = vpop.f32.mrb[0].mxu0
    %v4053 = vadd.f32 0.0, %v4052
    %4054 = vdwg.mxu0
    %4055 = vmatprep.subr.mxu0 %v100
    %4056 = vmatpush1.msra.mxu0 %v99
    %4057 = vmatprep.subr.mxu0 %v104
    %4058 = vmatpush1.msra.mxu0 %v103
    %4059 = vmatprep.subr.mxu0 %v108
    %4060 = vmatpush1.msra.mxu0 %v107
    %4061 = vmatprep.subr.mxu0 %v112
    %4062 = vmatpush1.msra.mxu0 %v111
    %4063 = vmatprep.subr.mxu0 %v116
    %4064 = vmatpush1.msra.mxu0 %v115
    %4065 = vmatprep.subr.mxu0 %v120
    %4066 = vmatpush1.msra.mxu0 %v119
    %4067 = vmatprep.subr.mxu0 %v124
    %4068 = vmatpush1.msra.mxu0 %v123
    %4069 = vmatprep.subr.mxu0 %v128
    %4070 = vmatpush1.msra.mxu0 %v127
    %4071 = vmatprep.subr.mxu0 %v132
    %4072 = vmatpush1.msra.mxu0 %v131
    %4073 = vmatprep.subr.mxu0 %v136
    %4074 = vmatpush1.msra.mxu0 %v135
    %4075 = vmatprep.subr.mxu0 %v140
    %4076 = vmatpush1.msra.mxu0 %v139
    %4077 = vmatprep.subr.mxu0 %v144
    %4078 = vmatpush1.msra.mxu0 %v143
    %4079 = vmatprep.subr.mxu0 %v148
    %4080 = vmatpush1.msra.mxu0 %v147
    %4081 = vmatprep.subr.mxu0 %v152
    %4082 = vmatpush1.msra.mxu0 %v151
    %4083 = vmatprep.subr.mxu0 %v156
    %4084 = vmatpush1.msra.mxu0 %v155
    %4085 = vmatprep.subr.mxu0 %v160
    %4086 = vmatpush1.msra.mxu0 %v159
    %4087 = vmatprep.subr.mxu0 0.0
    %4088 = vmatpush1.msra.mxu0 0.0
    %4089 = vmatprep.subr.mxu0 0.0
    %4090 = vmatpush1.msra.mxu0 0.0
    %4091 = vmatprep.subr.mxu0 0.0
    %4092 = vmatpush1.msra.mxu0 0.0
    %4093 = vmatprep.subr.mxu0 0.0
    %4094 = vmatpush1.msra.mxu0 0.0
    %4095 = vmatprep.subr.mxu0 0.0
    %4096 = vmatpush1.msra.mxu0 0.0
    %4097 = vmatprep.subr.mxu0 0.0
    %4098 = vmatpush1.msra.mxu0 0.0
    %4099 = vmatprep.subr.mxu0 0.0
    %4100 = vmatpush1.msra.mxu0 0.0
    %4101 = vmatprep.subr.mxu0 0.0
    %4102 = vmatpush1.msra.mxu0 0.0
    %4103 = vmatprep.subr.mxu0 0.0
    %4104 = vmatpush1.msra.mxu0 0.0
    %4105 = vmatprep.subr.mxu0 0.0
    %4106 = vmatpush1.msra.mxu0 0.0
    %4107 = vmatprep.subr.mxu0 0.0
    %4108 = vmatpush1.msra.mxu0 0.0
    %4109 = vmatprep.subr.mxu0 0.0
    %4110 = vmatpush1.msra.mxu0 0.0
    %4111 = vmatprep.subr.mxu0 0.0
    %4112 = vmatpush1.msra.mxu0 0.0
    %4113 = vmatprep.subr.mxu0 0.0
    %4114 = vmatpush1.msra.mxu0 0.0
    %4115 = vmatprep.subr.mxu0 0.0
    %4116 = vmatpush1.msra.mxu0 0.0
    %4117 = vmatprep.subr.mxu0 0.0
    %4118 = vmatpush1.msra.mxu0 0.0
    %4119 = vmatprep.mubr.f32.mxu0 0.0
    %4120 = vmatmul.mubr.f32.gmra.mrb[0].mxu0 %v3983
    %v4121 = vpop.f32.mrb[0].mxu0
    %v4122 = vadd.f32 0.0, %v4121
    %v4123 = vpop.f32.mrb[0].mxu0
    %v4124 = vadd.f32 0.0, %v4123
    %4125 = vdwg.mxu0
    %v4126 = vadd.f32 %v3770, %v4051
    %v4127 = vadd.f32 %v3839, %v4053
    %v4128 = vadd.f32 %v3841, %v4122
    %v4129 = vadd.f32 %v3910, %v4124
    %v4130 = vxor.u32 %v4126, 2147483648
    %v4131 = vmul.f32 %v4130, 1.442695
    %v4132 = vpow.pop %v4131
    %v4133 = vadd.f32 %v4132, 1.0
    %v4134 = vrcp.pop %v4133
    %v4135 = vmul.f32 1.0, %v4134
    %v4136 = vxor.u32 %v4127, 2147483648
    %v4137 = vmul.f32 %v4136, 1.442695
    %v4138 = vpow.pop %v4137
    %v4139 = vadd.f32 %v4138, 1.0
    %v4140 = vrcp.pop %v4139
    %v4141 = vmul.f32 1.0, %v4140
    %v4142 = vxor.u32 %v4128, 2147483648
    %v4143 = vmul.f32 %v4142, 1.442695
    %v4144 = vpow.pop %v4143
    %v4145 = vadd.f32 %v4144, 1.0
    %v4146 = vrcp.pop %v4145
    %v4147 = vmul.f32 1.0, %v4146
    %v4148 = vtanh.pop %v4129
    %v4149 = vmul.f32 %v4141, %v3602
    %v4150 = vmul.f32 %v4135, %v4148
    %v4151 = vadd.f32 %v4149, %v4150
    %v4152 = vtanh.pop %v4151
    %v4153 = vmul.f32 %v4147, %v4152
    %v4154 = vld [vmem:[%s1 + $0x5] sm:$0x1]
    %v4155 = vld [vmem:[%s1 + $0xd] sm:$0x1]
    %v4156 = vld [vmem:[%s1 + $0x15] sm:$0x1]
    %v4157 = vld [vmem:[%s1 + $0x1d] sm:$0x1]
    %v4158 = vld [vmem:[%s1 + $0x25] sm:$0x1]
    %v4159 = vld [vmem:[%s1 + $0x2d] sm:$0x1]
    %v4160 = vld [vmem:[%s1 + $0x35] sm:$0x1]
    %v4161 = vld [vmem:[%s1 + $0x3d] sm:$0x1]
    %v4162 = vsub.f32 %v4153, %v3553
    %4164 = vset.pattern.permute.xlu0 0
    %4165 = vperm.xlu0 %4164, %v4154
    %v4166 = vpop.permute.xlu0 %4165
    %4169 = vset.pattern.permute.xlu0 0
    %4170 = vperm.xlu0 %4169, %v4155
    %v4171 = vpop.permute.xlu0 %4170
    %4174 = vset.pattern.permute.xlu0 0
    %4175 = vperm.xlu0 %4174, %v4156
    %v4176 = vpop.permute.xlu0 %4175
    %4179 = vset.pattern.permute.xlu0 0
    %4180 = vperm.xlu0 %4179, %v4157
    %v4181 = vpop.permute.xlu0 %4180
    %4184 = vset.pattern.permute.xlu0 0
    %4185 = vperm.xlu0 %4184, %v4158
    %v4186 = vpop.permute.xlu0 %4185
    %4189 = vset.pattern.permute.xlu0 0
    %4190 = vperm.xlu0 %4189, %v4159
    %v4191 = vpop.permute.xlu0 %4190
    %4194 = vset.pattern.permute.xlu0 0
    %4195 = vperm.xlu0 %4194, %v4160
    %v4196 = vpop.permute.xlu0 %4195
    %4199 = vset.pattern.permute.xlu0 0
    %4200 = vperm.xlu0 %4199, %v4161
    %v4201 = vpop.permute.xlu0 %4200
    %v4204 = vrot.slane %v4162, 1
    %v4205 = vrot.slane %v4162, 2
    %v4206 = vrot.slane %v4162, 3
    %v4207 = vrot.slane %v4162, 4
    %v4208 = vrot.slane %v4162, 5
    %v4209 = vrot.slane %v4162, 6
    %v4210 = vrot.slane %v4162, 7
    %v4219 = vmul.f32 %v4166, %v4162
    %v4220 = vmul.f32 %v4171, %v4204
    %v4221 = vmul.f32 %v4176, %v4205
    %v4222 = vmul.f32 %v4181, %v4206
    %v4223 = vmul.f32 %v4186, %v4207
    %v4224 = vmul.f32 %v4191, %v4208
    %v4225 = vmul.f32 %v4196, %v4209
    %v4226 = vmul.f32 %v4201, %v4210
    %v4235 = vrot.slane %v4220, 7
    %v4236 = vsel %vm193, %v4235, %v4219
    %v4237 = vrot.slane %v4221, 6
    %v4238 = vsel %vm196, %v4237, %v4236
    %v4239 = vrot.slane %v4222, 5
    %v4240 = vsel %vm199, %v4239, %v4238
    %v4241 = vrot.slane %v4223, 4
    %v4242 = vsel %vm202, %v4241, %v4240
    %v4243 = vrot.slane %v4224, 3
    %v4244 = vsel %vm205, %v4243, %v4242
    %v4245 = vrot.slane %v4225, 2
    %v4246 = vsel %vm208, %v4245, %v4244
    %v4247 = vrot.slane %v4226, 1
    %v4248 = vsel %vm211, %v4247, %v4246
    %v4250 = vadd.f32 %v3553, %v4248
    %v4251 = vsub.f32 %v4151, %v3602
    %v4253 = vrot.slane %v4251, 1
    %v4254 = vrot.slane %v4251, 2
    %v4255 = vrot.slane %v4251, 3
    %v4256 = vrot.slane %v4251, 4
    %v4257 = vrot.slane %v4251, 5
    %v4258 = vrot.slane %v4251, 6
    %v4259 = vrot.slane %v4251, 7
    %v4268 = vmul.f32 %v4166, %v4251
    %v4269 = vmul.f32 %v4171, %v4253
    %v4270 = vmul.f32 %v4176, %v4254
    %v4271 = vmul.f32 %v4181, %v4255
    %v4272 = vmul.f32 %v4186, %v4256
    %v4273 = vmul.f32 %v4191, %v4257
    %v4274 = vmul.f32 %v4196, %v4258
    %v4275 = vmul.f32 %v4201, %v4259
    %v4284 = vrot.slane %v4269, 7
    %v4285 = vsel %vm193, %v4284, %v4268
    %v4286 = vrot.slane %v4270, 6
    %v4287 = vsel %vm196, %v4286, %v4285
    %v4288 = vrot.slane %v4271, 5
    %v4289 = vsel %vm199, %v4288, %v4287
    %v4290 = vrot.slane %v4272, 4
    %v4291 = vsel %vm202, %v4290, %v4289
    %v4292 = vrot.slane %v4273, 3
    %v4293 = vsel %vm205, %v4292, %v4291
    %v4294 = vrot.slane %v4274, 2
    %v4295 = vsel %vm208, %v4294, %v4293
    %v4296 = vrot.slane %v4275, 1
    %v4297 = vsel %vm211, %v4296, %v4295
    %v4299 = vadd.f32 %v3602, %v4297
    %v4301 = vcombine.high %v4250, %v4250
    %v4303 = vunpack.c.l.s4 1966171168
    %v4304 = vunpack.c.0.s8 %v4303
    %v4305 = vlaneseq
    %v4306 = vshrl.u32 %v4305, 7
    %v4307 = vsub.s32 %v4304, %v4306
    %v4308 = vrot.slane %v4250, %v4307
    %v4310 = vunpack.c.l.s4 1966171168
    %v4311 = vunpack.c.0.s8 %v4310
    %v4312 = vlaneseq
    %v4313 = vshrl.u32 %v4312, 7
    %v4314 = vsub.s32 %v4311, %v4313
    %v4315 = vrot.slane %v4301, %v4314
    %v4316 = vcombine.high %v4308, %v4308
    %v4317 = vcombine.high %v4315, %v4315
    %v4319 = vunpack.c.l.s4 1966171168
    %v4320 = vunpack.c.0.s8 %v4319
    %v4321 = vlaneseq
    %v4322 = vshrl.u32 %v4321, 7
    %v4323 = vsub.s32 %v4320, %v4322
    %v4324 = vrot.slane %v4308, %v4323
    %v4326 = vunpack.c.l.s4 1966171168
    %v4327 = vunpack.c.0.s8 %v4326
    %v4328 = vlaneseq
    %v4329 = vshrl.u32 %v4328, 7
    %v4330 = vsub.s32 %v4327, %v4329
    %v4331 = vrot.slane %v4315, %v4330
    %v4333 = vunpack.c.l.s4 1966171168
    %v4334 = vunpack.c.0.s8 %v4333
    %v4335 = vlaneseq
    %v4336 = vshrl.u32 %v4335, 7
    %v4337 = vsub.s32 %v4334, %v4336
    %v4338 = vrot.slane %v4316, %v4337
    %v4340 = vunpack.c.l.s4 1966171168
    %v4341 = vunpack.c.0.s8 %v4340
    %v4342 = vlaneseq
    %v4343 = vshrl.u32 %v4342, 7
    %v4344 = vsub.s32 %v4341, %v4343
    %v4345 = vrot.slane %v4317, %v4344
    %v4346 = vcombine.high %v4324, %v4324
    %v4347 = vcombine.high %v4331, %v4331
    %v4348 = vcombine.high %v4338, %v4338
    %v4349 = vcombine.high %v4345, %v4345
    %4358 = vst [vmem:[#allocation10 + $0x5] sm:$0x1] %v4324
    %4359 = vst [vmem:[#allocation10 + $0xd] sm:$0x1] %v4338
    %4360 = vst [vmem:[#allocation10 + $0x15] sm:$0x1] %v4346
    %4361 = vst [vmem:[#allocation10 + $0x1d] sm:$0x1] %v4348
    %4362 = vst [vmem:[#allocation10 + $0x25] sm:$0x1] %v4331
    %4363 = vst [vmem:[#allocation10 + $0x2d] sm:$0x1] %v4345
    %4364 = vst [vmem:[#allocation10 + $0x35] sm:$0x1] %v4347
    %4365 = vst [vmem:[#allocation10 + $0x3d] sm:$0x1] %v4349
    %v4366 = vld [vmem:[%s0 + $0x6] sm:$0x1]
    %v4367 = vld [vmem:[%s0 + $0xe] sm:$0x1]
    %v4368 = vld [vmem:[%s0 + $0x16] sm:$0x1]
    %v4369 = vld [vmem:[%s0 + $0x1e] sm:$0x1]
    %v4370 = vld [vmem:[%s0 + $0x26] sm:$0x1]
    %v4371 = vld [vmem:[%s0 + $0x2e] sm:$0x1]
    %v4372 = vld [vmem:[%s0 + $0x36] sm:$0x1]
    %v4373 = vld [vmem:[%s0 + $0x3e] sm:$0x1]
    %v4382 = vrot.slane %v4367, 7
    %v4383 = vsel %vm193, %v4382, %v4366
    %v4384 = vrot.slane %v4368, 6
    %v4385 = vsel %vm196, %v4384, %v4383
    %v4386 = vrot.slane %v4369, 5
    %v4387 = vsel %vm199, %v4386, %v4385
    %v4388 = vrot.slane %v4370, 4
    %v4389 = vsel %vm202, %v4388, %v4387
    %v4390 = vrot.slane %v4371, 3
    %v4391 = vsel %vm205, %v4390, %v4389
    %v4392 = vrot.slane %v4372, 2
    %v4393 = vsel %vm208, %v4392, %v4391
    %v4394 = vrot.slane %v4373, 1
    %v4395 = vsel %vm211, %v4394, %v4393
    %v4396 = vsel %vm213, %v4395, 0
    %4398 = vmatprep.subr.mxu0 %v162
    %4399 = vmatpush1.msra.mxu0 %v161
    %4400 = vmatprep.subr.mxu0 %v167
    %4401 = vmatpush1.msra.mxu0 %v166
    %4402 = vmatprep.subr.mxu0 %v172
    %4403 = vmatpush1.msra.mxu0 %v171
    %4404 = vmatprep.subr.mxu0 0.0
    %4405 = vmatpush1.msra.mxu0 0.0
    %4406 = vmatprep.subr.mxu0 0.0
    %4407 = vmatpush1.msra.mxu0 0.0
    %4408 = vmatprep.subr.mxu0 0.0
    %4409 = vmatpush1.msra.mxu0 0.0
    %4410 = vmatprep.subr.mxu0 0.0
    %4411 = vmatpush1.msra.mxu0 0.0
    %4412 = vmatprep.subr.mxu0 0.0
    %4413 = vmatpush1.msra.mxu0 0.0
    %4414 = vmatprep.subr.mxu0 0.0
    %4415 = vmatpush1.msra.mxu0 0.0
    %4416 = vmatprep.subr.mxu0 0.0
    %4417 = vmatpush1.msra.mxu0 0.0
    %4418 = vmatprep.subr.mxu0 0.0
    %4419 = vmatpush1.msra.mxu0 0.0
    %4420 = vmatprep.subr.mxu0 0.0
    %4421 = vmatpush1.msra.mxu0 0.0
    %4422 = vmatprep.subr.mxu0 0.0
    %4423 = vmatpush1.msra.mxu0 0.0
    %4424 = vmatprep.subr.mxu0 0.0
    %4425 = vmatpush1.msra.mxu0 0.0
    %4426 = vmatprep.subr.mxu0 0.0
    %4427 = vmatpush1.msra.mxu0 0.0
    %4428 = vmatprep.subr.mxu0 0.0
    %4429 = vmatpush1.msra.mxu0 0.0
    %4430 = vmatprep.subr.mxu0 0.0
    %4431 = vmatpush1.msra.mxu0 0.0
    %4432 = vmatprep.subr.mxu0 0.0
    %4433 = vmatpush1.msra.mxu0 0.0
    %4434 = vmatprep.subr.mxu0 0.0
    %4435 = vmatpush1.msra.mxu0 0.0
    %4436 = vmatprep.subr.mxu0 0.0
    %4437 = vmatpush1.msra.mxu0 0.0
    %4438 = vmatprep.subr.mxu0 0.0
    %4439 = vmatpush1.msra.mxu0 0.0
    %4440 = vmatprep.subr.mxu0 0.0
    %4441 = vmatpush1.msra.mxu0 0.0
    %4442 = vmatprep.subr.mxu0 0.0
    %4443 = vmatpush1.msra.mxu0 0.0
    %4444 = vmatprep.subr.mxu0 0.0
    %4445 = vmatpush1.msra.mxu0 0.0
    %4446 = vmatprep.subr.mxu0 0.0
    %4447 = vmatpush1.msra.mxu0 0.0
    %4448 = vmatprep.subr.mxu0 0.0
    %4449 = vmatpush1.msra.mxu0 0.0
    %4450 = vmatprep.subr.mxu0 0.0
    %4451 = vmatpush1.msra.mxu0 0.0
    %4452 = vmatprep.subr.mxu0 0.0
    %4453 = vmatpush1.msra.mxu0 0.0
    %4454 = vmatprep.subr.mxu0 0.0
    %4455 = vmatpush1.msra.mxu0 0.0
    %4456 = vmatprep.subr.mxu0 0.0
    %4457 = vmatpush1.msra.mxu0 0.0
    %4458 = vmatprep.subr.mxu0 0.0
    %4459 = vmatpush1.msra.mxu0 0.0
    %4460 = vmatprep.subr.mxu0 0.0
    %4461 = vmatpush1.msra.mxu0 0.0
    %4462 = vmatprep.mubr.f32.mxu0 0.0
    %4463 = vmatmul.mubr.f32.gmra.mrb[0].mxu0 %v4396
    %v4464 = vpop.f32.mrb[0].mxu0
    %v4465 = vadd.f32 0.0, %v4464
    %v4466 = vpop.f32.mrb[0].mxu0
    %v4467 = vadd.f32 0.0, %v4466
    %4468 = vdwg.mxu0
    %4469 = vmatprep.subr.mxu0 %v164
    %4470 = vmatpush1.msra.mxu0 %v163
    %4471 = vmatprep.subr.mxu0 %v169
    %4472 = vmatpush1.msra.mxu0 %v168
    %4473 = vmatprep.subr.mxu0 %v174
    %4474 = vmatpush1.msra.mxu0 %v173
    %4475 = vmatprep.subr.mxu0 0.0
    %4476 = vmatpush1.msra.mxu0 0.0
    %4477 = vmatprep.subr.mxu0 0.0
    %4478 = vmatpush1.msra.mxu0 0.0
    %4479 = vmatprep.subr.mxu0 0.0
    %4480 = vmatpush1.msra.mxu0 0.0
    %4481 = vmatprep.subr.mxu0 0.0
    %4482 = vmatpush1.msra.mxu0 0.0
    %4483 = vmatprep.subr.mxu0 0.0
    %4484 = vmatpush1.msra.mxu0 0.0
    %4485 = vmatprep.subr.mxu0 0.0
    %4486 = vmatpush1.msra.mxu0 0.0
    %4487 = vmatprep.subr.mxu0 0.0
    %4488 = vmatpush1.msra.mxu0 0.0
    %4489 = vmatprep.subr.mxu0 0.0
    %4490 = vmatpush1.msra.mxu0 0.0
    %4491 = vmatprep.subr.mxu0 0.0
    %4492 = vmatpush1.msra.mxu0 0.0
    %4493 = vmatprep.subr.mxu0 0.0
    %4494 = vmatpush1.msra.mxu0 0.0
    %4495 = vmatprep.subr.mxu0 0.0
    %4496 = vmatpush1.msra.mxu0 0.0
    %4497 = vmatprep.subr.mxu0 0.0
    %4498 = vmatpush1.msra.mxu0 0.0
    %4499 = vmatprep.subr.mxu0 0.0
    %4500 = vmatpush1.msra.mxu0 0.0
    %4501 = vmatprep.subr.mxu0 0.0
    %4502 = vmatpush1.msra.mxu0 0.0
    %4503 = vmatprep.subr.mxu0 0.0
    %4504 = vmatpush1.msra.mxu0 0.0
    %4505 = vmatprep.subr.mxu0 0.0
    %4506 = vmatpush1.msra.mxu0 0.0
    %4507 = vmatprep.subr.mxu0 0.0
    %4508 = vmatpush1.msra.mxu0 0.0
    %4509 = vmatprep.subr.mxu0 0.0
    %4510 = vmatpush1.msra.mxu0 0.0
    %4511 = vmatprep.subr.mxu0 0.0
    %4512 = vmatpush1.msra.mxu0 0.0
    %4513 = vmatprep.subr.mxu0 0.0
    %4514 = vmatpush1.msra.mxu0 0.0
    %4515 = vmatprep.subr.mxu0 0.0
    %4516 = vmatpush1.msra.mxu0 0.0
    %4517 = vmatprep.subr.mxu0 0.0
    %4518 = vmatpush1.msra.mxu0 0.0
    %4519 = vmatprep.subr.mxu0 0.0
    %4520 = vmatpush1.msra.mxu0 0.0
    %4521 = vmatprep.subr.mxu0 0.0
    %4522 = vmatpush1.msra.mxu0 0.0
    %4523 = vmatprep.subr.mxu0 0.0
    %4524 = vmatpush1.msra.mxu0 0.0
    %4525 = vmatprep.subr.mxu0 0.0
    %4526 = vmatpush1.msra.mxu0 0.0
    %4527 = vmatprep.subr.mxu0 0.0
    %4528 = vmatpush1.msra.mxu0 0.0
    %4529 = vmatprep.subr.mxu0 0.0
    %4530 = vmatpush1.msra.mxu0 0.0
    %4531 = vmatprep.subr.mxu0 0.0
    %4532 = vmatpush1.msra.mxu0 0.0
    %4533 = vmatprep.mubr.f32.mxu0 0.0
    %4534 = vmatmul.mubr.f32.gmra.mrb[0].mxu0 %v4396
    %v4535 = vpop.f32.mrb[0].mxu0
    %v4536 = vadd.f32 0.0, %v4535
    %v4537 = vpop.f32.mrb[0].mxu0
    %v4538 = vadd.f32 0.0, %v4537
    %4539 = vdwg.mxu0
    %4540 = vmatprep.subr.mxu0 0.0
    %4541 = vmatpush1.msra.mxu0 %v165
    %4542 = vmatprep.subr.mxu0 0.0
    %4543 = vmatpush1.msra.mxu0 %v170
    %4544 = vmatprep.subr.mxu0 0.0
    %4545 = vmatpush1.msra.mxu0 %v175
    %4546 = vmatprep.subr.mxu0 0.0
    %4547 = vmatpush1.msra.mxu0 0.0
    %4548 = vmatprep.subr.mxu0 0.0
    %4549 = vmatpush1.msra.mxu0 0.0
    %4550 = vmatprep.subr.mxu0 0.0
    %4551 = vmatpush1.msra.mxu0 0.0
    %4552 = vmatprep.subr.mxu0 0.0
    %4553 = vmatpush1.msra.mxu0 0.0
    %4554 = vmatprep.subr.mxu0 0.0
    %4555 = vmatpush1.msra.mxu0 0.0
    %4556 = vmatprep.subr.mxu0 0.0
    %4557 = vmatpush1.msra.mxu0 0.0
    %4558 = vmatprep.subr.mxu0 0.0
    %4559 = vmatpush1.msra.mxu0 0.0
    %4560 = vmatprep.subr.mxu0 0.0
    %4561 = vmatpush1.msra.mxu0 0.0
    %4562 = vmatprep.subr.mxu0 0.0
    %4563 = vmatpush1.msra.mxu0 0.0
    %4564 = vmatprep.subr.mxu0 0.0
    %4565 = vmatpush1.msra.mxu0 0.0
    %4566 = vmatprep.subr.mxu0 0.0
    %4567 = vmatpush1.msra.mxu0 0.0
    %4568 = vmatprep.subr.mxu0 0.0
    %4569 = vmatpush1.msra.mxu0 0.0
    %4570 = vmatprep.subr.mxu0 0.0
    %4571 = vmatpush1.msra.mxu0 0.0
    %4572 = vmatprep.subr.mxu0 0.0
    %4573 = vmatpush1.msra.mxu0 0.0
    %4574 = vmatprep.subr.mxu0 0.0
    %4575 = vmatpush1.msra.mxu0 0.0
    %4576 = vmatprep.subr.mxu0 0.0
    %4577 = vmatpush1.msra.mxu0 0.0
    %4578 = vmatprep.subr.mxu0 0.0
    %4579 = vmatpush1.msra.mxu0 0.0
    %4580 = vmatprep.subr.mxu0 0.0
    %4581 = vmatpush1.msra.mxu0 0.0
    %4582 = vmatprep.subr.mxu0 0.0
    %4583 = vmatpush1.msra.mxu0 0.0
    %4584 = vmatprep.subr.mxu0 0.0
    %4585 = vmatpush1.msra.mxu0 0.0
    %4586 = vmatprep.subr.mxu0 0.0
    %4587 = vmatpush1.msra.mxu0 0.0
    %4588 = vmatprep.subr.mxu0 0.0
    %4589 = vmatpush1.msra.mxu0 0.0
    %4590 = vmatprep.subr.mxu0 0.0
    %4591 = vmatpush1.msra.mxu0 0.0
    %4592 = vmatprep.subr.mxu0 0.0
    %4593 = vmatpush1.msra.mxu0 0.0
    %4594 = vmatprep.subr.mxu0 0.0
    %4595 = vmatpush1.msra.mxu0 0.0
    %4596 = vmatprep.subr.mxu0 0.0
    %4597 = vmatpush1.msra.mxu0 0.0
    %4598 = vmatprep.subr.mxu0 0.0
    %4599 = vmatpush1.msra.mxu0 0.0
    %4600 = vmatprep.subr.mxu0 0.0
    %4601 = vmatpush1.msra.mxu0 0.0
    %4602 = vmatprep.subr.mxu0 0.0
    %4603 = vmatpush1.msra.mxu0 0.0
    %4604 = vmatprep.mubr.f32.mxu0 0.0
    %4605 = vmatmul.mubr.f32.gmra.mrb[0].mxu0 %v4396
    %v4606 = vpop.f32.mrb[0].mxu0
    %v4607 = vadd.f32 0.0, %v4606
    %v4608 = vpop.f32.mrb[0].mxu0
    %4609 = vdwg.mxu0
    %4610 = vmatprep.subr.mxu0 0.0
    %4611 = vmatpush1.msra.mxu0 %v81
    %4612 = vmatprep.subr.mxu0 0.0
    %4613 = vmatpush1.msra.mxu0 %v82
    %4614 = vmatprep.subr.mxu0 0.0
    %4615 = vmatpush1.msra.mxu0 %v83
    %4616 = vmatprep.subr.mxu0 0.0
    %4617 = vmatpush1.msra.mxu0 %v84
    %4618 = vmatprep.subr.mxu0 0.0
    %4619 = vmatpush1.msra.mxu0 %v85
    %4620 = vmatprep.subr.mxu0 0.0
    %4621 = vmatpush1.msra.mxu0 %v86
    %4622 = vmatprep.subr.mxu0 0.0
    %4623 = vmatpush1.msra.mxu0 %v87
    %4624 = vmatprep.subr.mxu0 0.0
    %4625 = vmatpush1.msra.mxu0 %v88
    %4626 = vmatprep.subr.mxu0 0.0
    %4627 = vmatpush1.msra.mxu0 %v89
    %4628 = vmatprep.subr.mxu0 0.0
    %4629 = vmatpush1.msra.mxu0 %v90
    %4630 = vmatprep.subr.mxu0 0.0
    %4631 = vmatpush1.msra.mxu0 %v91
    %4632 = vmatprep.subr.mxu0 0.0
    %4633 = vmatpush1.msra.mxu0 %v92
    %4634 = vmatprep.subr.mxu0 0.0
    %4635 = vmatpush1.msra.mxu0 %v93
    %4636 = vmatprep.subr.mxu0 0.0
    %4637 = vmatpush1.msra.mxu0 %v94
    %4638 = vmatprep.subr.mxu0 0.0
    %4639 = vmatpush1.msra.mxu0 %v95
    %4640 = vmatprep.subr.mxu0 0.0
    %4641 = vmatpush1.msra.mxu0 %v96
    %4642 = vmatprep.subr.mxu0 0.0
    %4643 = vmatpush1.msra.mxu0 0.0
    %4644 = vmatprep.subr.mxu0 0.0
    %4645 = vmatpush1.msra.mxu0 0.0
    %4646 = vmatprep.subr.mxu0 0.0
    %4647 = vmatpush1.msra.mxu0 0.0
    %4648 = vmatprep.subr.mxu0 0.0
    %4649 = vmatpush1.msra.mxu0 0.0
    %4650 = vmatprep.subr.mxu0 0.0
    %4651 = vmatpush1.msra.mxu0 0.0
    %4652 = vmatprep.subr.mxu0 0.0
    %4653 = vmatpush1.msra.mxu0 0.0
    %4654 = vmatprep.subr.mxu0 0.0
    %4655 = vmatpush1.msra.mxu0 0.0
    %4656 = vmatprep.subr.mxu0 0.0
    %4657 = vmatpush1.msra.mxu0 0.0
    %4658 = vmatprep.subr.mxu0 0.0
    %4659 = vmatpush1.msra.mxu0 0.0
    %4660 = vmatprep.subr.mxu0 0.0
    %4661 = vmatpush1.msra.mxu0 0.0
    %4662 = vmatprep.subr.mxu0 0.0
    %4663 = vmatpush1.msra.mxu0 0.0
    %4664 = vmatprep.subr.mxu0 0.0
    %4665 = vmatpush1.msra.mxu0 0.0
    %4666 = vmatprep.subr.mxu0 0.0
    %4667 = vmatpush1.msra.mxu0 0.0
    %4668 = vmatprep.subr.mxu0 0.0
    %4669 = vmatpush1.msra.mxu0 0.0
    %4670 = vmatprep.subr.mxu0 0.0
    %4671 = vmatpush1.msra.mxu0 0.0
    %4672 = vmatprep.subr.mxu0 0.0
    %4673 = vmatpush1.msra.mxu0 0.0
    %4674 = vmatprep.mubr.f32.mxu0 0.0
    %4675 = vmatmul.mubr.f32.gmra.mrb[0].mxu0 %v4250
    %v4676 = vpop.f32.mrb[0].mxu0
    %v4677 = vadd.f32 0.0, %v4676
    %v4678 = vpop.f32.mrb[0].mxu0
    %4679 = vdwg.mxu0
    %v4680 = vmul.f32 %v4465, %v4677
    %4681 = vmatprep.subr.mxu0 %v98
    %4682 = vmatpush1.msra.mxu0 %v97
    %4683 = vmatprep.subr.mxu0 %v102
    %4684 = vmatpush1.msra.mxu0 %v101
    %4685 = vmatprep.subr.mxu0 %v106
    %4686 = vmatpush1.msra.mxu0 %v105
    %4687 = vmatprep.subr.mxu0 %v110
    %4688 = vmatpush1.msra.mxu0 %v109
    %4689 = vmatprep.subr.mxu0 %v114
    %4690 = vmatpush1.msra.mxu0 %v113
    %4691 = vmatprep.subr.mxu0 %v118
    %4692 = vmatpush1.msra.mxu0 %v117
    %4693 = vmatprep.subr.mxu0 %v122
    %4694 = vmatpush1.msra.mxu0 %v121
    %4695 = vmatprep.subr.mxu0 %v126
    %4696 = vmatpush1.msra.mxu0 %v125
    %4697 = vmatprep.subr.mxu0 %v130
    %4698 = vmatpush1.msra.mxu0 %v129
    %4699 = vmatprep.subr.mxu0 %v134
    %4700 = vmatpush1.msra.mxu0 %v133
    %4701 = vmatprep.subr.mxu0 %v138
    %4702 = vmatpush1.msra.mxu0 %v137
    %4703 = vmatprep.subr.mxu0 %v142
    %4704 = vmatpush1.msra.mxu0 %v141
    %4705 = vmatprep.subr.mxu0 %v146
    %4706 = vmatpush1.msra.mxu0 %v145
    %4707 = vmatprep.subr.mxu0 %v150
    %4708 = vmatpush1.msra.mxu0 %v149
    %4709 = vmatprep.subr.mxu0 %v154
    %4710 = vmatpush1.msra.mxu0 %v153
    %4711 = vmatprep.subr.mxu0 %v158
    %4712 = vmatpush1.msra.mxu0 %v157
    %4713 = vmatprep.subr.mxu0 0.0
    %4714 = vmatpush1.msra.mxu0 0.0
    %4715 = vmatprep.subr.mxu0 0.0
    %4716 = vmatpush1.msra.mxu0 0.0
    %4717 = vmatprep.subr.mxu0 0.0
    %4718 = vmatpush1.msra.mxu0 0.0
    %4719 = vmatprep.subr.mxu0 0.0
    %4720 = vmatpush1.msra.mxu0 0.0
    %4721 = vmatprep.subr.mxu0 0.0
    %4722 = vmatpush1.msra.mxu0 0.0
    %4723 = vmatprep.subr.mxu0 0.0
    %4724 = vmatpush1.msra.mxu0 0.0
    %4725 = vmatprep.subr.mxu0 0.0
    %4726 = vmatpush1.msra.mxu0 0.0
    %4727 = vmatprep.subr.mxu0 0.0
    %4728 = vmatpush1.msra.mxu0 0.0
    %4729 = vmatprep.subr.mxu0 0.0
    %4730 = vmatpush1.msra.mxu0 0.0
    %4731 = vmatprep.subr.mxu0 0.0
    %4732 = vmatpush1.msra.mxu0 0.0
    %4733 = vmatprep.subr.mxu0 0.0
    %4734 = vmatpush1.msra.mxu0 0.0
    %4735 = vmatprep.subr.mxu0 0.0
    %4736 = vmatpush1.msra.mxu0 0.0
    %4737 = vmatprep.subr.mxu0 0.0
    %4738 = vmatpush1.msra.mxu0 0.0
    %4739 = vmatprep.subr.mxu0 0.0
    %4740 = vmatpush1.msra.mxu0 0.0
    %4741 = vmatprep.subr.mxu0 0.0
    %4742 = vmatpush1.msra.mxu0 0.0
    %4743 = vmatprep.subr.mxu0 0.0
    %4744 = vmatpush1.msra.mxu0 0.0
    %4745 = vmatprep.mubr.f32.mxu0 0.0
    %4746 = vmatmul.mubr.f32.gmra.mrb[0].mxu0 %v4680
    %v4747 = vpop.f32.mrb[0].mxu0
    %v4748 = vadd.f32 0.0, %v4747
    %v4749 = vpop.f32.mrb[0].mxu0
    %v4750 = vadd.f32 0.0, %v4749
    %4751 = vdwg.mxu0
    %4752 = vmatprep.subr.mxu0 %v100
    %4753 = vmatpush1.msra.mxu0 %v99
    %4754 = vmatprep.subr.mxu0 %v104
    %4755 = vmatpush1.msra.mxu0 %v103
    %4756 = vmatprep.subr.mxu0 %v108
    %4757 = vmatpush1.msra.mxu0 %v107
    %4758 = vmatprep.subr.mxu0 %v112
    %4759 = vmatpush1.msra.mxu0 %v111
    %4760 = vmatprep.subr.mxu0 %v116
    %4761 = vmatpush1.msra.mxu0 %v115
    %4762 = vmatprep.subr.mxu0 %v120
    %4763 = vmatpush1.msra.mxu0 %v119
    %4764 = vmatprep.subr.mxu0 %v124
    %4765 = vmatpush1.msra.mxu0 %v123
    %4766 = vmatprep.subr.mxu0 %v128
    %4767 = vmatpush1.msra.mxu0 %v127
    %4768 = vmatprep.subr.mxu0 %v132
    %4769 = vmatpush1.msra.mxu0 %v131
    %4770 = vmatprep.subr.mxu0 %v136
    %4771 = vmatpush1.msra.mxu0 %v135
    %4772 = vmatprep.subr.mxu0 %v140
    %4773 = vmatpush1.msra.mxu0 %v139
    %4774 = vmatprep.subr.mxu0 %v144
    %4775 = vmatpush1.msra.mxu0 %v143
    %4776 = vmatprep.subr.mxu0 %v148
    %4777 = vmatpush1.msra.mxu0 %v147
    %4778 = vmatprep.subr.mxu0 %v152
    %4779 = vmatpush1.msra.mxu0 %v151
    %4780 = vmatprep.subr.mxu0 %v156
    %4781 = vmatpush1.msra.mxu0 %v155
    %4782 = vmatprep.subr.mxu0 %v160
    %4783 = vmatpush1.msra.mxu0 %v159
    %4784 = vmatprep.subr.mxu0 0.0
    %4785 = vmatpush1.msra.mxu0 0.0
    %4786 = vmatprep.subr.mxu0 0.0
    %4787 = vmatpush1.msra.mxu0 0.0
    %4788 = vmatprep.subr.mxu0 0.0
    %4789 = vmatpush1.msra.mxu0 0.0
    %4790 = vmatprep.subr.mxu0 0.0
    %4791 = vmatpush1.msra.mxu0 0.0
    %4792 = vmatprep.subr.mxu0 0.0
    %4793 = vmatpush1.msra.mxu0 0.0
    %4794 = vmatprep.subr.mxu0 0.0
    %4795 = vmatpush1.msra.mxu0 0.0
    %4796 = vmatprep.subr.mxu0 0.0
    %4797 = vmatpush1.msra.mxu0 0.0
    %4798 = vmatprep.subr.mxu0 0.0
    %4799 = vmatpush1.msra.mxu0 0.0
    %4800 = vmatprep.subr.mxu0 0.0
    %4801 = vmatpush1.msra.mxu0 0.0
    %4802 = vmatprep.subr.mxu0 0.0
    %4803 = vmatpush1.msra.mxu0 0.0
    %4804 = vmatprep.subr.mxu0 0.0
    %4805 = vmatpush1.msra.mxu0 0.0
    %4806 = vmatprep.subr.mxu0 0.0
    %4807 = vmatpush1.msra.mxu0 0.0
    %4808 = vmatprep.subr.mxu0 0.0
    %4809 = vmatpush1.msra.mxu0 0.0
    %4810 = vmatprep.subr.mxu0 0.0
    %4811 = vmatpush1.msra.mxu0 0.0
    %4812 = vmatprep.subr.mxu0 0.0
    %4813 = vmatpush1.msra.mxu0 0.0
    %4814 = vmatprep.subr.mxu0 0.0
    %4815 = vmatpush1.msra.mxu0 0.0
    %4816 = vmatprep.mubr.f32.mxu0 0.0
    %4817 = vmatmul.mubr.f32.gmra.mrb[0].mxu0 %v4680
    %v4818 = vpop.f32.mrb[0].mxu0
    %v4819 = vadd.f32 0.0, %v4818
    %v4820 = vpop.f32.mrb[0].mxu0
    %v4821 = vadd.f32 0.0, %v4820
    %4822 = vdwg.mxu0
    %v4823 = vadd.f32 %v4467, %v4748
    %v4824 = vadd.f32 %v4536, %v4750
    %v4825 = vadd.f32 %v4538, %v4819
    %v4826 = vadd.f32 %v4607, %v4821
    %v4827 = vxor.u32 %v4823, 2147483648
    %v4828 = vmul.f32 %v4827, 1.442695
    %v4829 = vpow.pop %v4828
    %v4830 = vadd.f32 %v4829, 1.0
    %v4831 = vrcp.pop %v4830
    %v4832 = vmul.f32 1.0, %v4831
    %v4833 = vxor.u32 %v4824, 2147483648
    %v4834 = vmul.f32 %v4833, 1.442695
    %v4835 = vpow.pop %v4834
    %v4836 = vadd.f32 %v4835, 1.0
    %v4837 = vrcp.pop %v4836
    %v4838 = vmul.f32 1.0, %v4837
    %v4839 = vxor.u32 %v4825, 2147483648
    %v4840 = vmul.f32 %v4839, 1.442695
    %v4841 = vpow.pop %v4840
    %v4842 = vadd.f32 %v4841, 1.0
    %v4843 = vrcp.pop %v4842
    %v4844 = vmul.f32 1.0, %v4843
    %v4845 = vtanh.pop %v4826
    %v4846 = vmul.f32 %v4838, %v4299
    %v4847 = vmul.f32 %v4832, %v4845
    %v4848 = vadd.f32 %v4846, %v4847
    %v4849 = vtanh.pop %v4848
    %v4850 = vmul.f32 %v4844, %v4849
    %v4851 = vld [vmem:[%s1 + $0x6] sm:$0x1]
    %v4852 = vld [vmem:[%s1 + $0xe] sm:$0x1]
    %v4853 = vld [vmem:[%s1 + $0x16] sm:$0x1]
    %v4854 = vld [vmem:[%s1 + $0x1e] sm:$0x1]
    %v4855 = vld [vmem:[%s1 + $0x26] sm:$0x1]
    %v4856 = vld [vmem:[%s1 + $0x2e] sm:$0x1]
    %v4857 = vld [vmem:[%s1 + $0x36] sm:$0x1]
    %v4858 = vld [vmem:[%s1 + $0x3e] sm:$0x1]
    %v4859 = vsub.f32 %v4850, %v4250
    %4861 = vset.pattern.permute.xlu0 0
    %4862 = vperm.xlu0 %4861, %v4851
    %v4863 = vpop.permute.xlu0 %4862
    %4866 = vset.pattern.permute.xlu0 0
    %4867 = vperm.xlu0 %4866, %v4852
    %v4868 = vpop.permute.xlu0 %4867
    %4871 = vset.pattern.permute.xlu0 0
    %4872 = vperm.xlu0 %4871, %v4853
    %v4873 = vpop.permute.xlu0 %4872
    %4876 = vset.pattern.permute.xlu0 0
    %4877 = vperm.xlu0 %4876, %v4854
    %v4878 = vpop.permute.xlu0 %4877
    %4881 = vset.pattern.permute.xlu0 0
    %4882 = vperm.xlu0 %4881, %v4855
    %v4883 = vpop.permute.xlu0 %4882
    %4886 = vset.pattern.permute.xlu0 0
    %4887 = vperm.xlu0 %4886, %v4856
    %v4888 = vpop.permute.xlu0 %4887
    %4891 = vset.pattern.permute.xlu0 0
    %4892 = vperm.xlu0 %4891, %v4857
    %v4893 = vpop.permute.xlu0 %4892
    %4896 = vset.pattern.permute.xlu0 0
    %4897 = vperm.xlu0 %4896, %v4858
    %v4898 = vpop.permute.xlu0 %4897
    %v4901 = vrot.slane %v4859, 1
    %v4902 = vrot.slane %v4859, 2
    %v4903 = vrot.slane %v4859, 3
    %v4904 = vrot.slane %v4859, 4
    %v4905 = vrot.slane %v4859, 5
    %v4906 = vrot.slane %v4859, 6
    %v4907 = vrot.slane %v4859, 7
    %v4916 = vmul.f32 %v4863, %v4859
    %v4917 = vmul.f32 %v4868, %v4901
    %v4918 = vmul.f32 %v4873, %v4902
    %v4919 = vmul.f32 %v4878, %v4903
    %v4920 = vmul.f32 %v4883, %v4904
    %v4921 = vmul.f32 %v4888, %v4905
    %v4922 = vmul.f32 %v4893, %v4906
    %v4923 = vmul.f32 %v4898, %v4907
    %v4932 = vrot.slane %v4917, 7
    %v4933 = vsel %vm193, %v4932, %v4916
    %v4934 = vrot.slane %v4918, 6
    %v4935 = vsel %vm196, %v4934, %v4933
    %v4936 = vrot.slane %v4919, 5
    %v4937 = vsel %vm199, %v4936, %v4935
    %v4938 = vrot.slane %v4920, 4
    %v4939 = vsel %vm202, %v4938, %v4937
    %v4940 = vrot.slane %v4921, 3
    %v4941 = vsel %vm205, %v4940, %v4939
    %v4942 = vrot.slane %v4922, 2
    %v4943 = vsel %vm208, %v4942, %v4941
    %v4944 = vrot.slane %v4923, 1
    %v4945 = vsel %vm211, %v4944, %v4943
    %v4947 = vadd.f32 %v4250, %v4945
    %v4948 = vsub.f32 %v4848, %v4299
    %v4950 = vrot.slane %v4948, 1
    %v4951 = vrot.slane %v4948, 2
    %v4952 = vrot.slane %v4948, 3
    %v4953 = vrot.slane %v4948, 4
    %v4954 = vrot.slane %v4948, 5
    %v4955 = vrot.slane %v4948, 6
    %v4956 = vrot.slane %v4948, 7
    %v4965 = vmul.f32 %v4863, %v4948
    %v4966 = vmul.f32 %v4868, %v4950
    %v4967 = vmul.f32 %v4873, %v4951
    %v4968 = vmul.f32 %v4878, %v4952
    %v4969 = vmul.f32 %v4883, %v4953
    %v4970 = vmul.f32 %v4888, %v4954
    %v4971 = vmul.f32 %v4893, %v4955
    %v4972 = vmul.f32 %v4898, %v4956
    %v4981 = vrot.slane %v4966, 7
    %v4982 = vsel %vm193, %v4981, %v4965
    %v4983 = vrot.slane %v4967, 6
    %v4984 = vsel %vm196, %v4983, %v4982
    %v4985 = vrot.slane %v4968, 5
    %v4986 = vsel %vm199, %v4985, %v4984
    %v4987 = vrot.slane %v4969, 4
    %v4988 = vsel %vm202, %v4987, %v4986
    %v4989 = vrot.slane %v4970, 3
    %v4990 = vsel %vm205, %v4989, %v4988
    %v4991 = vrot.slane %v4971, 2
    %v4992 = vsel %vm208, %v4991, %v4990
    %v4993 = vrot.slane %v4972, 1
    %v4994 = vsel %vm211, %v4993, %v4992
    %v4996 = vadd.f32 %v4299, %v4994
    %v4998 = vcombine.high %v4947, %v4947
    %v5000 = vunpack.c.l.s4 1966171168
    %v5001 = vunpack.c.0.s8 %v5000
    %v5002 = vlaneseq
    %v5003 = vshrl.u32 %v5002, 7
    %v5004 = vsub.s32 %v5001, %v5003
    %v5005 = vrot.slane %v4947, %v5004
    %v5007 = vunpack.c.l.s4 1966171168
    %v5008 = vunpack.c.0.s8 %v5007
    %v5009 = vlaneseq
    %v5010 = vshrl.u32 %v5009, 7
    %v5011 = vsub.s32 %v5008, %v5010
    %v5012 = vrot.slane %v4998, %v5011
    %v5013 = vcombine.high %v5005, %v5005
    %v5014 = vcombine.high %v5012, %v5012
    %v5016 = vunpack.c.l.s4 1966171168
    %v5017 = vunpack.c.0.s8 %v5016
    %v5018 = vlaneseq
    %v5019 = vshrl.u32 %v5018, 7
    %v5020 = vsub.s32 %v5017, %v5019
    %v5021 = vrot.slane %v5005, %v5020
    %v5023 = vunpack.c.l.s4 1966171168
    %v5024 = vunpack.c.0.s8 %v5023
    %v5025 = vlaneseq
    %v5026 = vshrl.u32 %v5025, 7
    %v5027 = vsub.s32 %v5024, %v5026
    %v5028 = vrot.slane %v5012, %v5027
    %v5030 = vunpack.c.l.s4 1966171168
    %v5031 = vunpack.c.0.s8 %v5030
    %v5032 = vlaneseq
    %v5033 = vshrl.u32 %v5032, 7
    %v5034 = vsub.s32 %v5031, %v5033
    %v5035 = vrot.slane %v5013, %v5034
    %v5037 = vunpack.c.l.s4 1966171168
    %v5038 = vunpack.c.0.s8 %v5037
    %v5039 = vlaneseq
    %v5040 = vshrl.u32 %v5039, 7
    %v5041 = vsub.s32 %v5038, %v5040
    %v5042 = vrot.slane %v5014, %v5041
    %v5043 = vcombine.high %v5021, %v5021
    %v5044 = vcombine.high %v5028, %v5028
    %v5045 = vcombine.high %v5035, %v5035
    %v5046 = vcombine.high %v5042, %v5042
    %5055 = vst [vmem:[#allocation10 + $0x6] sm:$0x1] %v5021
    %5056 = vst [vmem:[#allocation10 + $0xe] sm:$0x1] %v5035
    %5057 = vst [vmem:[#allocation10 + $0x16] sm:$0x1] %v5043
    %5058 = vst [vmem:[#allocation10 + $0x1e] sm:$0x1] %v5045
    %5059 = vst [vmem:[#allocation10 + $0x26] sm:$0x1] %v5028
    %5060 = vst [vmem:[#allocation10 + $0x2e] sm:$0x1] %v5042
    %5061 = vst [vmem:[#allocation10 + $0x36] sm:$0x1] %v5044
    %5062 = vst [vmem:[#allocation10 + $0x3e] sm:$0x1] %v5046
    %v5063 = vld [vmem:[%s0 + $0x7] sm:$0x1]
    %v5064 = vld [vmem:[%s0 + $0xf] sm:$0x1]
    %v5065 = vld [vmem:[%s0 + $0x17] sm:$0x1]
    %v5066 = vld [vmem:[%s0 + $0x1f] sm:$0x1]
    %v5067 = vld [vmem:[%s0 + $0x27] sm:$0x1]
    %v5068 = vld [vmem:[%s0 + $0x2f] sm:$0x1]
    %v5069 = vld [vmem:[%s0 + $0x37] sm:$0x1]
    %v5070 = vld [vmem:[%s0 + $0x3f] sm:$0x1]
    %v5079 = vrot.slane %v5064, 7
    %v5080 = vsel %vm193, %v5079, %v5063
    %v5081 = vrot.slane %v5065, 6
    %v5082 = vsel %vm196, %v5081, %v5080
    %v5083 = vrot.slane %v5066, 5
    %v5084 = vsel %vm199, %v5083, %v5082
    %v5085 = vrot.slane %v5067, 4
    %v5086 = vsel %vm202, %v5085, %v5084
    %v5087 = vrot.slane %v5068, 3
    %v5088 = vsel %vm205, %v5087, %v5086
    %v5089 = vrot.slane %v5069, 2
    %v5090 = vsel %vm208, %v5089, %v5088
    %v5091 = vrot.slane %v5070, 1
    %v5092 = vsel %vm211, %v5091, %v5090
    %v5093 = vsel %vm213, %v5092, 0
    %5095 = vmatprep.subr.mxu0 %v162
    %5096 = vmatpush1.msra.mxu0 %v161
    %5097 = vmatprep.subr.mxu0 %v167
    %5098 = vmatpush1.msra.mxu0 %v166
    %5099 = vmatprep.subr.mxu0 %v172
    %5100 = vmatpush1.msra.mxu0 %v171
    %5101 = vmatprep.subr.mxu0 0.0
    %5102 = vmatpush1.msra.mxu0 0.0
    %5103 = vmatprep.subr.mxu0 0.0
    %5104 = vmatpush1.msra.mxu0 0.0
    %5105 = vmatprep.subr.mxu0 0.0
    %5106 = vmatpush1.msra.mxu0 0.0
    %5107 = vmatprep.subr.mxu0 0.0
    %5108 = vmatpush1.msra.mxu0 0.0
    %5109 = vmatprep.subr.mxu0 0.0
    %5110 = vmatpush1.msra.mxu0 0.0
    %5111 = vmatprep.subr.mxu0 0.0
    %5112 = vmatpush1.msra.mxu0 0.0
    %5113 = vmatprep.subr.mxu0 0.0
    %5114 = vmatpush1.msra.mxu0 0.0
    %5115 = vmatprep.subr.mxu0 0.0
    %5116 = vmatpush1.msra.mxu0 0.0
    %5117 = vmatprep.subr.mxu0 0.0
    %5118 = vmatpush1.msra.mxu0 0.0
    %5119 = vmatprep.subr.mxu0 0.0
    %5120 = vmatpush1.msra.mxu0 0.0
    %5121 = vmatprep.subr.mxu0 0.0
    %5122 = vmatpush1.msra.mxu0 0.0
    %5123 = vmatprep.subr.mxu0 0.0
    %5124 = vmatpush1.msra.mxu0 0.0
    %5125 = vmatprep.subr.mxu0 0.0
    %5126 = vmatpush1.msra.mxu0 0.0
    %5127 = vmatprep.subr.mxu0 0.0
    %5128 = vmatpush1.msra.mxu0 0.0
    %5129 = vmatprep.subr.mxu0 0.0
    %5130 = vmatpush1.msra.mxu0 0.0
    %5131 = vmatprep.subr.mxu0 0.0
    %5132 = vmatpush1.msra.mxu0 0.0
    %5133 = vmatprep.subr.mxu0 0.0
    %5134 = vmatpush1.msra.mxu0 0.0
    %5135 = vmatprep.subr.mxu0 0.0
    %5136 = vmatpush1.msra.mxu0 0.0
    %5137 = vmatprep.subr.mxu0 0.0
    %5138 = vmatpush1.msra.mxu0 0.0
    %5139 = vmatprep.subr.mxu0 0.0
    %5140 = vmatpush1.msra.mxu0 0.0
    %5141 = vmatprep.subr.mxu0 0.0
    %5142 = vmatpush1.msra.mxu0 0.0
    %5143 = vmatprep.subr.mxu0 0.0
    %5144 = vmatpush1.msra.mxu0 0.0
    %5145 = vmatprep.subr.mxu0 0.0
    %5146 = vmatpush1.msra.mxu0 0.0
    %5147 = vmatprep.subr.mxu0 0.0
    %5148 = vmatpush1.msra.mxu0 0.0
    %5149 = vmatprep.subr.mxu0 0.0
    %5150 = vmatpush1.msra.mxu0 0.0
    %5151 = vmatprep.subr.mxu0 0.0
    %5152 = vmatpush1.msra.mxu0 0.0
    %5153 = vmatprep.subr.mxu0 0.0
    %5154 = vmatpush1.msra.mxu0 0.0
    %5155 = vmatprep.subr.mxu0 0.0
    %5156 = vmatpush1.msra.mxu0 0.0
    %5157 = vmatprep.subr.mxu0 0.0
    %5158 = vmatpush1.msra.mxu0 0.0
    %5159 = vmatprep.mubr.f32.mxu0 0.0
    %5160 = vmatmul.mubr.f32.gmra.mrb[0].mxu0 %v5093
    %v5161 = vpop.f32.mrb[0].mxu0
    %v5162 = vadd.f32 0.0, %v5161
    %v5163 = vpop.f32.mrb[0].mxu0
    %v5164 = vadd.f32 0.0, %v5163
    %5165 = vdwg.mxu0
    %5166 = vmatprep.subr.mxu0 %v164
    %5167 = vmatpush1.msra.mxu0 %v163
    %5168 = vmatprep.subr.mxu0 %v169
    %5169 = vmatpush1.msra.mxu0 %v168
    %5170 = vmatprep.subr.mxu0 %v174
    %5171 = vmatpush1.msra.mxu0 %v173
    %5172 = vmatprep.subr.mxu0 0.0
    %5173 = vmatpush1.msra.mxu0 0.0
    %5174 = vmatprep.subr.mxu0 0.0
    %5175 = vmatpush1.msra.mxu0 0.0
    %5176 = vmatprep.subr.mxu0 0.0
    %5177 = vmatpush1.msra.mxu0 0.0
    %5178 = vmatprep.subr.mxu0 0.0
    %5179 = vmatpush1.msra.mxu0 0.0
    %5180 = vmatprep.subr.mxu0 0.0
    %5181 = vmatpush1.msra.mxu0 0.0
    %5182 = vmatprep.subr.mxu0 0.0
    %5183 = vmatpush1.msra.mxu0 0.0
    %5184 = vmatprep.subr.mxu0 0.0
    %5185 = vmatpush1.msra.mxu0 0.0
    %5186 = vmatprep.subr.mxu0 0.0
    %5187 = vmatpush1.msra.mxu0 0.0
    %5188 = vmatprep.subr.mxu0 0.0
    %5189 = vmatpush1.msra.mxu0 0.0
    %5190 = vmatprep.subr.mxu0 0.0
    %5191 = vmatpush1.msra.mxu0 0.0
    %5192 = vmatprep.subr.mxu0 0.0
    %5193 = vmatpush1.msra.mxu0 0.0
    %5194 = vmatprep.subr.mxu0 0.0
    %5195 = vmatpush1.msra.mxu0 0.0
    %5196 = vmatprep.subr.mxu0 0.0
    %5197 = vmatpush1.msra.mxu0 0.0
    %5198 = vmatprep.subr.mxu0 0.0
    %5199 = vmatpush1.msra.mxu0 0.0
    %5200 = vmatprep.subr.mxu0 0.0
    %5201 = vmatpush1.msra.mxu0 0.0
    %5202 = vmatprep.subr.mxu0 0.0
    %5203 = vmatpush1.msra.mxu0 0.0
    %5204 = vmatprep.subr.mxu0 0.0
    %5205 = vmatpush1.msra.mxu0 0.0
    %5206 = vmatprep.subr.mxu0 0.0
    %5207 = vmatpush1.msra.mxu0 0.0
    %5208 = vmatprep.subr.mxu0 0.0
    %5209 = vmatpush1.msra.mxu0 0.0
    %5210 = vmatprep.subr.mxu0 0.0
    %5211 = vmatpush1.msra.mxu0 0.0
    %5212 = vmatprep.subr.mxu0 0.0
    %5213 = vmatpush1.msra.mxu0 0.0
    %5214 = vmatprep.subr.mxu0 0.0
    %5215 = vmatpush1.msra.mxu0 0.0
    %5216 = vmatprep.subr.mxu0 0.0
    %5217 = vmatpush1.msra.mxu0 0.0
    %5218 = vmatprep.subr.mxu0 0.0
    %5219 = vmatpush1.msra.mxu0 0.0
    %5220 = vmatprep.subr.mxu0 0.0
    %5221 = vmatpush1.msra.mxu0 0.0
    %5222 = vmatprep.subr.mxu0 0.0
    %5223 = vmatpush1.msra.mxu0 0.0
    %5224 = vmatprep.subr.mxu0 0.0
    %5225 = vmatpush1.msra.mxu0 0.0
    %5226 = vmatprep.subr.mxu0 0.0
    %5227 = vmatpush1.msra.mxu0 0.0
    %5228 = vmatprep.subr.mxu0 0.0
    %5229 = vmatpush1.msra.mxu0 0.0
    %5230 = vmatprep.mubr.f32.mxu0 0.0
    %5231 = vmatmul.mubr.f32.gmra.mrb[0].mxu0 %v5093
    %v5232 = vpop.f32.mrb[0].mxu0
    %v5233 = vadd.f32 0.0, %v5232
    %v5234 = vpop.f32.mrb[0].mxu0
    %v5235 = vadd.f32 0.0, %v5234
    %5236 = vdwg.mxu0
    %5237 = vmatprep.subr.mxu0 0.0
    %5238 = vmatpush1.msra.mxu0 %v165
    %5239 = vmatprep.subr.mxu0 0.0
    %5240 = vmatpush1.msra.mxu0 %v170
    %5241 = vmatprep.subr.mxu0 0.0
    %5242 = vmatpush1.msra.mxu0 %v175
    %5243 = vmatprep.subr.mxu0 0.0
    %5244 = vmatpush1.msra.mxu0 0.0
    %5245 = vmatprep.subr.mxu0 0.0
    %5246 = vmatpush1.msra.mxu0 0.0
    %5247 = vmatprep.subr.mxu0 0.0
    %5248 = vmatpush1.msra.mxu0 0.0
    %5249 = vmatprep.subr.mxu0 0.0
    %5250 = vmatpush1.msra.mxu0 0.0
    %5251 = vmatprep.subr.mxu0 0.0
    %5252 = vmatpush1.msra.mxu0 0.0
    %5253 = vmatprep.subr.mxu0 0.0
    %5254 = vmatpush1.msra.mxu0 0.0
    %5255 = vmatprep.subr.mxu0 0.0
    %5256 = vmatpush1.msra.mxu0 0.0
    %5257 = vmatprep.subr.mxu0 0.0
    %5258 = vmatpush1.msra.mxu0 0.0
    %5259 = vmatprep.subr.mxu0 0.0
    %5260 = vmatpush1.msra.mxu0 0.0
    %5261 = vmatprep.subr.mxu0 0.0
    %5262 = vmatpush1.msra.mxu0 0.0
    %5263 = vmatprep.subr.mxu0 0.0
    %5264 = vmatpush1.msra.mxu0 0.0
    %5265 = vmatprep.subr.mxu0 0.0
    %5266 = vmatpush1.msra.mxu0 0.0
    %5267 = vmatprep.subr.mxu0 0.0
    %5268 = vmatpush1.msra.mxu0 0.0
    %5269 = vmatprep.subr.mxu0 0.0
    %5270 = vmatpush1.msra.mxu0 0.0
    %5271 = vmatprep.subr.mxu0 0.0
    %5272 = vmatpush1.msra.mxu0 0.0
    %5273 = vmatprep.subr.mxu0 0.0
    %5274 = vmatpush1.msra.mxu0 0.0
    %5275 = vmatprep.subr.mxu0 0.0
    %5276 = vmatpush1.msra.mxu0 0.0
    %5277 = vmatprep.subr.mxu0 0.0
    %5278 = vmatpush1.msra.mxu0 0.0
    %5279 = vmatprep.subr.mxu0 0.0
    %5280 = vmatpush1.msra.mxu0 0.0
    %5281 = vmatprep.subr.mxu0 0.0
    %5282 = vmatpush1.msra.mxu0 0.0
    %5283 = vmatprep.subr.mxu0 0.0
    %5284 = vmatpush1.msra.mxu0 0.0
    %5285 = vmatprep.subr.mxu0 0.0
    %5286 = vmatpush1.msra.mxu0 0.0
    %5287 = vmatprep.subr.mxu0 0.0
    %5288 = vmatpush1.msra.mxu0 0.0
    %5289 = vmatprep.subr.mxu0 0.0
    %5290 = vmatpush1.msra.mxu0 0.0
    %5291 = vmatprep.subr.mxu0 0.0
    %5292 = vmatpush1.msra.mxu0 0.0
    %5293 = vmatprep.subr.mxu0 0.0
    %5294 = vmatpush1.msra.mxu0 0.0
    %5295 = vmatprep.subr.mxu0 0.0
    %5296 = vmatpush1.msra.mxu0 0.0
    %5297 = vmatprep.subr.mxu0 0.0
    %5298 = vmatpush1.msra.mxu0 0.0
    %5299 = vmatprep.subr.mxu0 0.0
    %5300 = vmatpush1.msra.mxu0 0.0
    %5301 = vmatprep.mubr.f32.mxu0 0.0
    %5302 = vmatmul.mubr.f32.gmra.mrb[0].mxu0 %v5093
    %v5303 = vpop.f32.mrb[0].mxu0
    %v5304 = vadd.f32 0.0, %v5303
    %v5305 = vpop.f32.mrb[0].mxu0
    %5306 = vdwg.mxu0
    %5307 = vmatprep.subr.mxu0 0.0
    %5308 = vmatpush1.msra.mxu0 %v81
    %5309 = vmatprep.subr.mxu0 0.0
    %5310 = vmatpush1.msra.mxu0 %v82
    %5311 = vmatprep.subr.mxu0 0.0
    %5312 = vmatpush1.msra.mxu0 %v83
    %5313 = vmatprep.subr.mxu0 0.0
    %5314 = vmatpush1.msra.mxu0 %v84
    %5315 = vmatprep.subr.mxu0 0.0
    %5316 = vmatpush1.msra.mxu0 %v85
    %5317 = vmatprep.subr.mxu0 0.0
    %5318 = vmatpush1.msra.mxu0 %v86
    %5319 = vmatprep.subr.mxu0 0.0
    %5320 = vmatpush1.msra.mxu0 %v87
    %5321 = vmatprep.subr.mxu0 0.0
    %5322 = vmatpush1.msra.mxu0 %v88
    %5323 = vmatprep.subr.mxu0 0.0
    %5324 = vmatpush1.msra.mxu0 %v89
    %5325 = vmatprep.subr.mxu0 0.0
    %5326 = vmatpush1.msra.mxu0 %v90
    %5327 = vmatprep.subr.mxu0 0.0
    %5328 = vmatpush1.msra.mxu0 %v91
    %5329 = vmatprep.subr.mxu0 0.0
    %5330 = vmatpush1.msra.mxu0 %v92
    %5331 = vmatprep.subr.mxu0 0.0
    %5332 = vmatpush1.msra.mxu0 %v93
    %5333 = vmatprep.subr.mxu0 0.0
    %5334 = vmatpush1.msra.mxu0 %v94
    %5335 = vmatprep.subr.mxu0 0.0
    %5336 = vmatpush1.msra.mxu0 %v95
    %5337 = vmatprep.subr.mxu0 0.0
    %5338 = vmatpush1.msra.mxu0 %v96
    %5339 = vmatprep.subr.mxu0 0.0
    %5340 = vmatpush1.msra.mxu0 0.0
    %5341 = vmatprep.subr.mxu0 0.0
    %5342 = vmatpush1.msra.mxu0 0.0
    %5343 = vmatprep.subr.mxu0 0.0
    %5344 = vmatpush1.msra.mxu0 0.0
    %5345 = vmatprep.subr.mxu0 0.0
    %5346 = vmatpush1.msra.mxu0 0.0
    %5347 = vmatprep.subr.mxu0 0.0
    %5348 = vmatpush1.msra.mxu0 0.0
    %5349 = vmatprep.subr.mxu0 0.0
    %5350 = vmatpush1.msra.mxu0 0.0
    %5351 = vmatprep.subr.mxu0 0.0
    %5352 = vmatpush1.msra.mxu0 0.0
    %5353 = vmatprep.subr.mxu0 0.0
    %5354 = vmatpush1.msra.mxu0 0.0
    %5355 = vmatprep.subr.mxu0 0.0
    %5356 = vmatpush1.msra.mxu0 0.0
    %5357 = vmatprep.subr.mxu0 0.0
    %5358 = vmatpush1.msra.mxu0 0.0
    %5359 = vmatprep.subr.mxu0 0.0
    %5360 = vmatpush1.msra.mxu0 0.0
    %5361 = vmatprep.subr.mxu0 0.0
    %5362 = vmatpush1.msra.mxu0 0.0
    %5363 = vmatprep.subr.mxu0 0.0
    %5364 = vmatpush1.msra.mxu0 0.0
    %5365 = vmatprep.subr.mxu0 0.0
    %5366 = vmatpush1.msra.mxu0 0.0
    %5367 = vmatprep.subr.mxu0 0.0
    %5368 = vmatpush1.msra.mxu0 0.0
    %5369 = vmatprep.subr.mxu0 0.0
    %5370 = vmatpush1.msra.mxu0 0.0
    %5371 = vmatprep.mubr.f32.mxu0 0.0
    %5372 = vmatmul.mubr.f32.gmra.mrb[0].mxu0 %v4947
    %v5373 = vpop.f32.mrb[0].mxu0
    %v5374 = vadd.f32 0.0, %v5373
    %v5375 = vpop.f32.mrb[0].mxu0
    %5376 = vdwg.mxu0
    %v5377 = vmul.f32 %v5162, %v5374
    %5378 = vmatprep.subr.mxu0 %v98
    %5379 = vmatpush1.msra.mxu0 %v97
    %5380 = vmatprep.subr.mxu0 %v102
    %5381 = vmatpush1.msra.mxu0 %v101
    %5382 = vmatprep.subr.mxu0 %v106
    %5383 = vmatpush1.msra.mxu0 %v105
    %5384 = vmatprep.subr.mxu0 %v110
    %5385 = vmatpush1.msra.mxu0 %v109
    %5386 = vmatprep.subr.mxu0 %v114
    %5387 = vmatpush1.msra.mxu0 %v113
    %5388 = vmatprep.subr.mxu0 %v118
    %5389 = vmatpush1.msra.mxu0 %v117
    %5390 = vmatprep.subr.mxu0 %v122
    %5391 = vmatpush1.msra.mxu0 %v121
    %5392 = vmatprep.subr.mxu0 %v126
    %5393 = vmatpush1.msra.mxu0 %v125
    %5394 = vmatprep.subr.mxu0 %v130
    %5395 = vmatpush1.msra.mxu0 %v129
    %5396 = vmatprep.subr.mxu0 %v134
    %5397 = vmatpush1.msra.mxu0 %v133
    %5398 = vmatprep.subr.mxu0 %v138
    %5399 = vmatpush1.msra.mxu0 %v137
    %5400 = vmatprep.subr.mxu0 %v142
    %5401 = vmatpush1.msra.mxu0 %v141
    %5402 = vmatprep.subr.mxu0 %v146
    %5403 = vmatpush1.msra.mxu0 %v145
    %5404 = vmatprep.subr.mxu0 %v150
    %5405 = vmatpush1.msra.mxu0 %v149
    %5406 = vmatprep.subr.mxu0 %v154
    %5407 = vmatpush1.msra.mxu0 %v153
    %5408 = vmatprep.subr.mxu0 %v158
    %5409 = vmatpush1.msra.mxu0 %v157
    %5410 = vmatprep.subr.mxu0 0.0
    %5411 = vmatpush1.msra.mxu0 0.0
    %5412 = vmatprep.subr.mxu0 0.0
    %5413 = vmatpush1.msra.mxu0 0.0
    %5414 = vmatprep.subr.mxu0 0.0
    %5415 = vmatpush1.msra.mxu0 0.0
    %5416 = vmatprep.subr.mxu0 0.0
    %5417 = vmatpush1.msra.mxu0 0.0
    %5418 = vmatprep.subr.mxu0 0.0
    %5419 = vmatpush1.msra.mxu0 0.0
    %5420 = vmatprep.subr.mxu0 0.0
    %5421 = vmatpush1.msra.mxu0 0.0
    %5422 = vmatprep.subr.mxu0 0.0
    %5423 = vmatpush1.msra.mxu0 0.0
    %5424 = vmatprep.subr.mxu0 0.0
    %5425 = vmatpush1.msra.mxu0 0.0
    %5426 = vmatprep.subr.mxu0 0.0
    %5427 = vmatpush1.msra.mxu0 0.0
    %5428 = vmatprep.subr.mxu0 0.0
    %5429 = vmatpush1.msra.mxu0 0.0
    %5430 = vmatprep.subr.mxu0 0.0
    %5431 = vmatpush1.msra.mxu0 0.0
    %5432 = vmatprep.subr.mxu0 0.0
    %5433 = vmatpush1.msra.mxu0 0.0
    %5434 = vmatprep.subr.mxu0 0.0
    %5435 = vmatpush1.msra.mxu0 0.0
    %5436 = vmatprep.subr.mxu0 0.0
    %5437 = vmatpush1.msra.mxu0 0.0
    %5438 = vmatprep.subr.mxu0 0.0
    %5439 = vmatpush1.msra.mxu0 0.0
    %5440 = vmatprep.subr.mxu0 0.0
    %5441 = vmatpush1.msra.mxu0 0.0
    %5442 = vmatprep.mubr.f32.mxu0 0.0
    %5443 = vmatmul.mubr.f32.gmra.mrb[0].mxu0 %v5377
    %v5444 = vpop.f32.mrb[0].mxu0
    %v5445 = vadd.f32 0.0, %v5444
    %v5446 = vpop.f32.mrb[0].mxu0
    %v5447 = vadd.f32 0.0, %v5446
    %5448 = vdwg.mxu0
    %5449 = vmatprep.subr.mxu0 %v100
    %5450 = vmatpush1.msra.mxu0 %v99
    %5451 = vmatprep.subr.mxu0 %v104
    %5452 = vmatpush1.msra.mxu0 %v103
    %5453 = vmatprep.subr.mxu0 %v108
    %5454 = vmatpush1.msra.mxu0 %v107
    %5455 = vmatprep.subr.mxu0 %v112
    %5456 = vmatpush1.msra.mxu0 %v111
    %5457 = vmatprep.subr.mxu0 %v116
    %5458 = vmatpush1.msra.mxu0 %v115
    %5459 = vmatprep.subr.mxu0 %v120
    %5460 = vmatpush1.msra.mxu0 %v119
    %5461 = vmatprep.subr.mxu0 %v124
    %5462 = vmatpush1.msra.mxu0 %v123
    %5463 = vmatprep.subr.mxu0 %v128
    %5464 = vmatpush1.msra.mxu0 %v127
    %5465 = vmatprep.subr.mxu0 %v132
    %5466 = vmatpush1.msra.mxu0 %v131
    %5467 = vmatprep.subr.mxu0 %v136
    %5468 = vmatpush1.msra.mxu0 %v135
    %5469 = vmatprep.subr.mxu0 %v140
    %5470 = vmatpush1.msra.mxu0 %v139
    %5471 = vmatprep.subr.mxu0 %v144
    %5472 = vmatpush1.msra.mxu0 %v143
    %5473 = vmatprep.subr.mxu0 %v148
    %5474 = vmatpush1.msra.mxu0 %v147
    %5475 = vmatprep.subr.mxu0 %v152
    %5476 = vmatpush1.msra.mxu0 %v151
    %5477 = vmatprep.subr.mxu0 %v156
    %5478 = vmatpush1.msra.mxu0 %v155
    %5479 = vmatprep.subr.mxu0 %v160
    %5480 = vmatpush1.msra.mxu0 %v159
    %5481 = vmatprep.subr.mxu0 0.0
    %5482 = vmatpush1.msra.mxu0 0.0
    %5483 = vmatprep.subr.mxu0 0.0
    %5484 = vmatpush1.msra.mxu0 0.0
    %5485 = vmatprep.subr.mxu0 0.0
    %5486 = vmatpush1.msra.mxu0 0.0
    %5487 = vmatprep.subr.mxu0 0.0
    %5488 = vmatpush1.msra.mxu0 0.0
    %5489 = vmatprep.subr.mxu0 0.0
    %5490 = vmatpush1.msra.mxu0 0.0
    %5491 = vmatprep.subr.mxu0 0.0
    %5492 = vmatpush1.msra.mxu0 0.0
    %5493 = vmatprep.subr.mxu0 0.0
    %5494 = vmatpush1.msra.mxu0 0.0
    %5495 = vmatprep.subr.mxu0 0.0
    %5496 = vmatpush1.msra.mxu0 0.0
    %5497 = vmatprep.subr.mxu0 0.0
    %5498 = vmatpush1.msra.mxu0 0.0
    %5499 = vmatprep.subr.mxu0 0.0
    %5500 = vmatpush1.msra.mxu0 0.0
    %5501 = vmatprep.subr.mxu0 0.0
    %5502 = vmatpush1.msra.mxu0 0.0
    %5503 = vmatprep.subr.mxu0 0.0
    %5504 = vmatpush1.msra.mxu0 0.0
    %5505 = vmatprep.subr.mxu0 0.0
    %5506 = vmatpush1.msra.mxu0 0.0
    %5507 = vmatprep.subr.mxu0 0.0
    %5508 = vmatpush1.msra.mxu0 0.0
    %5509 = vmatprep.subr.mxu0 0.0
    %5510 = vmatpush1.msra.mxu0 0.0
    %5511 = vmatprep.subr.mxu0 0.0
    %5512 = vmatpush1.msra.mxu0 0.0
    %5513 = vmatprep.mubr.f32.mxu0 0.0
    %5514 = vmatmul.mubr.f32.gmra.mrb[0].mxu0 %v5377
    %v5515 = vpop.f32.mrb[0].mxu0
    %v5516 = vadd.f32 0.0, %v5515
    %v5517 = vpop.f32.mrb[0].mxu0
    %v5518 = vadd.f32 0.0, %v5517
    %5519 = vdwg.mxu0
    %v5520 = vadd.f32 %v5164, %v5445
    %v5521 = vadd.f32 %v5233, %v5447
    %v5522 = vadd.f32 %v5235, %v5516
    %v5523 = vadd.f32 %v5304, %v5518
    %v5524 = vxor.u32 %v5520, 2147483648
    %v5525 = vmul.f32 %v5524, 1.442695
    %v5526 = vpow.pop %v5525
    %v5527 = vadd.f32 %v5526, 1.0
    %v5528 = vrcp.pop %v5527
    %v5529 = vmul.f32 1.0, %v5528
    %v5530 = vxor.u32 %v5521, 2147483648
    %v5531 = vmul.f32 %v5530, 1.442695
    %v5532 = vpow.pop %v5531
    %v5533 = vadd.f32 %v5532, 1.0
    %v5534 = vrcp.pop %v5533
    %v5535 = vmul.f32 1.0, %v5534
    %v5536 = vxor.u32 %v5522, 2147483648
    %v5537 = vmul.f32 %v5536, 1.442695
    %v5538 = vpow.pop %v5537
    %v5539 = vadd.f32 %v5538, 1.0
    %v5540 = vrcp.pop %v5539
    %v5541 = vmul.f32 1.0, %v5540
    %v5542 = vtanh.pop %v5523
    %v5543 = vmul.f32 %v5535, %v4996
    %v5544 = vmul.f32 %v5529, %v5542
    %v5545 = vadd.f32 %v5543, %v5544
    %v5546 = vtanh.pop %v5545
    %v5547 = vmul.f32 %v5541, %v5546
    %v5548 = vld [vmem:[%s1 + $0x7] sm:$0x1]
    %v5549 = vld [vmem:[%s1 + $0xf] sm:$0x1]
    %v5550 = vld [vmem:[%s1 + $0x17] sm:$0x1]
    %v5551 = vld [vmem:[%s1 + $0x1f] sm:$0x1]
    %v5552 = vld [vmem:[%s1 + $0x27] sm:$0x1]
    %v5553 = vld [vmem:[%s1 + $0x2f] sm:$0x1]
    %v5554 = vld [vmem:[%s1 + $0x37] sm:$0x1]
    %v5555 = vld [vmem:[%s1 + $0x3f] sm:$0x1]
    %v5556 = vsub.f32 %v5547, %v4947
    %5558 = vset.pattern.permute.xlu0 0
    %5559 = vperm.xlu0 %5558, %v5548
    %v5560 = vpop.permute.xlu0 %5559
    %5563 = vset.pattern.permute.xlu0 0
    %5564 = vperm.xlu0 %5563, %v5549
    %v5565 = vpop.permute.xlu0 %5564
    %5568 = vset.pattern.permute.xlu0 0
    %5569 = vperm.xlu0 %5568, %v5550
    %v5570 = vpop.permute.xlu0 %5569
    %5573 = vset.pattern.permute.xlu0 0
    %5574 = vperm.xlu0 %5573, %v5551
    %v5575 = vpop.permute.xlu0 %5574
    %5578 = vset.pattern.permute.xlu0 0
    %5579 = vperm.xlu0 %5578, %v5552
    %v5580 = vpop.permute.xlu0 %5579
    %5583 = vset.pattern.permute.xlu0 0
    %5584 = vperm.xlu0 %5583, %v5553
    %v5585 = vpop.permute.xlu0 %5584
    %5588 = vset.pattern.permute.xlu0 0
    %5589 = vperm.xlu0 %5588, %v5554
    %v5590 = vpop.permute.xlu0 %5589
    %5593 = vset.pattern.permute.xlu0 0
    %5594 = vperm.xlu0 %5593, %v5555
    %v5595 = vpop.permute.xlu0 %5594
    %v5598 = vrot.slane %v5556, 1
    %v5599 = vrot.slane %v5556, 2
    %v5600 = vrot.slane %v5556, 3
    %v5601 = vrot.slane %v5556, 4
    %v5602 = vrot.slane %v5556, 5
    %v5603 = vrot.slane %v5556, 6
    %v5604 = vrot.slane %v5556, 7
    %v5613 = vmul.f32 %v5560, %v5556
    %v5614 = vmul.f32 %v5565, %v5598
    %v5615 = vmul.f32 %v5570, %v5599
    %v5616 = vmul.f32 %v5575, %v5600
    %v5617 = vmul.f32 %v5580, %v5601
    %v5618 = vmul.f32 %v5585, %v5602
    %v5619 = vmul.f32 %v5590, %v5603
    %v5620 = vmul.f32 %v5595, %v5604
    %v5629 = vrot.slane %v5614, 7
    %v5630 = vsel %vm193, %v5629, %v5613
    %v5631 = vrot.slane %v5615, 6
    %v5632 = vsel %vm196, %v5631, %v5630
    %v5633 = vrot.slane %v5616, 5
    %v5634 = vsel %vm199, %v5633, %v5632
    %v5635 = vrot.slane %v5617, 4
    %v5636 = vsel %vm202, %v5635, %v5634
    %v5637 = vrot.slane %v5618, 3
    %v5638 = vsel %vm205, %v5637, %v5636
    %v5639 = vrot.slane %v5619, 2
    %v5640 = vsel %vm208, %v5639, %v5638
    %v5641 = vrot.slane %v5620, 1
    %v5642 = vsel %vm211, %v5641, %v5640
    %v5644 = vadd.f32 %v4947, %v5642
    %v5645 = vsub.f32 %v5545, %v4996
    %v5647 = vrot.slane %v5645, 1
    %v5648 = vrot.slane %v5645, 2
    %v5649 = vrot.slane %v5645, 3
    %v5650 = vrot.slane %v5645, 4
    %v5651 = vrot.slane %v5645, 5
    %v5652 = vrot.slane %v5645, 6
    %v5653 = vrot.slane %v5645, 7
    %v5662 = vmul.f32 %v5560, %v5645
    %v5663 = vmul.f32 %v5565, %v5647
    %v5664 = vmul.f32 %v5570, %v5648
    %v5665 = vmul.f32 %v5575, %v5649
    %v5666 = vmul.f32 %v5580, %v5650
    %v5667 = vmul.f32 %v5585, %v5651
    %v5668 = vmul.f32 %v5590, %v5652
    %v5669 = vmul.f32 %v5595, %v5653
    %v5678 = vrot.slane %v5663, 7
    %v5679 = vsel %vm193, %v5678, %v5662
    %v5680 = vrot.slane %v5664, 6
    %v5681 = vsel %vm196, %v5680, %v5679
    %v5682 = vrot.slane %v5665, 5
    %v5683 = vsel %vm199, %v5682, %v5681
    %v5684 = vrot.slane %v5666, 4
    %v5685 = vsel %vm202, %v5684, %v5683
    %v5686 = vrot.slane %v5667, 3
    %v5687 = vsel %vm205, %v5686, %v5685
    %v5688 = vrot.slane %v5668, 2
    %v5689 = vsel %vm208, %v5688, %v5687
    %v5690 = vrot.slane %v5669, 1
    %v5691 = vsel %vm211, %v5690, %v5689
    %v5693 = vadd.f32 %v4996, %v5691
    %v5695 = vcombine.high %v5644, %v5644
    %v5697 = vunpack.c.l.s4 1966171168
    %v5698 = vunpack.c.0.s8 %v5697
    %v5699 = vlaneseq
    %v5700 = vshrl.u32 %v5699, 7
    %v5701 = vsub.s32 %v5698, %v5700
    %v5702 = vrot.slane %v5644, %v5701
    %v5704 = vunpack.c.l.s4 1966171168
    %v5705 = vunpack.c.0.s8 %v5704
    %v5706 = vlaneseq
    %v5707 = vshrl.u32 %v5706, 7
    %v5708 = vsub.s32 %v5705, %v5707
    %v5709 = vrot.slane %v5695, %v5708
    %v5710 = vcombine.high %v5702, %v5702
    %v5711 = vcombine.high %v5709, %v5709
    %v5713 = vunpack.c.l.s4 1966171168
    %v5714 = vunpack.c.0.s8 %v5713
    %v5715 = vlaneseq
    %v5716 = vshrl.u32 %v5715, 7
    %v5717 = vsub.s32 %v5714, %v5716
    %v5718 = vrot.slane %v5702, %v5717
    %v5720 = vunpack.c.l.s4 1966171168
    %v5721 = vunpack.c.0.s8 %v5720
    %v5722 = vlaneseq
    %v5723 = vshrl.u32 %v5722, 7
    %v5724 = vsub.s32 %v5721, %v5723
    %v5725 = vrot.slane %v5709, %v5724
    %v5727 = vunpack.c.l.s4 1966171168
    %v5728 = vunpack.c.0.s8 %v5727
    %v5729 = vlaneseq
    %v5730 = vshrl.u32 %v5729, 7
    %v5731 = vsub.s32 %v5728, %v5730
    %v5732 = vrot.slane %v5710, %v5731
    %v5734 = vunpack.c.l.s4 1966171168
    %v5735 = vunpack.c.0.s8 %v5734
    %v5736 = vlaneseq
    %v5737 = vshrl.u32 %v5736, 7
    %v5738 = vsub.s32 %v5735, %v5737
    %v5739 = vrot.slane %v5711, %v5738
    %v5740 = vcombine.high %v5718, %v5718
    %v5741 = vcombine.high %v5725, %v5725
    %v5742 = vcombine.high %v5732, %v5732
    %v5743 = vcombine.high %v5739, %v5739
    %5752 = vst [vmem:[#allocation10 + $0x7] sm:$0x1] %v5718
    %5753 = vst [vmem:[#allocation10 + $0xf] sm:$0x1] %v5732
    %5754 = vst [vmem:[#allocation10 + $0x17] sm:$0x1] %v5740
    %5755 = vst [vmem:[#allocation10 + $0x1f] sm:$0x1] %v5742
    %5756 = vst [vmem:[#allocation10 + $0x27] sm:$0x1] %v5725
    %5757 = vst [vmem:[#allocation10 + $0x2f] sm:$0x1] %v5739
    %5758 = vst [vmem:[#allocation10 + $0x37] sm:$0x1] %v5741
    %5759 = vst [vmem:[#allocation10 + $0x3f] sm:$0x1] %v5743
    %5760 = vst [vmem:[#allocation5] sm:$0xff] %v5644
    %5761 = vst [vmem:[#allocation6] sm:$0xff] %v5693
    // Predicated region
    $region38: #{tpu_custom_call.1} parent=1 // pred_check
      %p5762 = pneg %p41
    $region39: #{tpu_custom_call.1} parent=1 // pred_check_branch
      %5764 = sbr.rel (%p5762) target = $region41
    $region40: #{tpu_custom_call.1} parent=1 // pred_region
      %5765 = vst [vmem:[#allocation11] sm:$0xff] %v5644
      %5766 = vst [vmem:[#allocation13] sm:$0xff] %v5693
    $region41: #{tpu_custom_call.1} parent=1 // pred_fallthru
      _
    // Predicated region
    $region42: #{tpu_custom_call.1} parent=1 // pred_check
      _
    $region43: #{tpu_custom_call.1} parent=1 // pred_check_branch
      %5768 = sbr.rel (0) target = $region45
    $region44: #{tpu_custom_call.1} parent=1 // pred_region
      %s5770 = ssub.s32 1024, 1024
      %5771 = vsyncadd [#allocation9], %s5770
      %s5772 = sshll.u32 [#allocation10], 4
      %s5773 = int_to_ptr.vmem [resolvable:$true] %s5772
      %5778 = dma.vmem_to_hbm [thread:$0]  %s5773, 1024, %s7, [#allocation9], 128, 128, 8
    $region45: #{tpu_custom_call.1} parent=1 // pred_fallthru
      _
    // Predicated region
    $region46: #{tpu_custom_call.1} parent=1 // pred_check
      _
    $region47: #{tpu_custom_call.1} parent=1 // pred_check_branch
      %5780 = sbr.rel (0) target = $region49
    $region48: #{tpu_custom_call.1} parent=1 // pred_region
      %s5782 = ssub.s32 128, 128
      %5783 = vsyncadd [#allocation12], %s5782
      %s5785 = sshll.u32 [#allocation11], 4
      %s5786 = int_to_ptr.vmem [resolvable:$true] %s5785
      %5788 = dma.vmem_to_hbm [thread:$0]  %s5786, 128, %s8, [#allocation12]
    $region49: #{tpu_custom_call.1} parent=1 // pred_fallthru
      _
    // Predicated region
    $region50: #{tpu_custom_call.1} parent=1 // pred_check
      _
    $region51: #{tpu_custom_call.1} parent=1 // pred_check_branch
      %5790 = sbr.rel (0) target = $region53
    $region52: #{tpu_custom_call.1} parent=1 // pred_region
      %s5792 = ssub.s32 128, 128
      %5793 = vsyncadd [#allocation12], %s5792
      %s5795 = sshll.u32 [#allocation13], 4
      %s5796 = int_to_ptr.vmem [resolvable:$true] %s5795
      %5798 = dma.vmem_to_hbm [thread:$0]  %s5796, 128, %s9, [#allocation12]
    $region53: #{tpu_custom_call.1} parent=1 // pred_fallthru
      _
    // Predicated region
    $region54: #{tpu_custom_call.1} parent=1 // pred_check
      _
    $region55: #{tpu_custom_call.1} parent=1 // pred_check_branch
      %5800 = sbr.rel (0) target = $region57
    $region56: #{tpu_custom_call.1} parent=1 // pred_region
      %5801 = dma.done [#allocation9], 1024
    $region57: #{tpu_custom_call.1} parent=1 // pred_fallthru
      _
    // Predicated region
    $region58: #{tpu_custom_call.1} parent=1 // pred_check
      _
    $region59: #{tpu_custom_call.1} parent=1 // pred_check_branch
      %5803 = sbr.rel (0) target = $region61
    $region60: #{tpu_custom_call.1} parent=1 // pred_region
      %5804 = dma.done [#allocation12], 128
    $region61: #{tpu_custom_call.1} parent=1 // pred_fallthru
      _
    // Predicated region
    $region62: #{tpu_custom_call.1} parent=1 // pred_check
      _
    $region63: #{tpu_custom_call.1} parent=1 // pred_check_branch
      %5806 = sbr.rel (0) target = $region65
    $region64: #{tpu_custom_call.1} parent=1 // pred_region
      %5807 = dma.done [#allocation12], 128
    $region65: #{tpu_custom_call.1} parent=1 // pred_fallthru
      _
    %5808 = vsyncpa [#allocation8], 1
    %5809 = vsyncpa [#allocation9], 1
    %5810 = vsyncpa [#allocation12], 1
  %5811 = vsyncmov [#allocation4]
  %s5812 = vpop.sfrf %5811
  %p5813 = scmp.eq.s32.totalorder %s5812, 0
  %p5814 = pneg %p5813
  %5816 = shalt.err (%p5814)
  %s5817 = scalar_lea.sflag [#allocation4], 1
  %5818 = vsyncmov %s5817
  %s5819 = vpop.sfrf %5818
  %p5820 = scmp.eq.s32.totalorder %s5819, 0
  %p5821 = pneg %p5820
  %5823 = shalt.err (%p5821)

</llo_original>
